<compile_context>
chip_gen: v6e
topology: v6e:2x2x1
jax: 0.10.0
libtpu: 0.0.40
codegen_flags: <defaults>
</compile_context>

<pallas_src>
import jax
import jax.numpy as jnp
from jax.experimental import pallas as pl
from jax.experimental.pallas import tpu as pltpu

# Logical sizes of the PyTorch module.
F_IN = 22          # 3*(8-1)-1 + jet_pt + jet_mass
H1 = 200
H2 = 50
N_OUT = 2

# Lane-dense padded hidden sizes.
H1_PAD = 256       # 200 -> 256
H2_PAD = 128       # 50  -> 128


def _round_up(x, m):
    return ((x + m - 1) // m) * m


def _mlp_kernel(x_ref,
                w1_ref, b1_ref,
                w2_ref, b2_ref,
                w3_ref, b3_ref,
                w4_ref, b4_ref,
                w5d_ref, b5d_ref,
                o_ref):
    bf16 = jnp.bfloat16
    # (tb, 22) fp32 -> bf16 for the MXU. K=22 contraction: Mosaic zero-pads.
    x = x_ref[...].astype(bf16)

    # dense1 + ReLU   (dropout p=0.2 -> identity at inference)
    h = jnp.dot(x, w1_ref[...], preferred_element_type=jnp.float32) + b1_ref[...]
    h = jnp.maximum(h, 0.0)

    # dense2 + ReLU   (dropout p=0.2 -> identity)
    h = jnp.dot(h.astype(bf16), w2_ref[...],
                preferred_element_type=jnp.float32) + b2_ref[...]
    h = jnp.maximum(h, 0.0)

    # dense3 + ReLU   (dropout p=0.1 -> identity)
    h = jnp.dot(h.astype(bf16), w3_ref[...],
                preferred_element_type=jnp.float32) + b3_ref[...]
    h = jnp.maximum(h, 0.0)

    # dense4 + ReLU   (dropout p=0.1 -> identity)
    h = jnp.dot(h.astype(bf16), w4_ref[...],
                preferred_element_type=jnp.float32) + b4_ref[...]
    h = jnp.maximum(h, 0.0)

    # Folded 2-class head:  d = logit0 - logit1  (single-column matmul).
    d = jnp.dot(h.astype(bf16), w5d_ref[...],
                preferred_element_type=jnp.float32) + b5d_ref[...]

    # softmax([l0, l1]) == [1 - p1, p1] with p1 = 1 / (1 + exp(l0 - l1)).
    # One EUP exp + one EUP reciprocal, no cross-lane reductions.
    p1 = pl.reciprocal(1.0 + jnp.exp(d), approx=True)
    o_ref[:, 0:1] = 1.0 - p1
    o_ref[:, 1:2] = p1


def _pad2(a, rows, cols):
    return jnp.pad(a, ((0, rows - a.shape[0]), (0, cols - a.shape[1])))


def prepare_params(params):
    """One-time prep (call OUTSIDE the per-step path): lane-dense zero-padding,
    bf16 weights, fp32 biases, and the folded 2-class head column."""
    bf16 = jnp.bfloat16
    w5 = params["w5"]
    b5 = params["b5"]
    w5d = (w5[:, 0:1] - w5[:, 1:2])          # (H2, 1): logit0 - logit1 weights
    b5d = (b5[:, 0:1] - b5[:, 1:2])          # (1, 1)
    return (
        _pad2(params["w1"], F_IN, H1_PAD).astype(bf16),    # (22, 256)
        _pad2(params["b1"], 1, H1_PAD),                    # (1, 256) fp32
        _pad2(params["w2"], H1_PAD, H1_PAD).astype(bf16),  # (256, 256)
        _pad2(params["b2"], 1, H1_PAD),
        _pad2(params["w3"], H1_PAD, H2_PAD).astype(bf16),  # (256, 128)
        _pad2(params["b3"], 1, H2_PAD),
        _pad2(params["w4"], H2_PAD, H2_PAD).astype(bf16),  # (128, 128)
        _pad2(params["b4"], 1, H2_PAD),
        _pad2(w5d, H2_PAD, 1).astype(bf16),                # (128, 1)
        b5d,                                               # (1, 1) fp32
    )


def net_forward(x, prepped, tile_b=512):
    """x: (B, F_IN) float32; prepped: output of prepare_params (padded/bf16)."""
    B, f_in = x.shape
    assert f_in == F_IN

    # 16-row batch tiles (bf16 sublane packing); keep >= 2 grid steps when
    # possible so the x-tile pipeline overlaps and v7x's 2 TCs both get work.
    tb = min(_round_up(tile_b, 16), _round_up(B, 16))
    Bp = _round_up(B, tb)
    n_steps = Bp // tb
    if Bp != B:
        x = jnp.pad(x, ((0, Bp - B), (0, 0)))

    # Weight/bias blocks are full-array with constant index maps -> fetched
    # once and VMEM-resident across grid steps; only x/out tiles stream.
    in_specs = [
        pl.BlockSpec((tb, F_IN), lambda i: (i, 0)),         # x: marches over batch
        pl.BlockSpec((F_IN, H1_PAD), lambda i: (0, 0)),     # w1
        pl.BlockSpec((1, H1_PAD), lambda i: (0, 0)),        # b1
        pl.BlockSpec((H1_PAD, H1_PAD), lambda i: (0, 0)),   # w2
        pl.BlockSpec((1, H1_PAD), lambda i: (0, 0)),        # b2
        pl.BlockSpec((H1_PAD, H2_PAD), lambda i: (0, 0)),   # w3
        pl.BlockSpec((1, H2_PAD), lambda i: (0, 0)),        # b3
        pl.BlockSpec((H2_PAD, H2_PAD), lambda i: (0, 0)),   # w4
        pl.BlockSpec((1, H2_PAD), lambda i: (0, 0)),        # b4
        pl.BlockSpec((H2_PAD, 1), lambda i: (0, 0)),        # w5d (folded head)
        pl.BlockSpec((1, 1), lambda i: (0, 0)),             # b5d
    ]
    # Output is only Bp x 2 fp32: not worth lane-padding.
    out_spec = pl.BlockSpec((tb, N_OUT), lambda i: (i, 0))

    mac = (F_IN * H1_PAD + H1_PAD * H1_PAD + H1_PAD * H2_PAD
           + H2_PAD * H2_PAD + H2_PAD)
    w_bytes = 2 * mac + 4 * (2 * H1_PAD + 2 * H2_PAD + 1)
    cost = pl.CostEstimate(
        flops=2 * Bp * mac,
        transcendentals=Bp,
        bytes_accessed=Bp * F_IN * 4 + w_bytes + Bp * N_OUT * 4,
    )

    out = pl.pallas_call(
        _mlp_kernel,
        out_shape=jax.ShapeDtypeStruct((Bp, N_OUT), jnp.float32),
        grid=(n_steps,),
        in_specs=in_specs,
        out_specs=out_spec,
        compiler_params=pltpu.CompilerParams(
            dimension_semantics=("parallel",),     # shard batch across v7x TCs
            # ~240 KB weights + double-buffered (tb,22) x tiles + fp32
            # activation scratch; 8 MiB is ample up to tb of a few thousand
            # and stays well inside v7x's 64 MiB VMEM.
            vmem_limit_bytes=8 * 1024 * 1024,
        ),
        cost_estimate=cost,
    )(x, *prepped)

    return out[:B]


def init_params(key, features):
    """Deterministic init mimicking nn.Linear default (uniform +/- 1/sqrt(fan_in))."""
    sizes = [(features, H1), (H1, H1), (H1, H2), (H2, H2), (H2, N_OUT)]
    params = {}
    for i, (fan_in, fan_out) in enumerate(sizes, start=1):
        key, kw, kb = jax.random.split(key, 3)
        bound = 1.0 / jnp.sqrt(float(fan_in))
        # stored as (in, out) so the kernel computes x @ W + b
        params[f"w{i}"] = jax.random.uniform(
            kw, (fan_in, fan_out), jnp.float32, minval=-bound, maxval=bound)
        params[f"b{i}"] = jax.random.uniform(
            kb, (1, fan_out), jnp.float32, minval=-bound, maxval=bound)
    return params


if __name__ == "__main__":
    # Module feature count: 3*(N-1)-1 (+1 jet_pt, +1 jet_mass) with N=8 -> 22.
    features = F_IN
    batch = 1024           # 2 grid steps at tile_b=512; exercises the pipeline

    key = jax.random.PRNGKey(0)
    key, kx = jax.random.split(key)
    x = jax.random.normal(kx, (batch, features), dtype=jnp.float32)
    params = init_params(key, features)

    # One-time prep: pad/cast weights OUTSIDE the per-call path.
    prepped = prepare_params(params)

    forward = jax.jit(net_forward)
    out = jax.block_until_ready(forward(x, prepped))

    # Shape + rows-sum-to-one sanity checks.
    assert out.shape == (batch, N_OUT)
    assert jnp.allclose(jnp.sum(out, axis=-1), 1.0, atol=1e-5)

    # Reference 1: mirrors the kernel's bf16 rounding and folded head exactly
    # (fp32 accumulation), so only accumulation order / approx-reciprocal differ.
    def ref_bf16(x, p):
        bf = lambda a: a.astype(jnp.bfloat16).astype(jnp.float32)
        h = jnp.maximum(bf(x) @ bf(p["w1"]) + p["b1"], 0.0)
        h = jnp.maximum(bf(h) @ bf(p["w2"]) + p["b2"], 0.0)
        h = jnp.maximum(bf(h) @ bf(p["w3"]) + p["b3"], 0.0)
        h = jnp.maximum(bf(h) @ bf(p["w4"]) + p["b4"], 0.0)
        w5d = bf(p["w5"][:, 0:1] - p["w5"][:, 1:2])
        b5d = p["b5"][:, 0:1] - p["b5"][:, 1:2]
        d = bf(h) @ w5d + b5d
        p1 = 1.0 / (1.0 + jnp.exp(d))
        return jnp.concatenate([1.0 - p1, p1], axis=-1)

    expected = ref_bf16(x, params)
    assert jnp.allclose(out, expected, atol=2e-3, rtol=0), float(
        jnp.max(jnp.abs(out - expected)))

    # Reference 2: the original full-fp32 semantics (loose tolerance: bf16 cast).
    def ref_fp32(x, p):
        h = jnp.maximum(x @ p["w1"] + p["b1"], 0.0)
        h = jnp.maximum(h @ p["w2"] + p["b2"], 0.0)
        h = jnp.maximum(h @ p["w3"] + p["b3"], 0.0)
        h = jnp.maximum(h @ p["w4"] + p["b4"], 0.0)
        logits = h @ p["w5"] + p["b5"]
        return jax.nn.softmax(logits, axis=-1)

    expected32 = ref_fp32(x, params)
    assert jnp.allclose(out, expected32, atol=5e-2), float(
        jnp.max(jnp.abs(out - expected32)))

    print("KERNEL_OK")
</pallas_src>

<mosaic_0001>
module attributes {stable_mosaic.version = 11 : i64} {
  func.func @_mlp_kernel(%arg0: i32, %arg1: memref<512x22xf32, #tpu.memory_space<vmem>>, %arg2: memref<22x256xbf16, #tpu.memory_space<vmem>>, %arg3: memref<1x256xf32, #tpu.memory_space<vmem>>, %arg4: memref<256x256xbf16, #tpu.memory_space<vmem>>, %arg5: memref<1x256xf32, #tpu.memory_space<vmem>>, %arg6: memref<256x128xbf16, #tpu.memory_space<vmem>>, %arg7: memref<1x128xf32, #tpu.memory_space<vmem>>, %arg8: memref<128x128xbf16, #tpu.memory_space<vmem>>, %arg9: memref<1x128xf32, #tpu.memory_space<vmem>>, %arg10: memref<128x1xbf16, #tpu.memory_space<vmem>>, %arg11: memref<1x1xf32, #tpu.memory_space<vmem>>, %arg12: memref<512x2xf32, #tpu.memory_space<vmem>>) attributes {dimension_semantics = [#tpu.dimension_semantics<parallel>], iteration_bounds = array<i64: 2>, scalar_prefetch = 0 : i64, scratch_operands = 0 : i64, tpu.core_type = #tpu.core_type<tc>, window_params = [{transform_indices = @transform_0, window_bounds = array<i64: 512, 22>}, {pipeline_mode = #tpu.pipeline_mode<synchronous>, transform_indices = @transform_1, window_bounds = array<i64: 22, 256>}, {pipeline_mode = #tpu.pipeline_mode<synchronous>, transform_indices = @transform_2, window_bounds = array<i64: 1, 256>}, {pipeline_mode = #tpu.pipeline_mode<synchronous>, transform_indices = @transform_3, window_bounds = array<i64: 256, 256>}, {pipeline_mode = #tpu.pipeline_mode<synchronous>, transform_indices = @transform_4, window_bounds = array<i64: 1, 256>}, {pipeline_mode = #tpu.pipeline_mode<synchronous>, transform_indices = @transform_5, window_bounds = array<i64: 256, 128>}, {pipeline_mode = #tpu.pipeline_mode<synchronous>, transform_indices = @transform_6, window_bounds = array<i64: 1, 128>}, {pipeline_mode = #tpu.pipeline_mode<synchronous>, transform_indices = @transform_7, window_bounds = array<i64: 128, 128>}, {pipeline_mode = #tpu.pipeline_mode<synchronous>, transform_indices = @transform_8, window_bounds = array<i64: 1, 128>}, {pipeline_mode = #tpu.pipeline_mode<synchronous>, transform_indices = @transform_9, window_bounds = array<i64: 128, 1>}, {pipeline_mode = #tpu.pipeline_mode<synchronous>, transform_indices = @transform_10, window_bounds = array<i64: 1, 1>}, {transform_indices = @transform_11, window_bounds = array<i64: 512, 2>}]} {
    %c0 = arith.constant 0 : index
    %c0_0 = arith.constant 0 : index
    %0 = vector.load %arg1[%c0, %c0_0] : memref<512x22xf32, #tpu.memory_space<vmem>>, vector<512x22xf32>
    %1 = arith.truncf %0 : vector<512x22xf32> to vector<512x22xbf16>
    %c0_1 = arith.constant 0 : index
    %c0_2 = arith.constant 0 : index
    %2 = vector.load %arg2[%c0_1, %c0_2] : memref<22x256xbf16, #tpu.memory_space<vmem>>, vector<22x256xbf16>
    %cst = arith.constant dense<0.000000e+00> : vector<512x256xf32>
    %3 = tpu.matmul %1, %2, %cst {dimension_numbers = #tpu.dot_dimension_numbers<[1], [0], [0], [1], [0, 0, 1, 1], [], []>} : vector<512x22xbf16>, vector<22x256xbf16>, vector<512x256xf32> -> vector<512x256xf32>
    %c0_3 = arith.constant 0 : index
    %c0_4 = arith.constant 0 : index
    %4 = vector.load %arg3[%c0_3, %c0_4] : memref<1x256xf32, #tpu.memory_space<vmem>>, vector<1x256xf32>
    %5 = vector.broadcast %4 : vector<1x256xf32> to vector<512x256xf32>
    %6 = arith.addf %3, %5 : vector<512x256xf32>
    %cst_5 = arith.constant 0.000000e+00 : f32
    %7 = vector.broadcast %cst_5 : f32 to vector<512x256xf32>
    %8 = arith.maximumf %6, %7 : vector<512x256xf32>
    %9 = arith.truncf %8 : vector<512x256xf32> to vector<512x256xbf16>
    %c0_6 = arith.constant 0 : index
    %c0_7 = arith.constant 0 : index
    %10 = vector.load %arg4[%c0_6, %c0_7] : memref<256x256xbf16, #tpu.memory_space<vmem>>, vector<256x256xbf16>
    %cst_8 = arith.constant dense<0.000000e+00> : vector<512x256xf32>
    %11 = tpu.matmul %9, %10, %cst_8 {dimension_numbers = #tpu.dot_dimension_numbers<[1], [0], [0], [1], [0, 0, 1, 1], [], []>} : vector<512x256xbf16>, vector<256x256xbf16>, vector<512x256xf32> -> vector<512x256xf32>
    %c0_9 = arith.constant 0 : index
    %c0_10 = arith.constant 0 : index
    %12 = vector.load %arg5[%c0_9, %c0_10] : memref<1x256xf32, #tpu.memory_space<vmem>>, vector<1x256xf32>
    %13 = vector.broadcast %12 : vector<1x256xf32> to vector<512x256xf32>
    %14 = arith.addf %11, %13 : vector<512x256xf32>
    %cst_11 = arith.constant 0.000000e+00 : f32
    %15 = vector.broadcast %cst_11 : f32 to vector<512x256xf32>
    %16 = arith.maximumf %14, %15 : vector<512x256xf32>
    %17 = arith.truncf %16 : vector<512x256xf32> to vector<512x256xbf16>
    %c0_12 = arith.constant 0 : index
    %c0_13 = arith.constant 0 : index
    %18 = vector.load %arg6[%c0_12, %c0_13] : memref<256x128xbf16, #tpu.memory_space<vmem>>, vector<256x128xbf16>
    %cst_14 = arith.constant dense<0.000000e+00> : vector<512x128xf32>
    %19 = tpu.matmul %17, %18, %cst_14 {dimension_numbers = #tpu.dot_dimension_numbers<[1], [0], [0], [1], [0, 0, 1, 1], [], []>} : vector<512x256xbf16>, vector<256x128xbf16>, vector<512x128xf32> -> vector<512x128xf32>
    %c0_15 = arith.constant 0 : index
    %c0_16 = arith.constant 0 : index
    %20 = vector.load %arg7[%c0_15, %c0_16] : memref<1x128xf32, #tpu.memory_space<vmem>>, vector<1x128xf32>
    %21 = vector.broadcast %20 : vector<1x128xf32> to vector<512x128xf32>
    %22 = arith.addf %19, %21 : vector<512x128xf32>
    %cst_17 = arith.constant 0.000000e+00 : f32
    %23 = vector.broadcast %cst_17 : f32 to vector<512x128xf32>
    %24 = arith.maximumf %22, %23 : vector<512x128xf32>
    %25 = arith.truncf %24 : vector<512x128xf32> to vector<512x128xbf16>
    %c0_18 = arith.constant 0 : index
    %c0_19 = arith.constant 0 : index
    %26 = vector.load %arg8[%c0_18, %c0_19] : memref<128x128xbf16, #tpu.memory_space<vmem>>, vector<128x128xbf16>
    %cst_20 = arith.constant dense<0.000000e+00> : vector<512x128xf32>
    %27 = tpu.matmul %25, %26, %cst_20 {dimension_numbers = #tpu.dot_dimension_numbers<[1], [0], [0], [1], [0, 0, 1, 1], [], []>} : vector<512x128xbf16>, vector<128x128xbf16>, vector<512x128xf32> -> vector<512x128xf32>
    %c0_21 = arith.constant 0 : index
    %c0_22 = arith.constant 0 : index
    %28 = vector.load %arg9[%c0_21, %c0_22] : memref<1x128xf32, #tpu.memory_space<vmem>>, vector<1x128xf32>
    %29 = vector.broadcast %28 : vector<1x128xf32> to vector<512x128xf32>
    %30 = arith.addf %27, %29 : vector<512x128xf32>
    %cst_23 = arith.constant 0.000000e+00 : f32
    %31 = vector.broadcast %cst_23 : f32 to vector<512x128xf32>
    %32 = arith.maximumf %30, %31 : vector<512x128xf32>
    %33 = arith.truncf %32 : vector<512x128xf32> to vector<512x128xbf16>
    %c0_24 = arith.constant 0 : index
    %c0_25 = arith.constant 0 : index
    %34 = vector.load %arg10[%c0_24, %c0_25] : memref<128x1xbf16, #tpu.memory_space<vmem>>, vector<128x1xbf16>
    %cst_26 = arith.constant dense<0.000000e+00> : vector<512x1xf32>
    %35 = tpu.matmul %33, %34, %cst_26 {dimension_numbers = #tpu.dot_dimension_numbers<[1], [0], [0], [1], [0, 0, 1, 1], [], []>} : vector<512x128xbf16>, vector<128x1xbf16>, vector<512x1xf32> -> vector<512x1xf32>
    %c0_27 = arith.constant 0 : index
    %c0_28 = arith.constant 0 : index
    %36 = vector.load %arg11[%c0_27, %c0_28] : memref<1x1xf32, #tpu.memory_space<vmem>>, vector<1x1xf32>
    %37 = vector.broadcast %36 : vector<1x1xf32> to vector<512x1xf32>
    %38 = arith.addf %35, %37 : vector<512x1xf32>
    %39 = math.exp %38 : vector<512x1xf32>
    %cst_29 = arith.constant 1.000000e+00 : f32
    %40 = vector.broadcast %cst_29 : f32 to vector<512x1xf32>
    %41 = arith.addf %40, %39 : vector<512x1xf32>
    %42 = tpu.reciprocal %41 {approx = true} : vector<512x1xf32> -> vector<512x1xf32>
    %cst_30 = arith.constant 1.000000e+00 : f32
    %43 = vector.broadcast %cst_30 : f32 to vector<512x1xf32>
    %44 = arith.subf %43, %42 : vector<512x1xf32>
    %c0_31 = arith.constant 0 : index
    %c0_32 = arith.constant 0 : index
    %45 = vector.load %arg12[%c0_31, %c0_32] : memref<512x2xf32, #tpu.memory_space<vmem>>, vector<512x1xf32>
    tpu.vector_store %arg12[%c0_31, %c0_32], %44 {strides = array<i32>} : memref<512x2xf32, #tpu.memory_space<vmem>>, vector<512x1xf32>,
    %c0_33 = arith.constant 0 : index
    %c1 = arith.constant 1 : index
    %46 = vector.load %arg12[%c0_33, %c1] : memref<512x2xf32, #tpu.memory_space<vmem>>, vector<512x1xf32>
    tpu.vector_store %arg12[%c0_33, %c1], %42 {strides = array<i32>} : memref<512x2xf32, #tpu.memory_space<vmem>>, vector<512x1xf32>,
    return
  }
  func.func @transform_0(%arg0: i32) -> (i32, i32) {
    %c0_i32 = arith.constant 0 : i32
    %c0_i32_0 = arith.constant 0 : i32
    return %arg0, %c0_i32 : i32, i32
  }
  func.func @transform_1(%arg0: i32) -> (i32, i32) {
    %c0_i32 = arith.constant 0 : i32
    %c0_i32_0 = arith.constant 0 : i32
    %c0_i32_1 = arith.constant 0 : i32
    return %c0_i32, %c0_i32_0 : i32, i32
  }
  func.func @transform_2(%arg0: i32) -> (i32, i32) {
    %c0_i32 = arith.constant 0 : i32
    %c0_i32_0 = arith.constant 0 : i32
    %c0_i32_1 = arith.constant 0 : i32
    return %c0_i32, %c0_i32_0 : i32, i32
  }
  func.func @transform_3(%arg0: i32) -> (i32, i32) {
    %c0_i32 = arith.constant 0 : i32
    %c0_i32_0 = arith.constant 0 : i32
    %c0_i32_1 = arith.constant 0 : i32
    return %c0_i32, %c0_i32_0 : i32, i32
  }
  func.func @transform_4(%arg0: i32) -> (i32, i32) {
    %c0_i32 = arith.constant 0 : i32
    %c0_i32_0 = arith.constant 0 : i32
    %c0_i32_1 = arith.constant 0 : i32
    return %c0_i32, %c0_i32_0 : i32, i32
  }
  func.func @transform_5(%arg0: i32) -> (i32, i32) {
    %c0_i32 = arith.constant 0 : i32
    %c0_i32_0 = arith.constant 0 : i32
    %c0_i32_1 = arith.constant 0 : i32
    return %c0_i32, %c0_i32_0 : i32, i32
  }
  func.func @transform_6(%arg0: i32) -> (i32, i32) {
    %c0_i32 = arith.constant 0 : i32
    %c0_i32_0 = arith.constant 0 : i32
    %c0_i32_1 = arith.constant 0 : i32
    return %c0_i32, %c0_i32_0 : i32, i32
  }
  func.func @transform_7(%arg0: i32) -> (i32, i32) {
    %c0_i32 = arith.constant 0 : i32
    %c0_i32_0 = arith.constant 0 : i32
    %c0_i32_1 = arith.constant 0 : i32
    return %c0_i32, %c0_i32_0 : i32, i32
  }
  func.func @transform_8(%arg0: i32) -> (i32, i32) {
    %c0_i32 = arith.constant 0 : i32
    %c0_i32_0 = arith.constant 0 : i32
    %c0_i32_1 = arith.constant 0 : i32
    return %c0_i32, %c0_i32_0 : i32, i32
  }
  func.func @transform_9(%arg0: i32) -> (i32, i32) {
    %c0_i32 = arith.constant 0 : i32
    %c0_i32_0 = arith.constant 0 : i32
    %c0_i32_1 = arith.constant 0 : i32
    return %c0_i32, %c0_i32_0 : i32, i32
  }
  func.func @transform_10(%arg0: i32) -> (i32, i32) {
    %c0_i32 = arith.constant 0 : i32
    %c0_i32_0 = arith.constant 0 : i32
    %c0_i32_1 = arith.constant 0 : i32
    return %c0_i32, %c0_i32_0 : i32, i32
  }
  func.func @transform_11(%arg0: i32) -> (i32, i32) {
    %c0_i32 = arith.constant 0 : i32
    %c0_i32_0 = arith.constant 0 : i32
    return %arg0, %c0_i32 : i32, i32
  }
}

</mosaic_0001>

<llo_original>
// kernel: net_forward.1
$region0: #{net_forward.1}
  #allocation0 [shape = 'u32[]', space=smem, size = 0x4, offset = 0x4, fixed_abs, tag = 'smem constant byte address 0x4 - core index']
  #allocation1 [shape = 'u32[144,128]{1,0:T(1,128)}', space=vmem, size = 0x12000, scoped, tag = 'internal scratch']
  #allocation2 [shape = 'f32[1,1]{1,0:T(1,128)S(1)}', space=vmem, size = 0x200, scoped, tag = 'scoped memory for net_forward.1']
  %s0 = inlined_call_operand.vmem [shape: f32[1024,22], index: 0, kind: input, shape index: {}]
  %s1 = inlined_call_operand.vmem [shape: bf16[22,256], index: 1, kind: input, shape index: {}]
  %s2 = inlined_call_operand.vmem [shape: f32[1,256], index: 2, kind: input, shape index: {}]
  %s3 = inlined_call_operand.vmem [shape: bf16[256,256], index: 3, kind: input, shape index: {}]
  %s4 = inlined_call_operand.vmem [shape: f32[1,256], index: 4, kind: input, shape index: {}]
  %s5 = inlined_call_operand.vmem [shape: bf16[256,128], index: 5, kind: input, shape index: {}]
  %s6 = inlined_call_operand.vmem [shape: f32[1,128], index: 6, kind: input, shape index: {}]
  %s7 = inlined_call_operand.vmem [shape: bf16[128,128], index: 7, kind: input, shape index: {}]
  %s8 = inlined_call_operand.vmem [shape: f32[1,128], index: 8, kind: input, shape index: {}]
  %s9 = inlined_call_operand.vmem [shape: bf16[128,1], index: 9, kind: input, shape index: {}]
  %s10 = inlined_call_operand.<no memory space> [shape: f32[1,1], index: 10, kind: input, shape index: {}]
  %s11 = inlined_call_operand.vmem [shape: f32[1024,2], index: 11, kind: output, shape index: {}]
  %s12 = sld [smem:[#allocation0]]
  $region77: #{net_forward.1} parent=0
    _
  %s14 = ssub.s32 1, %s12
  %s15 = scalar_select 0, %s14, %s12
  %v16 = vstv %s10
  %17 = vst [vmem:[#allocation2] sm:$0x1] %v16
  loop: start=0, step=1, limit=4
  $region2: #{net_forward.1} parent=0 // loop_pre_header
    _
  $region3: #{net_forward.1} parent=0 // loop_header
    %s19 = sphi 0, %s23
    %p20 = scmp.ge.s32.totalorder %s19, 4
    %s29 = sphi 0, %s31
    %s32 = sphi 0, %s29
    %s33 = sphi 0, %s32
    %s49 = sphi 0, %s33
    %s53 = sphi 0, %s53
    %s55 = sphi 0, %s53
    %s56 = sphi 0, %s55
    %s70 = sphi 0, %s56
    %s74 = sphi 0, %s74
    %s76 = sphi 0, %s74
    %s77 = sphi 0, %s76
    %s91 = sphi 0, %s77
    %s95 = sphi 0, %s95
    %s97 = sphi 0, %s95
    %s98 = sphi 0, %s97
    %s112 = sphi 0, %s98
    %s116 = sphi 0, %s116
    %s118 = sphi 0, %s116
    %s119 = sphi 0, %s118
    %s133 = sphi 0, %s119
    %s137 = sphi 0, %s137
    %s139 = sphi 0, %s137
    %s140 = sphi 0, %s139
    %s154 = sphi 0, %s140
    %s158 = sphi 0, %s158
    %s160 = sphi 0, %s158
    %s161 = sphi 0, %s160
    %s175 = sphi 0, %s161
    %s179 = sphi 0, %s179
    %s181 = sphi 0, %s179
    %s182 = sphi 0, %s181
    %s196 = sphi 0, %s182
    %s200 = sphi 0, %s200
    %s202 = sphi 0, %s200
    %s203 = sphi 0, %s202
    %s217 = sphi 0, %s203
    %s221 = sphi 0, %s221
    %s223 = sphi 0, %s221
    %s224 = sphi 0, %s223
    %s238 = sphi 0, %s224
    %s242 = sphi 0, %s242
    %s244 = sphi 0, %s242
    %s245 = sphi 0, %s244
    %s259 = sphi 0, %s245
    %s265 = sphi 0, %s267
    %s268 = sphi 0, %s265
    %s269 = sphi 0, %s268
    %s285 = sphi 0, %s269
  $region4: #{net_forward.1} parent=0 // loop_header_branch
    %22 = sbr.rel (%p20) target = $region8
  $region5: #{net_forward.1} parent=0 // loop_body
    %s24 = ssub.s32 %s19, 1
    %s25 = ssub.s32 %s19, 2
    %s26 = sadd.s32 %s19, 1
    %s27 = ssub.s32 %s19, %s26
    %p28 = scmp.eq.s32.totalorder %s27, 0
    %s30 = sadd.s32 %s29, 1
    %s31 = scalar_select %p28, %s29, %s30
    %p34 = pneg %p28
    %p35 = scmp.eq.s32.totalorder %s19, 1
    %p36 = por %p34, %p35
    %p37 = scmp.ne.s32.totalorder %s29, %s32
    %p38 = scmp.eq.s32.totalorder %s19, 0
    %p39 = por %p37, %p38
    %p40 = scmp.ne.s32.totalorder %s29, %s32
    %p41 = scmp.eq.s32.totalorder %s24, 1
    %p42 = por %p40, %p41
    %p43 = scmp.ne.s32.totalorder %s32, %s33
    %p44 = scmp.eq.s32.totalorder %s24, 0
    %p45 = por %p43, %p44
    %p46 = scmp.ne.s32.totalorder %s32, %s33
    %p47 = scmp.eq.s32.totalorder %s25, 1
    %p48 = por %p46, %p47
    %p50 = scmp.ne.s32.totalorder %s33, %s49
    %p51 = scmp.eq.s32.totalorder %s25, 0
    %p52 = por %p50, %p51
    %s54 = sadd.s32 %s53, 1
    %p57 = scmp.eq.s32.totalorder %s19, 1
    %p58 = scmp.ne.s32.totalorder %s53, %s55
    %p59 = scmp.eq.s32.totalorder %s19, 0
    %p60 = por %p58, %p59
    %p61 = scmp.ne.s32.totalorder %s53, %s55
    %p62 = scmp.eq.s32.totalorder %s24, 1
    %p63 = por %p61, %p62
    %p64 = scmp.ne.s32.totalorder %s55, %s56
    %p65 = scmp.eq.s32.totalorder %s24, 0
    %p66 = por %p64, %p65
    %p67 = scmp.ne.s32.totalorder %s55, %s56
    %p68 = scmp.eq.s32.totalorder %s25, 1
    %p69 = por %p67, %p68
    %p71 = scmp.ne.s32.totalorder %s56, %s70
    %p72 = scmp.eq.s32.totalorder %s25, 0
    %p73 = por %p71, %p72
    %s75 = sadd.s32 %s74, 1
    %p78 = scmp.eq.s32.totalorder %s19, 1
    %p79 = scmp.ne.s32.totalorder %s74, %s76
    %p80 = scmp.eq.s32.totalorder %s19, 0
    %p81 = por %p79, %p80
    %p82 = scmp.ne.s32.totalorder %s74, %s76
    %p83 = scmp.eq.s32.totalorder %s24, 1
    %p84 = por %p82, %p83
    %p85 = scmp.ne.s32.totalorder %s76, %s77
    %p86 = scmp.eq.s32.totalorder %s24, 0
    %p87 = por %p85, %p86
    %p88 = scmp.ne.s32.totalorder %s76, %s77
    %p89 = scmp.eq.s32.totalorder %s25, 1
    %p90 = por %p88, %p89
    %p92 = scmp.ne.s32.totalorder %s77, %s91
    %p93 = scmp.eq.s32.totalorder %s25, 0
    %p94 = por %p92, %p93
    %s96 = sadd.s32 %s95, 1
    %p99 = scmp.eq.s32.totalorder %s19, 1
    %p100 = scmp.ne.s32.totalorder %s95, %s97
    %p101 = scmp.eq.s32.totalorder %s19, 0
    %p102 = por %p100, %p101
    %p103 = scmp.ne.s32.totalorder %s95, %s97
    %p104 = scmp.eq.s32.totalorder %s24, 1
    %p105 = por %p103, %p104
    %p106 = scmp.ne.s32.totalorder %s97, %s98
    %p107 = scmp.eq.s32.totalorder %s24, 0
    %p108 = por %p106, %p107
    %p109 = scmp.ne.s32.totalorder %s97, %s98
    %p110 = scmp.eq.s32.totalorder %s25, 1
    %p111 = por %p109, %p110
    %p113 = scmp.ne.s32.totalorder %s98, %s112
    %p114 = scmp.eq.s32.totalorder %s25, 0
    %p115 = por %p113, %p114
    %s117 = sadd.s32 %s116, 1
    %p120 = scmp.eq.s32.totalorder %s19, 1
    %p121 = scmp.ne.s32.totalorder %s116, %s118
    %p122 = scmp.eq.s32.totalorder %s19, 0
    %p123 = por %p121, %p122
    %p124 = scmp.ne.s32.totalorder %s116, %s118
    %p125 = scmp.eq.s32.totalorder %s24, 1
    %p126 = por %p124, %p125
    %p127 = scmp.ne.s32.totalorder %s118, %s119
    %p128 = scmp.eq.s32.totalorder %s24, 0
    %p129 = por %p127, %p128
    %p130 = scmp.ne.s32.totalorder %s118, %s119
    %p131 = scmp.eq.s32.totalorder %s25, 1
    %p132 = por %p130, %p131
    %p134 = scmp.ne.s32.totalorder %s119, %s133
    %p135 = scmp.eq.s32.totalorder %s25, 0
    %p136 = por %p134, %p135
    %s138 = sadd.s32 %s137, 1
    %p141 = scmp.eq.s32.totalorder %s19, 1
    %p142 = scmp.ne.s32.totalorder %s137, %s139
    %p143 = scmp.eq.s32.totalorder %s19, 0
    %p144 = por %p142, %p143
    %p145 = scmp.ne.s32.totalorder %s137, %s139
    %p146 = scmp.eq.s32.totalorder %s24, 1
    %p147 = por %p145, %p146
    %p148 = scmp.ne.s32.totalorder %s139, %s140
    %p149 = scmp.eq.s32.totalorder %s24, 0
    %p150 = por %p148, %p149
    %p151 = scmp.ne.s32.totalorder %s139, %s140
    %p152 = scmp.eq.s32.totalorder %s25, 1
    %p153 = por %p151, %p152
    %p155 = scmp.ne.s32.totalorder %s140, %s154
    %p156 = scmp.eq.s32.totalorder %s25, 0
    %p157 = por %p155, %p156
    %s159 = sadd.s32 %s158, 1
    %p162 = scmp.eq.s32.totalorder %s19, 1
    %p163 = scmp.ne.s32.totalorder %s158, %s160
    %p164 = scmp.eq.s32.totalorder %s19, 0
    %p165 = por %p163, %p164
    %p166 = scmp.ne.s32.totalorder %s158, %s160
    %p167 = scmp.eq.s32.totalorder %s24, 1
    %p168 = por %p166, %p167
    %p169 = scmp.ne.s32.totalorder %s160, %s161
    %p170 = scmp.eq.s32.totalorder %s24, 0
    %p171 = por %p169, %p170
    %p172 = scmp.ne.s32.totalorder %s160, %s161
    %p173 = scmp.eq.s32.totalorder %s25, 1
    %p174 = por %p172, %p173
    %p176 = scmp.ne.s32.totalorder %s161, %s175
    %p177 = scmp.eq.s32.totalorder %s25, 0
    %p178 = por %p176, %p177
    %s180 = sadd.s32 %s179, 1
    %p183 = scmp.eq.s32.totalorder %s19, 1
    %p184 = scmp.ne.s32.totalorder %s179, %s181
    %p185 = scmp.eq.s32.totalorder %s19, 0
    %p186 = por %p184, %p185
    %p187 = scmp.ne.s32.totalorder %s179, %s181
    %p188 = scmp.eq.s32.totalorder %s24, 1
    %p189 = por %p187, %p188
    %p190 = scmp.ne.s32.totalorder %s181, %s182
    %p191 = scmp.eq.s32.totalorder %s24, 0
    %p192 = por %p190, %p191
    %p193 = scmp.ne.s32.totalorder %s181, %s182
    %p194 = scmp.eq.s32.totalorder %s25, 1
    %p195 = por %p193, %p194
    %p197 = scmp.ne.s32.totalorder %s182, %s196
    %p198 = scmp.eq.s32.totalorder %s25, 0
    %p199 = por %p197, %p198
    %s201 = sadd.s32 %s200, 1
    %p204 = scmp.eq.s32.totalorder %s19, 1
    %p205 = scmp.ne.s32.totalorder %s200, %s202
    %p206 = scmp.eq.s32.totalorder %s19, 0
    %p207 = por %p205, %p206
    %p208 = scmp.ne.s32.totalorder %s200, %s202
    %p209 = scmp.eq.s32.totalorder %s24, 1
    %p210 = por %p208, %p209
    %p211 = scmp.ne.s32.totalorder %s202, %s203
    %p212 = scmp.eq.s32.totalorder %s24, 0
    %p213 = por %p211, %p212
    %p214 = scmp.ne.s32.totalorder %s202, %s203
    %p215 = scmp.eq.s32.totalorder %s25, 1
    %p216 = por %p214, %p215
    %p218 = scmp.ne.s32.totalorder %s203, %s217
    %p219 = scmp.eq.s32.totalorder %s25, 0
    %p220 = por %p218, %p219
    %s222 = sadd.s32 %s221, 1
    %p225 = scmp.eq.s32.totalorder %s19, 1
    %p226 = scmp.ne.s32.totalorder %s221, %s223
    %p227 = scmp.eq.s32.totalorder %s19, 0
    %p228 = por %p226, %p227
    %p229 = scmp.ne.s32.totalorder %s221, %s223
    %p230 = scmp.eq.s32.totalorder %s24, 1
    %p231 = por %p229, %p230
    %p232 = scmp.ne.s32.totalorder %s223, %s224
    %p233 = scmp.eq.s32.totalorder %s24, 0
    %p234 = por %p232, %p233
    %p235 = scmp.ne.s32.totalorder %s223, %s224
    %p236 = scmp.eq.s32.totalorder %s25, 1
    %p237 = por %p235, %p236
    %p239 = scmp.ne.s32.totalorder %s224, %s238
    %p240 = scmp.eq.s32.totalorder %s25, 0
    %p241 = por %p239, %p240
    %s243 = sadd.s32 %s242, 1
    %p246 = scmp.eq.s32.totalorder %s19, 1
    %p247 = scmp.ne.s32.totalorder %s242, %s244
    %p248 = scmp.eq.s32.totalorder %s19, 0
    %p249 = por %p247, %p248
    %p250 = scmp.ne.s32.totalorder %s242, %s244
    %p251 = scmp.eq.s32.totalorder %s24, 1
    %p252 = por %p250, %p251
    %p253 = scmp.ne.s32.totalorder %s244, %s245
    %p254 = scmp.eq.s32.totalorder %s24, 0
    %p255 = por %p253, %p254
    %p256 = scmp.ne.s32.totalorder %s244, %s245
    %p257 = scmp.eq.s32.totalorder %s25, 1
    %p258 = por %p256, %p257
    %p260 = scmp.ne.s32.totalorder %s245, %s259
    %p261 = scmp.eq.s32.totalorder %s25, 0
    %p262 = por %p260, %p261
    %s263 = ssub.s32 %s19, %s26
    %p264 = scmp.eq.s32.totalorder %s263, 0
    %s266 = sadd.s32 %s265, 1
    %s267 = scalar_select %p264, %s265, %s266
    %p270 = pneg %p264
    %p271 = scmp.eq.s32.totalorder %s19, 1
    %p272 = por %p270, %p271
    %p273 = scmp.ne.s32.totalorder %s265, %s268
    %p274 = scmp.eq.s32.totalorder %s19, 0
    %p275 = por %p273, %p274
    %p276 = scmp.ne.s32.totalorder %s265, %s268
    %p277 = scmp.eq.s32.totalorder %s24, 1
    %p278 = por %p276, %p277
    %p279 = scmp.ne.s32.totalorder %s268, %s269
    %p280 = scmp.eq.s32.totalorder %s24, 0
    %p281 = por %p279, %p280
    %p282 = scmp.ne.s32.totalorder %s268, %s269
    %p283 = scmp.eq.s32.totalorder %s25, 1
    %p284 = por %p282, %p283
    %p286 = scmp.ne.s32.totalorder %s269, %s285
    %p287 = scmp.eq.s32.totalorder %s25, 0
    %p288 = por %p286, %p287
    %p289 = scmp.le.s32.totalorder 1, %s19
    %p290 = scmp.lt.s32.totalorder %s19, 3
    %p291 = pnand %p289, %p290
    %p292 = pneg %p291
    // Predicated region
    $region9: #{net_forward.1} parent=5 // pred_check
      _
    $region10: #{net_forward.1} parent=5 // pred_check_branch
      %294 = sbr.rel (%p291) target = $region12
    $region11: #{net_forward.1} parent=5 // pred_region
      %s295 = ssub.s32 %s19, 1
      // Predicated region
      $region13: #{net_forward.1} parent=11 // pred_check
        %p296 = pneg %p66
      $region14: #{net_forward.1} parent=11 // pred_check_branch
        %298 = sbr.rel (%p296) target = $region16
      $region15: #{net_forward.1} parent=11 // pred_region
        _
      $region16: #{net_forward.1} parent=11 // pred_fallthru
        _
      // Predicated region
      $region17: #{net_forward.1} parent=11 // pred_check
        %p299 = pneg %p87
      $region18: #{net_forward.1} parent=11 // pred_check_branch
        %301 = sbr.rel (%p299) target = $region20
      $region19: #{net_forward.1} parent=11 // pred_region
        _
      $region20: #{net_forward.1} parent=11 // pred_fallthru
        _
      // Predicated region
      $region21: #{net_forward.1} parent=11 // pred_check
        %p302 = pneg %p108
      $region22: #{net_forward.1} parent=11 // pred_check_branch
        %304 = sbr.rel (%p302) target = $region24
      $region23: #{net_forward.1} parent=11 // pred_region
        _
      $region24: #{net_forward.1} parent=11 // pred_fallthru
        _
      // Predicated region
      $region25: #{net_forward.1} parent=11 // pred_check
        %p305 = pneg %p129
      $region26: #{net_forward.1} parent=11 // pred_check_branch
        %307 = sbr.rel (%p305) target = $region28
      $region27: #{net_forward.1} parent=11 // pred_region
        _
      $region28: #{net_forward.1} parent=11 // pred_fallthru
        _
      // Predicated region
      $region29: #{net_forward.1} parent=11 // pred_check
        %p308 = pneg %p150
      $region30: #{net_forward.1} parent=11 // pred_check_branch
        %310 = sbr.rel (%p308) target = $region32
      $region31: #{net_forward.1} parent=11 // pred_region
        _
      $region32: #{net_forward.1} parent=11 // pred_fallthru
        _
      // Predicated region
      $region33: #{net_forward.1} parent=11 // pred_check
        %p311 = pneg %p171
      $region34: #{net_forward.1} parent=11 // pred_check_branch
        %313 = sbr.rel (%p311) target = $region36
      $region35: #{net_forward.1} parent=11 // pred_region
        _
      $region36: #{net_forward.1} parent=11 // pred_fallthru
        _
      // Predicated region
      $region37: #{net_forward.1} parent=11 // pred_check
        %p314 = pneg %p192
      $region38: #{net_forward.1} parent=11 // pred_check_branch
        %316 = sbr.rel (%p314) target = $region40
      $region39: #{net_forward.1} parent=11 // pred_region
        _
      $region40: #{net_forward.1} parent=11 // pred_fallthru
        _
      // Predicated region
      $region41: #{net_forward.1} parent=11 // pred_check
        %p317 = pneg %p213
      $region42: #{net_forward.1} parent=11 // pred_check_branch
        %319 = sbr.rel (%p317) target = $region44
      $region43: #{net_forward.1} parent=11 // pred_region
        _
      $region44: #{net_forward.1} parent=11 // pred_fallthru
        _
      // Predicated region
      $region45: #{net_forward.1} parent=11 // pred_check
        %p320 = pneg %p234
      $region46: #{net_forward.1} parent=11 // pred_check_branch
        %322 = sbr.rel (%p320) target = $region48
      $region47: #{net_forward.1} parent=11 // pred_region
        _
      $region48: #{net_forward.1} parent=11 // pred_fallthru
        _
      // Predicated region
      $region49: #{net_forward.1} parent=11 // pred_check
        %p323 = pneg %p255
      $region50: #{net_forward.1} parent=11 // pred_check_branch
        %325 = sbr.rel (%p323) target = $region52
      $region51: #{net_forward.1} parent=11 // pred_region
        _
      $region52: #{net_forward.1} parent=11 // pred_fallthru
        _
    $region12: #{net_forward.1} parent=5 // pred_fallthru
      _
    %p326 = scmp.lt.s32.totalorder %s19, 2
    // Predicated region
    $region53: #{net_forward.1} parent=5 // pred_check
      %p327 = pneg %p326
    $region54: #{net_forward.1} parent=5 // pred_check_branch
      %329 = sbr.rel (%p327) target = $region56
    $region55: #{net_forward.1} parent=5 // pred_region
      // Predicated region
      $region57: #{net_forward.1} parent=55 // pred_check
        %p330 = pneg %p39
      $region58: #{net_forward.1} parent=55 // pred_check_branch
        %332 = sbr.rel (%p330) target = $region60
      $region59: #{net_forward.1} parent=55 // pred_region
        %s333 = smul.u32 64, %s19
        %p334 = scmp.lt.s32.totalorder %s333, 127
        %s335 = scalar_select %p334, %s333, 127
        %s336 = smul.addr %s335, 8
        %s337 = scalar_lea.vmem %s0, %s336
        %s338 = smul.u32 64, %s19
      $region60: #{net_forward.1} parent=55 // pred_fallthru
        _
    $region56: #{net_forward.1} parent=5 // pred_fallthru
      _
    %p339 = scmp.le.s32.totalorder 1, %s19
    %p340 = scmp.lt.s32.totalorder %s19, 3
    %p341 = pnand %p339, %p340
    %p342 = pneg %p341
    // Predicated region
    $region61: #{net_forward.1} parent=5 // pred_check
      _
    $region62: #{net_forward.1} parent=5 // pred_check_branch
      %344 = sbr.rel (%p341) target = $region64
    $region63: #{net_forward.1} parent=5 // pred_region
      %s345 = ssub.s32 %s19, 1
      %s346 = smul.u32 64, %s24
      %p347 = scmp.lt.s32.totalorder %s346, 127
      %s348 = scalar_select %p347, %s346, 127
      %s349 = smul.addr %s348, 8
      %s350 = scalar_lea.vmem %s0, %s349
      %p351 = pneg %p45
      %p352 = pneg %p42
      %p353 = pneg %p66
      %p354 = pneg %p63
      %p355 = pneg %p87
      %p356 = pneg %p84
      %p357 = pneg %p108
      %p358 = pneg %p105
      %p359 = pneg %p129
      %p360 = pneg %p126
      %p361 = pneg %p150
      %p362 = pneg %p147
      %p363 = pneg %p171
      %p364 = pneg %p168
      %p365 = pneg %p192
      %p366 = pneg %p189
      %p367 = pneg %p213
      %p368 = pneg %p210
      %p369 = pneg %p234
      %p370 = pneg %p231
      %p371 = pneg %p255
      %p372 = pneg %p252
      %p373 = pneg %p281
      %p374 = pneg %p278
      %s375 = smul.u32 64, %s24
      %p376 = scmp.lt.s32.totalorder %s375, 127
      %s377 = scalar_select %p376, %s375, 127
      %s378 = smul.addr %s377, 8
      %s379 = scalar_lea.vmem %s11, %s378
      %s380 = smul.u32 64, %s24
      %p381 = scmp.lt.s32.totalorder %s380, 127
      %s382 = scalar_select %p381, %s380, 127
      %s383 = smul.addr %s382, 8
      %s384 = scalar_lea.vmem %s0, %s383
      %s385 = smul.u32 64, %s24
      %s386 = smul.u32 64, %s24
      %p387 = scmp.lt.s32.totalorder %s386, 127
      %s388 = scalar_select %p387, %s386, 127
      %s389 = smul.addr %s388, 8
      %s390 = scalar_lea.vmem %s11, %s389
      %s391 = smul.u32 64, %s24
      %v393 = vld [vmem:[%s384] sm:$0xff]
      %v394 = vld [vmem:[%s384 + $0x8] sm:$0xff]
      %v395 = vld [vmem:[%s384 + $0x10] sm:$0xff]
      %v396 = vld [vmem:[%s384 + $0x18] sm:$0xff]
      %v397 = vld [vmem:[%s384 + $0x20] sm:$0xff]
      %v398 = vld [vmem:[%s384 + $0x28] sm:$0xff]
      %v399 = vld [vmem:[%s384 + $0x30] sm:$0xff]
      %v400 = vld [vmem:[%s384 + $0x38] sm:$0xff]
      %v401 = vld [vmem:[%s384 + $0x40] sm:$0xff]
      %v402 = vld [vmem:[%s384 + $0x48] sm:$0xff]
      %v403 = vld [vmem:[%s384 + $0x50] sm:$0xff]
      %v404 = vld [vmem:[%s384 + $0x58] sm:$0xff]
      %v405 = vld [vmem:[%s384 + $0x60] sm:$0xff]
      %v406 = vld [vmem:[%s384 + $0x68] sm:$0xff]
      %v407 = vld [vmem:[%s384 + $0x70] sm:$0xff]
      %v408 = vld [vmem:[%s384 + $0x78] sm:$0xff]
      %v409 = vld [vmem:[%s384 + $0x80] sm:$0xff]
      %v410 = vld [vmem:[%s384 + $0x88] sm:$0xff]
      %v411 = vld [vmem:[%s384 + $0x90] sm:$0xff]
      %v412 = vld [vmem:[%s384 + $0x98] sm:$0xff]
      %v413 = vld [vmem:[%s384 + $0xa0] sm:$0xff]
      %v414 = vld [vmem:[%s384 + $0xa8] sm:$0xff]
      %v415 = vld [vmem:[%s384 + $0xb0] sm:$0xff]
      %v416 = vld [vmem:[%s384 + $0xb8] sm:$0xff]
      %v417 = vld [vmem:[%s384 + $0xc0] sm:$0xff]
      %v418 = vld [vmem:[%s384 + $0xc8] sm:$0xff]
      %v419 = vld [vmem:[%s384 + $0xd0] sm:$0xff]
      %v420 = vld [vmem:[%s384 + $0xd8] sm:$0xff]
      %v421 = vld [vmem:[%s384 + $0xe0] sm:$0xff]
      %v422 = vld [vmem:[%s384 + $0xe8] sm:$0xff]
      %v423 = vld [vmem:[%s384 + $0xf0] sm:$0xff]
      %v424 = vld [vmem:[%s384 + $0xf8] sm:$0xff]
      %v425 = vld [vmem:[%s384 + $0x100] sm:$0xff]
      %v426 = vld [vmem:[%s384 + $0x108] sm:$0xff]
      %v427 = vld [vmem:[%s384 + $0x110] sm:$0xff]
      %v428 = vld [vmem:[%s384 + $0x118] sm:$0xff]
      %v429 = vld [vmem:[%s384 + $0x120] sm:$0xff]
      %v430 = vld [vmem:[%s384 + $0x128] sm:$0xff]
      %v431 = vld [vmem:[%s384 + $0x130] sm:$0xff]
      %v432 = vld [vmem:[%s384 + $0x138] sm:$0xff]
      %v433 = vld [vmem:[%s384 + $0x140] sm:$0xff]
      %v434 = vld [vmem:[%s384 + $0x148] sm:$0xff]
      %v435 = vld [vmem:[%s384 + $0x150] sm:$0xff]
      %v436 = vld [vmem:[%s384 + $0x158] sm:$0xff]
      %v437 = vld [vmem:[%s384 + $0x160] sm:$0xff]
      %v438 = vld [vmem:[%s384 + $0x168] sm:$0xff]
      %v439 = vld [vmem:[%s384 + $0x170] sm:$0xff]
      %v440 = vld [vmem:[%s384 + $0x178] sm:$0xff]
      %v441 = vld [vmem:[%s384 + $0x180] sm:$0xff]
      %v442 = vld [vmem:[%s384 + $0x188] sm:$0xff]
      %v443 = vld [vmem:[%s384 + $0x190] sm:$0xff]
      %v444 = vld [vmem:[%s384 + $0x198] sm:$0xff]
      %v445 = vld [vmem:[%s384 + $0x1a0] sm:$0xff]
      %v446 = vld [vmem:[%s384 + $0x1a8] sm:$0xff]
      %v447 = vld [vmem:[%s384 + $0x1b0] sm:$0xff]
      %v448 = vld [vmem:[%s384 + $0x1b8] sm:$0xff]
      %v449 = vld [vmem:[%s384 + $0x1c0] sm:$0xff]
      %v450 = vld [vmem:[%s384 + $0x1c8] sm:$0xff]
      %v451 = vld [vmem:[%s384 + $0x1d0] sm:$0xff]
      %v452 = vld [vmem:[%s384 + $0x1d8] sm:$0xff]
      %v453 = vld [vmem:[%s384 + $0x1e0] sm:$0xff]
      %v454 = vld [vmem:[%s384 + $0x1e8] sm:$0xff]
      %v455 = vld [vmem:[%s384 + $0x1f0] sm:$0xff]
      %v456 = vld [vmem:[%s384 + $0x1f8] sm:$0xff]
      %v457 = vpack.c.bf16 %v394, %v393
      %v458 = vpack.c.bf16 %v396, %v395
      %v459 = vpack.c.bf16 %v398, %v397
      %v460 = vpack.c.bf16 %v400, %v399
      %v461 = vpack.c.bf16 %v402, %v401
      %v462 = vpack.c.bf16 %v404, %v403
      %v463 = vpack.c.bf16 %v406, %v405
      %v464 = vpack.c.bf16 %v408, %v407
      %v465 = vpack.c.bf16 %v410, %v409
      %v466 = vpack.c.bf16 %v412, %v411
      %v467 = vpack.c.bf16 %v414, %v413
      %v468 = vpack.c.bf16 %v416, %v415
      %v469 = vpack.c.bf16 %v418, %v417
      %v470 = vpack.c.bf16 %v420, %v419
      %v471 = vpack.c.bf16 %v422, %v421
      %v472 = vpack.c.bf16 %v424, %v423
      %v473 = vpack.c.bf16 %v426, %v425
      %v474 = vpack.c.bf16 %v428, %v427
      %v475 = vpack.c.bf16 %v430, %v429
      %v476 = vpack.c.bf16 %v432, %v431
      %v477 = vpack.c.bf16 %v434, %v433
      %v478 = vpack.c.bf16 %v436, %v435
      %v479 = vpack.c.bf16 %v438, %v437
      %v480 = vpack.c.bf16 %v440, %v439
      %v481 = vpack.c.bf16 %v442, %v441
      %v482 = vpack.c.bf16 %v444, %v443
      %v483 = vpack.c.bf16 %v446, %v445
      %v484 = vpack.c.bf16 %v448, %v447
      %v485 = vpack.c.bf16 %v450, %v449
      %v486 = vpack.c.bf16 %v452, %v451
      %v487 = vpack.c.bf16 %v454, %v453
      %v488 = vpack.c.bf16 %v456, %v455
      %v489 = vld [vmem:[%s1] sm:$0xff]
      %v490 = vld [vmem:[%s1 + $0x8] sm:$0xff]
      %v491 = vld [vmem:[%s1 + $0x10] sm:$0x77]
      %v492 = vld [vmem:[%s2] sm:$0x3]
      %v494 = vlaneseq
      %v495 = vshrl.u32 %v494, 7
      %v496 = vsub.s32 0, %v495
      %v497 = vrot.slane %v492, %v496
      %v498 = vlaneseq
      %v499 = vshrl.u32 %v498, 7
      %v500 = vsub.s32 1, %v499
      %v501 = vrot.slane %v492, %v500
      %v507 = vunpack.c.l.b16 %v489
      %v508 = vunpack.c.h.b16 %v489
      %v509 = vunpack.c.l.b16 %v490
      %v510 = vunpack.c.h.b16 %v490
      %v511 = vunpack.c.l.b16 %v491
      %v512 = vunpack.c.h.b16 %v491
      %v513 = vpack.c.b16 %v509, %v507
      %v514 = vpack.c.b16 %v510, %v508
      %v515 = vpack.c.b16 %v511, %v511
      %v516 = vpack.c.b16 %v512, %v512
      %vm519 = vcmask 179200
      %v521 = vsel %vm519, %v457, 0
      %v524 = vsel %vm519, %v458, 0
      %v527 = vsel %vm519, %v459, 0
      %v530 = vsel %vm519, %v460, 0
      %v533 = vsel %vm519, %v461, 0
      %v536 = vsel %vm519, %v462, 0
      %v539 = vsel %vm519, %v463, 0
      %v542 = vsel %vm519, %v464, 0
      %v545 = vsel %vm519, %v465, 0
      %v548 = vsel %vm519, %v466, 0
      %v551 = vsel %vm519, %v467, 0
      %v554 = vsel %vm519, %v468, 0
      %v557 = vsel %vm519, %v469, 0
      %v560 = vsel %vm519, %v470, 0
      %v563 = vsel %vm519, %v471, 0
      %v566 = vsel %vm519, %v472, 0
      %v569 = vsel %vm519, %v473, 0
      %v572 = vsel %vm519, %v474, 0
      %v575 = vsel %vm519, %v475, 0
      %v578 = vsel %vm519, %v476, 0
      %v581 = vsel %vm519, %v477, 0
      %v584 = vsel %vm519, %v478, 0
      %v587 = vsel %vm519, %v479, 0
      %v590 = vsel %vm519, %v480, 0
      %v593 = vsel %vm519, %v481, 0
      %v596 = vsel %vm519, %v482, 0
      %v599 = vsel %vm519, %v483, 0
      %v602 = vsel %vm519, %v484, 0
      %v605 = vsel %vm519, %v485, 0
      %v608 = vsel %vm519, %v486, 0
      %v611 = vsel %vm519, %v487, 0
      %v614 = vsel %vm519, %v488, 0
      %vm616 = vcmask 1042432
      %v618 = vsel %vm616, %v515, 0
      %v621 = vsel %vm616, %v516, 0
      %623 = vmatprep.subr.bf16.mxu0 0
      %624 = vmatpush1.bf16.msra.mxu0 0
      %625 = vmatprep.subr.bf16.mxu0 0
      %626 = vmatpush1.bf16.msra.mxu0 0
      %627 = vmatprep.subr.bf16.mxu0 0
      %628 = vmatpush1.bf16.msra.mxu0 0
      %629 = vmatprep.subr.bf16.mxu0 0
      %630 = vmatpush1.bf16.msra.mxu0 0
      %631 = vmatprep.subr.bf16.mxu0 0
      %632 = vmatpush1.bf16.msra.mxu0 0
      %633 = vmatprep.subr.bf16.mxu0 0
      %634 = vmatpush1.bf16.msra.mxu0 0
      %635 = vmatprep.subr.bf16.mxu0 %v621
      %636 = vmatpush1.bf16.msra.mxu0 %v618
      %637 = vmatprep.subr.bf16.mxu0 %v514
      %638 = vmatpush1.bf16.msra.mxu0 %v513
      %639 = vmatprep.subr.bf16.mxu0 0
      %640 = vmatpush2.bf16.msra.mxu0 0
      %641 = vmatprep.subr.bf16.mxu0 0
      %642 = vmatpush2.bf16.msra.mxu0 0
      %643 = vmatprep.subr.bf16.mxu0 0
      %644 = vmatpush2.bf16.msra.mxu0 0
      %645 = vmatprep.subr.bf16.mxu0 0
      %646 = vmatpush2.bf16.msra.mxu0 0
      %647 = vmatprep.subr.bf16.mxu0 0
      %648 = vmatpush2.bf16.msra.mxu0 0
      %649 = vmatprep.subr.bf16.mxu0 0
      %650 = vmatpush2.bf16.msra.mxu0 0
      %651 = vmatprep.subr.bf16.mxu0 0
      %652 = vmatpush2.bf16.msra.mxu0 0
      %653 = vmatprep.subr.bf16.mxu0 0
      %654 = vmatpush2.bf16.msra.mxu0 0
      %655 = vmatprep.mubr.bf16.mxu0 0
      %656 = vmatmul.mubr.bf16.gmra.mxu0 %v521
      %v657 = vpop.f32.mrf.mxu0
      %v658 = vadd.f32 %v497, %v657
      %v659 = vpop.f32.mrf.mxu0
      %v660 = vadd.f32 %v501, %v659
      %v661 = vpop.f32.mrf.mxu0
      %v662 = vadd.f32 %v497, %v661
      %v663 = vpop.f32.mrf.mxu0
      %v664 = vadd.f32 %v501, %v663
      %665 = vmatprep.mubr.bf16.mxu0 0
      %666 = vmatmul.mubr.bf16.gmra.mxu0 %v524
      %v667 = vpop.f32.mrf.mxu0
      %v668 = vadd.f32 %v497, %v667
      %v669 = vpop.f32.mrf.mxu0
      %v670 = vadd.f32 %v501, %v669
      %v671 = vpop.f32.mrf.mxu0
      %v672 = vadd.f32 %v497, %v671
      %v673 = vpop.f32.mrf.mxu0
      %v674 = vadd.f32 %v501, %v673
      %675 = vmatprep.mubr.bf16.mxu0 0
      %676 = vmatmul.mubr.bf16.gmra.mxu0 %v527
      %v677 = vpop.f32.mrf.mxu0
      %v678 = vadd.f32 %v497, %v677
      %v679 = vpop.f32.mrf.mxu0
      %v680 = vadd.f32 %v501, %v679
      %v681 = vpop.f32.mrf.mxu0
      %v682 = vadd.f32 %v497, %v681
      %v683 = vpop.f32.mrf.mxu0
      %v684 = vadd.f32 %v501, %v683
      %685 = vmatprep.mubr.bf16.mxu0 0
      %686 = vmatmul.mubr.bf16.gmra.mxu0 %v530
      %v687 = vpop.f32.mrf.mxu0
      %v688 = vadd.f32 %v497, %v687
      %v689 = vpop.f32.mrf.mxu0
      %v690 = vadd.f32 %v501, %v689
      %v691 = vpop.f32.mrf.mxu0
      %v692 = vadd.f32 %v497, %v691
      %v693 = vpop.f32.mrf.mxu0
      %v694 = vadd.f32 %v501, %v693
      %695 = vmatprep.mubr.bf16.mxu0 0
      %696 = vmatmul.mubr.bf16.gmra.mxu0 %v533
      %v697 = vpop.f32.mrf.mxu0
      %v698 = vadd.f32 %v497, %v697
      %v699 = vpop.f32.mrf.mxu0
      %v700 = vadd.f32 %v501, %v699
      %v701 = vpop.f32.mrf.mxu0
      %v702 = vadd.f32 %v497, %v701
      %v703 = vpop.f32.mrf.mxu0
      %v704 = vadd.f32 %v501, %v703
      %705 = vmatprep.mubr.bf16.mxu0 0
      %706 = vmatmul.mubr.bf16.gmra.mxu0 %v536
      %v707 = vpop.f32.mrf.mxu0
      %v708 = vadd.f32 %v497, %v707
      %v709 = vpop.f32.mrf.mxu0
      %v710 = vadd.f32 %v501, %v709
      %v711 = vpop.f32.mrf.mxu0
      %v712 = vadd.f32 %v497, %v711
      %v713 = vpop.f32.mrf.mxu0
      %v714 = vadd.f32 %v501, %v713
      %715 = vmatprep.mubr.bf16.mxu0 0
      %716 = vmatmul.mubr.bf16.gmra.mxu0 %v539
      %v717 = vpop.f32.mrf.mxu0
      %v718 = vadd.f32 %v497, %v717
      %v719 = vpop.f32.mrf.mxu0
      %v720 = vadd.f32 %v501, %v719
      %v721 = vpop.f32.mrf.mxu0
      %v722 = vadd.f32 %v497, %v721
      %v723 = vpop.f32.mrf.mxu0
      %v724 = vadd.f32 %v501, %v723
      %725 = vmatprep.mubr.bf16.mxu0 0
      %726 = vmatmul.mubr.bf16.gmra.mxu0 %v542
      %v727 = vpop.f32.mrf.mxu0
      %v728 = vadd.f32 %v497, %v727
      %v729 = vpop.f32.mrf.mxu0
      %v730 = vadd.f32 %v501, %v729
      %v731 = vpop.f32.mrf.mxu0
      %v732 = vadd.f32 %v497, %v731
      %v733 = vpop.f32.mrf.mxu0
      %v734 = vadd.f32 %v501, %v733
      %735 = vmatprep.mubr.bf16.mxu0 0
      %736 = vmatmul.mubr.bf16.gmra.mxu0 %v545
      %v737 = vpop.f32.mrf.mxu0
      %v738 = vadd.f32 %v497, %v737
      %v739 = vpop.f32.mrf.mxu0
      %v740 = vadd.f32 %v501, %v739
      %v741 = vpop.f32.mrf.mxu0
      %v742 = vadd.f32 %v497, %v741
      %v743 = vpop.f32.mrf.mxu0
      %v744 = vadd.f32 %v501, %v743
      %745 = vmatprep.mubr.bf16.mxu0 0
      %746 = vmatmul.mubr.bf16.gmra.mxu0 %v548
      %v747 = vpop.f32.mrf.mxu0
      %v748 = vadd.f32 %v497, %v747
      %v749 = vpop.f32.mrf.mxu0
      %v750 = vadd.f32 %v501, %v749
      %v751 = vpop.f32.mrf.mxu0
      %v752 = vadd.f32 %v497, %v751
      %v753 = vpop.f32.mrf.mxu0
      %v754 = vadd.f32 %v501, %v753
      %755 = vmatprep.mubr.bf16.mxu0 0
      %756 = vmatmul.mubr.bf16.gmra.mxu0 %v551
      %v757 = vpop.f32.mrf.mxu0
      %v758 = vadd.f32 %v497, %v757
      %v759 = vpop.f32.mrf.mxu0
      %v760 = vadd.f32 %v501, %v759
      %v761 = vpop.f32.mrf.mxu0
      %v762 = vadd.f32 %v497, %v761
      %v763 = vpop.f32.mrf.mxu0
      %v764 = vadd.f32 %v501, %v763
      %765 = vmatprep.mubr.bf16.mxu0 0
      %766 = vmatmul.mubr.bf16.gmra.mxu0 %v554
      %v767 = vpop.f32.mrf.mxu0
      %v768 = vadd.f32 %v497, %v767
      %v769 = vpop.f32.mrf.mxu0
      %v770 = vadd.f32 %v501, %v769
      %v771 = vpop.f32.mrf.mxu0
      %v772 = vadd.f32 %v497, %v771
      %v773 = vpop.f32.mrf.mxu0
      %v774 = vadd.f32 %v501, %v773
      %775 = vmatprep.mubr.bf16.mxu0 0
      %776 = vmatmul.mubr.bf16.gmra.mxu0 %v557
      %v777 = vpop.f32.mrf.mxu0
      %v778 = vadd.f32 %v497, %v777
      %v779 = vpop.f32.mrf.mxu0
      %v780 = vadd.f32 %v501, %v779
      %v781 = vpop.f32.mrf.mxu0
      %v782 = vadd.f32 %v497, %v781
      %v783 = vpop.f32.mrf.mxu0
      %v784 = vadd.f32 %v501, %v783
      %785 = vmatprep.mubr.bf16.mxu0 0
      %786 = vmatmul.mubr.bf16.gmra.mxu0 %v560
      %v787 = vpop.f32.mrf.mxu0
      %v788 = vadd.f32 %v497, %v787
      %v789 = vpop.f32.mrf.mxu0
      %v790 = vadd.f32 %v501, %v789
      %v791 = vpop.f32.mrf.mxu0
      %v792 = vadd.f32 %v497, %v791
      %v793 = vpop.f32.mrf.mxu0
      %v794 = vadd.f32 %v501, %v793
      %795 = vmatprep.mubr.bf16.mxu0 0
      %796 = vmatmul.mubr.bf16.gmra.mxu0 %v563
      %v797 = vpop.f32.mrf.mxu0
      %v798 = vadd.f32 %v497, %v797
      %v799 = vpop.f32.mrf.mxu0
      %v800 = vadd.f32 %v501, %v799
      %v801 = vpop.f32.mrf.mxu0
      %v802 = vadd.f32 %v497, %v801
      %v803 = vpop.f32.mrf.mxu0
      %v804 = vadd.f32 %v501, %v803
      %805 = vmatprep.mubr.bf16.mxu0 0
      %806 = vmatmul.mubr.bf16.gmra.mxu0 %v566
      %v807 = vpop.f32.mrf.mxu0
      %v808 = vadd.f32 %v497, %v807
      %v809 = vpop.f32.mrf.mxu0
      %v810 = vadd.f32 %v501, %v809
      %v811 = vpop.f32.mrf.mxu0
      %v812 = vadd.f32 %v497, %v811
      %v813 = vpop.f32.mrf.mxu0
      %v814 = vadd.f32 %v501, %v813
      %815 = vmatprep.mubr.bf16.mxu0 0
      %816 = vmatmul.mubr.bf16.gmra.mxu0 %v569
      %v817 = vpop.f32.mrf.mxu0
      %v818 = vadd.f32 %v497, %v817
      %v819 = vpop.f32.mrf.mxu0
      %v820 = vadd.f32 %v501, %v819
      %v821 = vpop.f32.mrf.mxu0
      %v822 = vadd.f32 %v497, %v821
      %v823 = vpop.f32.mrf.mxu0
      %v824 = vadd.f32 %v501, %v823
      %825 = vmatprep.mubr.bf16.mxu0 0
      %826 = vmatmul.mubr.bf16.gmra.mxu0 %v572
      %v827 = vpop.f32.mrf.mxu0
      %v828 = vadd.f32 %v497, %v827
      %v829 = vpop.f32.mrf.mxu0
      %v830 = vadd.f32 %v501, %v829
      %v831 = vpop.f32.mrf.mxu0
      %v832 = vadd.f32 %v497, %v831
      %v833 = vpop.f32.mrf.mxu0
      %v834 = vadd.f32 %v501, %v833
      %835 = vmatprep.mubr.bf16.mxu0 0
      %836 = vmatmul.mubr.bf16.gmra.mxu0 %v575
      %v837 = vpop.f32.mrf.mxu0
      %v838 = vadd.f32 %v497, %v837
      %v839 = vpop.f32.mrf.mxu0
      %v840 = vadd.f32 %v501, %v839
      %v841 = vpop.f32.mrf.mxu0
      %v842 = vadd.f32 %v497, %v841
      %v843 = vpop.f32.mrf.mxu0
      %v844 = vadd.f32 %v501, %v843
      %845 = vmatprep.mubr.bf16.mxu0 0
      %846 = vmatmul.mubr.bf16.gmra.mxu0 %v578
      %v847 = vpop.f32.mrf.mxu0
      %v848 = vadd.f32 %v497, %v847
      %v849 = vpop.f32.mrf.mxu0
      %v850 = vadd.f32 %v501, %v849
      %v851 = vpop.f32.mrf.mxu0
      %v852 = vadd.f32 %v497, %v851
      %v853 = vpop.f32.mrf.mxu0
      %v854 = vadd.f32 %v501, %v853
      %855 = vmatprep.mubr.bf16.mxu0 0
      %856 = vmatmul.mubr.bf16.gmra.mxu0 %v581
      %v857 = vpop.f32.mrf.mxu0
      %v858 = vadd.f32 %v497, %v857
      %v859 = vpop.f32.mrf.mxu0
      %v860 = vadd.f32 %v501, %v859
      %v861 = vpop.f32.mrf.mxu0
      %v862 = vadd.f32 %v497, %v861
      %v863 = vpop.f32.mrf.mxu0
      %v864 = vadd.f32 %v501, %v863
      %865 = vmatprep.mubr.bf16.mxu0 0
      %866 = vmatmul.mubr.bf16.gmra.mxu0 %v584
      %v867 = vpop.f32.mrf.mxu0
      %v868 = vadd.f32 %v497, %v867
      %v869 = vpop.f32.mrf.mxu0
      %v870 = vadd.f32 %v501, %v869
      %v871 = vpop.f32.mrf.mxu0
      %v872 = vadd.f32 %v497, %v871
      %v873 = vpop.f32.mrf.mxu0
      %v874 = vadd.f32 %v501, %v873
      %875 = vmatprep.mubr.bf16.mxu0 0
      %876 = vmatmul.mubr.bf16.gmra.mxu0 %v587
      %v877 = vpop.f32.mrf.mxu0
      %v878 = vadd.f32 %v497, %v877
      %v879 = vpop.f32.mrf.mxu0
      %v880 = vadd.f32 %v501, %v879
      %v881 = vpop.f32.mrf.mxu0
      %v882 = vadd.f32 %v497, %v881
      %v883 = vpop.f32.mrf.mxu0
      %v884 = vadd.f32 %v501, %v883
      %885 = vmatprep.mubr.bf16.mxu0 0
      %886 = vmatmul.mubr.bf16.gmra.mxu0 %v590
      %v887 = vpop.f32.mrf.mxu0
      %v888 = vadd.f32 %v497, %v887
      %v889 = vpop.f32.mrf.mxu0
      %v890 = vadd.f32 %v501, %v889
      %v891 = vpop.f32.mrf.mxu0
      %v892 = vadd.f32 %v497, %v891
      %v893 = vpop.f32.mrf.mxu0
      %v894 = vadd.f32 %v501, %v893
      %895 = vmatprep.mubr.bf16.mxu0 0
      %896 = vmatmul.mubr.bf16.gmra.mxu0 %v593
      %v897 = vpop.f32.mrf.mxu0
      %v898 = vadd.f32 %v497, %v897
      %v899 = vpop.f32.mrf.mxu0
      %v900 = vadd.f32 %v501, %v899
      %v901 = vpop.f32.mrf.mxu0
      %v902 = vadd.f32 %v497, %v901
      %v903 = vpop.f32.mrf.mxu0
      %v904 = vadd.f32 %v501, %v903
      %905 = vmatprep.mubr.bf16.mxu0 0
      %906 = vmatmul.mubr.bf16.gmra.mxu0 %v596
      %v907 = vpop.f32.mrf.mxu0
      %v908 = vadd.f32 %v497, %v907
      %v909 = vpop.f32.mrf.mxu0
      %v910 = vadd.f32 %v501, %v909
      %v911 = vpop.f32.mrf.mxu0
      %v912 = vadd.f32 %v497, %v911
      %v913 = vpop.f32.mrf.mxu0
      %v914 = vadd.f32 %v501, %v913
      %915 = vmatprep.mubr.bf16.mxu0 0
      %916 = vmatmul.mubr.bf16.gmra.mxu0 %v599
      %v917 = vpop.f32.mrf.mxu0
      %v918 = vadd.f32 %v497, %v917
      %v919 = vpop.f32.mrf.mxu0
      %v920 = vadd.f32 %v501, %v919
      %v921 = vpop.f32.mrf.mxu0
      %v922 = vadd.f32 %v497, %v921
      %v923 = vpop.f32.mrf.mxu0
      %v924 = vadd.f32 %v501, %v923
      %925 = vmatprep.mubr.bf16.mxu0 0
      %926 = vmatmul.mubr.bf16.gmra.mxu0 %v602
      %v927 = vpop.f32.mrf.mxu0
      %v928 = vadd.f32 %v497, %v927
      %v929 = vpop.f32.mrf.mxu0
      %v930 = vadd.f32 %v501, %v929
      %v931 = vpop.f32.mrf.mxu0
      %v932 = vadd.f32 %v497, %v931
      %v933 = vpop.f32.mrf.mxu0
      %v934 = vadd.f32 %v501, %v933
      %935 = vmatprep.mubr.bf16.mxu0 0
      %936 = vmatmul.mubr.bf16.gmra.mxu0 %v605
      %v937 = vpop.f32.mrf.mxu0
      %v938 = vadd.f32 %v497, %v937
      %v939 = vpop.f32.mrf.mxu0
      %v940 = vadd.f32 %v501, %v939
      %v941 = vpop.f32.mrf.mxu0
      %v942 = vadd.f32 %v497, %v941
      %v943 = vpop.f32.mrf.mxu0
      %v944 = vadd.f32 %v501, %v943
      %945 = vmatprep.mubr.bf16.mxu0 0
      %946 = vmatmul.mubr.bf16.gmra.mxu0 %v608
      %v947 = vpop.f32.mrf.mxu0
      %v948 = vadd.f32 %v497, %v947
      %v949 = vpop.f32.mrf.mxu0
      %v950 = vadd.f32 %v501, %v949
      %v951 = vpop.f32.mrf.mxu0
      %v952 = vadd.f32 %v497, %v951
      %v953 = vpop.f32.mrf.mxu0
      %v954 = vadd.f32 %v501, %v953
      %955 = vmatprep.mubr.bf16.mxu0 0
      %956 = vmatmul.mubr.bf16.gmra.mxu0 %v611
      %v957 = vpop.f32.mrf.mxu0
      %v958 = vadd.f32 %v497, %v957
      %v959 = vpop.f32.mrf.mxu0
      %v960 = vadd.f32 %v501, %v959
      %v961 = vpop.f32.mrf.mxu0
      %v962 = vadd.f32 %v497, %v961
      %v963 = vpop.f32.mrf.mxu0
      %v964 = vadd.f32 %v501, %v963
      %965 = vmatprep.mubr.bf16.mxu0 0
      %966 = vmatmul.mubr.bf16.gmra.mxu0 %v614
      %v967 = vpop.f32.mrf.mxu0
      %v968 = vadd.f32 %v497, %v967
      %v969 = vpop.f32.mrf.mxu0
      %v970 = vadd.f32 %v501, %v969
      %v971 = vpop.f32.mrf.mxu0
      %v972 = vadd.f32 %v497, %v971
      %v973 = vpop.f32.mrf.mxu0
      %v974 = vadd.f32 %v501, %v973
      %975 = vdwg.mxu0
      %v976 = vmax.f32 %v658, 0.0
      %v977 = vmax.f32 %v660, 0.0
      %v978 = vmax.f32 %v662, 0.0
      %v979 = vmax.f32 %v664, 0.0
      %v980 = vmax.f32 %v668, 0.0
      %v981 = vmax.f32 %v670, 0.0
      %v982 = vmax.f32 %v672, 0.0
      %v983 = vmax.f32 %v674, 0.0
      %v984 = vmax.f32 %v678, 0.0
      %v985 = vmax.f32 %v680, 0.0
      %v986 = vmax.f32 %v682, 0.0
      %v987 = vmax.f32 %v684, 0.0
      %v988 = vmax.f32 %v688, 0.0
      %v989 = vmax.f32 %v690, 0.0
      %v990 = vmax.f32 %v692, 0.0
      %v991 = vmax.f32 %v694, 0.0
      %v992 = vmax.f32 %v698, 0.0
      %v993 = vmax.f32 %v700, 0.0
      %v994 = vmax.f32 %v702, 0.0
      %v995 = vmax.f32 %v704, 0.0
      %v996 = vmax.f32 %v708, 0.0
      %v997 = vmax.f32 %v710, 0.0
      %v998 = vmax.f32 %v712, 0.0
      %v999 = vmax.f32 %v714, 0.0
      %v1000 = vmax.f32 %v718, 0.0
      %v1001 = vmax.f32 %v720, 0.0
      %v1002 = vmax.f32 %v722, 0.0
      %v1003 = vmax.f32 %v724, 0.0
      %v1004 = vmax.f32 %v728, 0.0
      %v1005 = vmax.f32 %v730, 0.0
      %v1006 = vmax.f32 %v732, 0.0
      %v1007 = vmax.f32 %v734, 0.0
      %v1008 = vmax.f32 %v738, 0.0
      %v1009 = vmax.f32 %v740, 0.0
      %v1010 = vmax.f32 %v742, 0.0
      %v1011 = vmax.f32 %v744, 0.0
      %v1012 = vmax.f32 %v748, 0.0
      %v1013 = vmax.f32 %v750, 0.0
      %v1014 = vmax.f32 %v752, 0.0
      %v1015 = vmax.f32 %v754, 0.0
      %v1016 = vmax.f32 %v758, 0.0
      %v1017 = vmax.f32 %v760, 0.0
      %v1018 = vmax.f32 %v762, 0.0
      %v1019 = vmax.f32 %v764, 0.0
      %v1020 = vmax.f32 %v768, 0.0
      %v1021 = vmax.f32 %v770, 0.0
      %v1022 = vmax.f32 %v772, 0.0
      %v1023 = vmax.f32 %v774, 0.0
      %v1024 = vmax.f32 %v778, 0.0
      %v1025 = vmax.f32 %v780, 0.0
      %v1026 = vmax.f32 %v782, 0.0
      %v1027 = vmax.f32 %v784, 0.0
      %v1028 = vmax.f32 %v788, 0.0
      %v1029 = vmax.f32 %v790, 0.0
      %v1030 = vmax.f32 %v792, 0.0
      %v1031 = vmax.f32 %v794, 0.0
      %v1032 = vmax.f32 %v798, 0.0
      %v1033 = vmax.f32 %v800, 0.0
      %v1034 = vmax.f32 %v802, 0.0
      %v1035 = vmax.f32 %v804, 0.0
      %v1036 = vmax.f32 %v808, 0.0
      %v1037 = vmax.f32 %v810, 0.0
      %v1038 = vmax.f32 %v812, 0.0
      %v1039 = vmax.f32 %v814, 0.0
      %v1040 = vmax.f32 %v818, 0.0
      %v1041 = vmax.f32 %v820, 0.0
      %v1042 = vmax.f32 %v822, 0.0
      %v1043 = vmax.f32 %v824, 0.0
      %v1044 = vmax.f32 %v828, 0.0
      %v1045 = vmax.f32 %v830, 0.0
      %v1046 = vmax.f32 %v832, 0.0
      %v1047 = vmax.f32 %v834, 0.0
      %v1048 = vmax.f32 %v838, 0.0
      %v1049 = vmax.f32 %v840, 0.0
      %v1050 = vmax.f32 %v842, 0.0
      %v1051 = vmax.f32 %v844, 0.0
      %v1052 = vmax.f32 %v848, 0.0
      %v1053 = vmax.f32 %v850, 0.0
      %v1054 = vmax.f32 %v852, 0.0
      %v1055 = vmax.f32 %v854, 0.0
      %v1056 = vmax.f32 %v858, 0.0
      %v1057 = vmax.f32 %v860, 0.0
      %v1058 = vmax.f32 %v862, 0.0
      %v1059 = vmax.f32 %v864, 0.0
      %v1060 = vmax.f32 %v868, 0.0
      %v1061 = vmax.f32 %v870, 0.0
      %v1062 = vmax.f32 %v872, 0.0
      %v1063 = vmax.f32 %v874, 0.0
      %v1064 = vmax.f32 %v878, 0.0
      %v1065 = vmax.f32 %v880, 0.0
      %v1066 = vmax.f32 %v882, 0.0
      %v1067 = vmax.f32 %v884, 0.0
      %v1068 = vmax.f32 %v888, 0.0
      %v1069 = vmax.f32 %v890, 0.0
      %v1070 = vmax.f32 %v892, 0.0
      %v1071 = vmax.f32 %v894, 0.0
      %v1072 = vmax.f32 %v898, 0.0
      %v1073 = vmax.f32 %v900, 0.0
      %v1074 = vmax.f32 %v902, 0.0
      %v1075 = vmax.f32 %v904, 0.0
      %v1076 = vmax.f32 %v908, 0.0
      %v1077 = vmax.f32 %v910, 0.0
      %v1078 = vmax.f32 %v912, 0.0
      %v1079 = vmax.f32 %v914, 0.0
      %v1080 = vmax.f32 %v918, 0.0
      %v1081 = vmax.f32 %v920, 0.0
      %v1082 = vmax.f32 %v922, 0.0
      %v1083 = vmax.f32 %v924, 0.0
      %v1084 = vmax.f32 %v928, 0.0
      %v1085 = vmax.f32 %v930, 0.0
      %v1086 = vmax.f32 %v932, 0.0
      %v1087 = vmax.f32 %v934, 0.0
      %v1088 = vmax.f32 %v938, 0.0
      %v1089 = vmax.f32 %v940, 0.0
      %v1090 = vmax.f32 %v942, 0.0
      %v1091 = vmax.f32 %v944, 0.0
      %v1092 = vmax.f32 %v948, 0.0
      %v1093 = vmax.f32 %v950, 0.0
      %v1094 = vmax.f32 %v952, 0.0
      %v1095 = vmax.f32 %v954, 0.0
      %v1096 = vmax.f32 %v958, 0.0
      %v1097 = vmax.f32 %v960, 0.0
      %v1098 = vmax.f32 %v962, 0.0
      %v1099 = vmax.f32 %v964, 0.0
      %v1100 = vmax.f32 %v968, 0.0
      %v1101 = vmax.f32 %v970, 0.0
      %v1102 = vmax.f32 %v972, 0.0
      %v1103 = vmax.f32 %v974, 0.0
      %v1104 = vpack.c.bf16 %v978, %v976
      %v1105 = vpack.c.bf16 %v979, %v977
      %v1106 = vpack.c.bf16 %v982, %v980
      %v1107 = vpack.c.bf16 %v983, %v981
      %v1108 = vpack.c.bf16 %v986, %v984
      %v1109 = vpack.c.bf16 %v987, %v985
      %v1110 = vpack.c.bf16 %v990, %v988
      %v1111 = vpack.c.bf16 %v991, %v989
      %v1112 = vpack.c.bf16 %v994, %v992
      %v1113 = vpack.c.bf16 %v995, %v993
      %v1114 = vpack.c.bf16 %v998, %v996
      %v1115 = vpack.c.bf16 %v999, %v997
      %v1116 = vpack.c.bf16 %v1002, %v1000
      %v1117 = vpack.c.bf16 %v1003, %v1001
      %v1118 = vpack.c.bf16 %v1006, %v1004
      %v1119 = vpack.c.bf16 %v1007, %v1005
      %v1120 = vpack.c.bf16 %v1010, %v1008
      %v1121 = vpack.c.bf16 %v1011, %v1009
      %v1122 = vpack.c.bf16 %v1014, %v1012
      %v1123 = vpack.c.bf16 %v1015, %v1013
      %v1124 = vpack.c.bf16 %v1018, %v1016
      %v1125 = vpack.c.bf16 %v1019, %v1017
      %v1126 = vpack.c.bf16 %v1022, %v1020
      %v1127 = vpack.c.bf16 %v1023, %v1021
      %v1128 = vpack.c.bf16 %v1026, %v1024
      %v1129 = vpack.c.bf16 %v1027, %v1025
      %v1130 = vpack.c.bf16 %v1030, %v1028
      %v1131 = vpack.c.bf16 %v1031, %v1029
      %v1132 = vpack.c.bf16 %v1034, %v1032
      %v1133 = vpack.c.bf16 %v1035, %v1033
      %v1134 = vpack.c.bf16 %v1038, %v1036
      %v1135 = vpack.c.bf16 %v1039, %v1037
      %v1136 = vpack.c.bf16 %v1042, %v1040
      %v1137 = vpack.c.bf16 %v1043, %v1041
      %v1138 = vpack.c.bf16 %v1046, %v1044
      %v1139 = vpack.c.bf16 %v1047, %v1045
      %v1140 = vpack.c.bf16 %v1050, %v1048
      %v1141 = vpack.c.bf16 %v1051, %v1049
      %v1142 = vpack.c.bf16 %v1054, %v1052
      %v1143 = vpack.c.bf16 %v1055, %v1053
      %v1144 = vpack.c.bf16 %v1058, %v1056
      %v1145 = vpack.c.bf16 %v1059, %v1057
      %v1146 = vpack.c.bf16 %v1062, %v1060
      %v1147 = vpack.c.bf16 %v1063, %v1061
      %v1148 = vpack.c.bf16 %v1066, %v1064
      %v1149 = vpack.c.bf16 %v1067, %v1065
      %v1150 = vpack.c.bf16 %v1070, %v1068
      %v1151 = vpack.c.bf16 %v1071, %v1069
      %v1152 = vpack.c.bf16 %v1074, %v1072
      %v1153 = vpack.c.bf16 %v1075, %v1073
      %v1154 = vpack.c.bf16 %v1078, %v1076
      %v1155 = vpack.c.bf16 %v1079, %v1077
      %v1156 = vpack.c.bf16 %v1082, %v1080
      %v1157 = vpack.c.bf16 %v1083, %v1081
      %v1158 = vpack.c.bf16 %v1086, %v1084
      %v1159 = vpack.c.bf16 %v1087, %v1085
      %v1160 = vpack.c.bf16 %v1090, %v1088
      %v1161 = vpack.c.bf16 %v1091, %v1089
      %v1162 = vpack.c.bf16 %v1094, %v1092
      %v1163 = vpack.c.bf16 %v1095, %v1093
      %v1164 = vpack.c.bf16 %v1098, %v1096
      %v1165 = vpack.c.bf16 %v1099, %v1097
      %v1166 = vpack.c.bf16 %v1102, %v1100
      %v1167 = vpack.c.bf16 %v1103, %v1101
      %v1168 = vld [vmem:[%s3] sm:$0xff]
      %v1169 = vld [vmem:[%s3 + $0x8] sm:$0xff]
      %v1170 = vld [vmem:[%s3 + $0x10] sm:$0xff]
      %v1171 = vld [vmem:[%s3 + $0x18] sm:$0xff]
      %v1172 = vld [vmem:[%s3 + $0x20] sm:$0xff]
      %v1173 = vld [vmem:[%s3 + $0x28] sm:$0xff]
      %v1174 = vld [vmem:[%s3 + $0x30] sm:$0xff]
      %v1175 = vld [vmem:[%s3 + $0x38] sm:$0xff]
      %v1176 = vld [vmem:[%s3 + $0x40] sm:$0xff]
      %v1177 = vld [vmem:[%s3 + $0x48] sm:$0xff]
      %v1178 = vld [vmem:[%s3 + $0x50] sm:$0xff]
      %v1179 = vld [vmem:[%s3 + $0x58] sm:$0xff]
      %v1180 = vld [vmem:[%s3 + $0x60] sm:$0xff]
      %v1181 = vld [vmem:[%s3 + $0x68] sm:$0xff]
      %v1182 = vld [vmem:[%s3 + $0x70] sm:$0xff]
      %v1183 = vld [vmem:[%s3 + $0x78] sm:$0xff]
      %v1184 = vld [vmem:[%s3 + $0x80] sm:$0xff]
      %v1185 = vld [vmem:[%s3 + $0x88] sm:$0xff]
      %v1186 = vld [vmem:[%s3 + $0x90] sm:$0xff]
      %v1187 = vld [vmem:[%s3 + $0x98] sm:$0xff]
      %v1188 = vld [vmem:[%s3 + $0xa0] sm:$0xff]
      %v1189 = vld [vmem:[%s3 + $0xa8] sm:$0xff]
      %v1190 = vld [vmem:[%s3 + $0xb0] sm:$0xff]
      %v1191 = vld [vmem:[%s3 + $0xb8] sm:$0xff]
      %v1192 = vld [vmem:[%s3 + $0xc0] sm:$0xff]
      %v1193 = vld [vmem:[%s3 + $0xc8] sm:$0xff]
      %v1194 = vld [vmem:[%s3 + $0xd0] sm:$0xff]
      %v1195 = vld [vmem:[%s3 + $0xd8] sm:$0xff]
      %v1196 = vld [vmem:[%s3 + $0xe0] sm:$0xff]
      %v1197 = vld [vmem:[%s3 + $0xe8] sm:$0xff]
      %v1198 = vld [vmem:[%s3 + $0xf0] sm:$0xff]
      %v1199 = vld [vmem:[%s3 + $0xf8] sm:$0xff]
      %v1200 = vld [vmem:[%s4] sm:$0x3]
      %v1202 = vlaneseq
      %v1203 = vshrl.u32 %v1202, 7
      %v1204 = vsub.s32 0, %v1203
      %v1205 = vrot.slane %v1200, %v1204
      %v1206 = vlaneseq
      %v1207 = vshrl.u32 %v1206, 7
      %v1208 = vsub.s32 1, %v1207
      %v1209 = vrot.slane %v1200, %v1208
      %v1244 = vunpack.c.l.b16 %v1168
      %v1245 = vunpack.c.h.b16 %v1168
      %v1246 = vunpack.c.l.b16 %v1169
      %v1247 = vunpack.c.h.b16 %v1169
      %v1248 = vunpack.c.l.b16 %v1170
      %v1249 = vunpack.c.h.b16 %v1170
      %v1250 = vunpack.c.l.b16 %v1171
      %v1251 = vunpack.c.h.b16 %v1171
      %v1252 = vunpack.c.l.b16 %v1172
      %v1253 = vunpack.c.h.b16 %v1172
      %v1254 = vunpack.c.l.b16 %v1173
      %v1255 = vunpack.c.h.b16 %v1173
      %v1256 = vunpack.c.l.b16 %v1174
      %v1257 = vunpack.c.h.b16 %v1174
      %v1258 = vunpack.c.l.b16 %v1175
      %v1259 = vunpack.c.h.b16 %v1175
      %v1260 = vunpack.c.l.b16 %v1176
      %v1261 = vunpack.c.h.b16 %v1176
      %v1262 = vunpack.c.l.b16 %v1177
      %v1263 = vunpack.c.h.b16 %v1177
      %v1264 = vunpack.c.l.b16 %v1178
      %v1265 = vunpack.c.h.b16 %v1178
      %v1266 = vunpack.c.l.b16 %v1179
      %v1267 = vunpack.c.h.b16 %v1179
      %v1268 = vunpack.c.l.b16 %v1180
      %v1269 = vunpack.c.h.b16 %v1180
      %v1270 = vunpack.c.l.b16 %v1181
      %v1271 = vunpack.c.h.b16 %v1181
      %v1272 = vunpack.c.l.b16 %v1182
      %v1273 = vunpack.c.h.b16 %v1182
      %v1274 = vunpack.c.l.b16 %v1183
      %v1275 = vunpack.c.h.b16 %v1183
      %v1276 = vunpack.c.l.b16 %v1184
      %v1277 = vunpack.c.h.b16 %v1184
      %v1278 = vunpack.c.l.b16 %v1185
      %v1279 = vunpack.c.h.b16 %v1185
      %v1280 = vunpack.c.l.b16 %v1186
      %v1281 = vunpack.c.h.b16 %v1186
      %v1282 = vunpack.c.l.b16 %v1187
      %v1283 = vunpack.c.h.b16 %v1187
      %v1284 = vunpack.c.l.b16 %v1188
      %v1285 = vunpack.c.h.b16 %v1188
      %v1286 = vunpack.c.l.b16 %v1189
      %v1287 = vunpack.c.h.b16 %v1189
      %v1288 = vunpack.c.l.b16 %v1190
      %v1289 = vunpack.c.h.b16 %v1190
      %v1290 = vunpack.c.l.b16 %v1191
      %v1291 = vunpack.c.h.b16 %v1191
      %v1292 = vunpack.c.l.b16 %v1192
      %v1293 = vunpack.c.h.b16 %v1192
      %v1294 = vunpack.c.l.b16 %v1193
      %v1295 = vunpack.c.h.b16 %v1193
      %v1296 = vunpack.c.l.b16 %v1194
      %v1297 = vunpack.c.h.b16 %v1194
      %v1298 = vunpack.c.l.b16 %v1195
      %v1299 = vunpack.c.h.b16 %v1195
      %v1300 = vunpack.c.l.b16 %v1196
      %v1301 = vunpack.c.h.b16 %v1196
      %v1302 = vunpack.c.l.b16 %v1197
      %v1303 = vunpack.c.h.b16 %v1197
      %v1304 = vunpack.c.l.b16 %v1198
      %v1305 = vunpack.c.h.b16 %v1198
      %v1306 = vunpack.c.l.b16 %v1199
      %v1307 = vunpack.c.h.b16 %v1199
      %v1308 = vpack.c.b16 %v1246, %v1244
      %v1309 = vpack.c.b16 %v1247, %v1245
      %v1310 = vpack.c.b16 %v1250, %v1248
      %v1311 = vpack.c.b16 %v1251, %v1249
      %v1312 = vpack.c.b16 %v1254, %v1252
      %v1313 = vpack.c.b16 %v1255, %v1253
      %v1314 = vpack.c.b16 %v1258, %v1256
      %v1315 = vpack.c.b16 %v1259, %v1257
      %v1316 = vpack.c.b16 %v1262, %v1260
      %v1317 = vpack.c.b16 %v1263, %v1261
      %v1318 = vpack.c.b16 %v1266, %v1264
      %v1319 = vpack.c.b16 %v1267, %v1265
      %v1320 = vpack.c.b16 %v1270, %v1268
      %v1321 = vpack.c.b16 %v1271, %v1269
      %v1322 = vpack.c.b16 %v1274, %v1272
      %v1323 = vpack.c.b16 %v1275, %v1273
      %v1324 = vpack.c.b16 %v1278, %v1276
      %v1325 = vpack.c.b16 %v1279, %v1277
      %v1326 = vpack.c.b16 %v1282, %v1280
      %v1327 = vpack.c.b16 %v1283, %v1281
      %v1328 = vpack.c.b16 %v1286, %v1284
      %v1329 = vpack.c.b16 %v1287, %v1285
      %v1330 = vpack.c.b16 %v1290, %v1288
      %v1331 = vpack.c.b16 %v1291, %v1289
      %v1332 = vpack.c.b16 %v1294, %v1292
      %v1333 = vpack.c.b16 %v1295, %v1293
      %v1334 = vpack.c.b16 %v1298, %v1296
      %v1335 = vpack.c.b16 %v1299, %v1297
      %v1336 = vpack.c.b16 %v1302, %v1300
      %v1337 = vpack.c.b16 %v1303, %v1301
      %v1338 = vpack.c.b16 %v1306, %v1304
      %v1339 = vpack.c.b16 %v1307, %v1305
      %1372 = vmatprep.subr.bf16.mxu0 %v1323
      %1373 = vmatpush1.bf16.msra.mxu0 %v1322
      %1374 = vmatprep.subr.bf16.mxu0 %v1321
      %1375 = vmatpush1.bf16.msra.mxu0 %v1320
      %1376 = vmatprep.subr.bf16.mxu0 %v1319
      %1377 = vmatpush1.bf16.msra.mxu0 %v1318
      %1378 = vmatprep.subr.bf16.mxu0 %v1317
      %1379 = vmatpush1.bf16.msra.mxu0 %v1316
      %1380 = vmatprep.subr.bf16.mxu0 %v1315
      %1381 = vmatpush1.bf16.msra.mxu0 %v1314
      %1382 = vmatprep.subr.bf16.mxu0 %v1313
      %1383 = vmatpush1.bf16.msra.mxu0 %v1312
      %1384 = vmatprep.subr.bf16.mxu0 %v1311
      %1385 = vmatpush1.bf16.msra.mxu0 %v1310
      %1386 = vmatprep.subr.bf16.mxu0 %v1309
      %1387 = vmatpush1.bf16.msra.mxu0 %v1308
      %1388 = vmatprep.subr.bf16.mxu0 %v1339
      %1389 = vmatpush2.bf16.msra.mxu0 %v1338
      %1390 = vmatprep.subr.bf16.mxu0 %v1337
      %1391 = vmatpush2.bf16.msra.mxu0 %v1336
      %1392 = vmatprep.subr.bf16.mxu0 %v1335
      %1393 = vmatpush2.bf16.msra.mxu0 %v1334
      %1394 = vmatprep.subr.bf16.mxu0 %v1333
      %1395 = vmatpush2.bf16.msra.mxu0 %v1332
      %1396 = vmatprep.subr.bf16.mxu0 %v1331
      %1397 = vmatpush2.bf16.msra.mxu0 %v1330
      %1398 = vmatprep.subr.bf16.mxu0 %v1329
      %1399 = vmatpush2.bf16.msra.mxu0 %v1328
      %1400 = vmatprep.subr.bf16.mxu0 %v1327
      %1401 = vmatpush2.bf16.msra.mxu0 %v1326
      %1402 = vmatprep.subr.bf16.mxu0 %v1325
      %1403 = vmatpush2.bf16.msra.mxu0 %v1324
      %1404 = vmatprep.mubr.bf16.mxu0 %v1105
      %1405 = vmatmul.mubr.bf16.gmra.mxu0 %v1104
      %v1406 = vpop.f32.mrf.mxu0
      %v1407 = vadd.f32 %v1205, %v1406
      %v1408 = vpop.f32.mrf.mxu0
      %v1409 = vadd.f32 %v1209, %v1408
      %v1410 = vpop.f32.mrf.mxu0
      %v1411 = vadd.f32 %v1205, %v1410
      %v1412 = vpop.f32.mrf.mxu0
      %v1413 = vadd.f32 %v1209, %v1412
      %1414 = vmatprep.mubr.bf16.mxu0 %v1107
      %1415 = vmatmul.mubr.bf16.gmra.mxu0 %v1106
      %v1416 = vpop.f32.mrf.mxu0
      %v1417 = vadd.f32 %v1205, %v1416
      %v1418 = vpop.f32.mrf.mxu0
      %v1419 = vadd.f32 %v1209, %v1418
      %v1420 = vpop.f32.mrf.mxu0
      %v1421 = vadd.f32 %v1205, %v1420
      %v1422 = vpop.f32.mrf.mxu0
      %v1423 = vadd.f32 %v1209, %v1422
      %1424 = vmatprep.mubr.bf16.mxu0 %v1109
      %1425 = vmatmul.mubr.bf16.gmra.mxu0 %v1108
      %v1426 = vpop.f32.mrf.mxu0
      %v1427 = vadd.f32 %v1205, %v1426
      %v1428 = vpop.f32.mrf.mxu0
      %v1429 = vadd.f32 %v1209, %v1428
      %v1430 = vpop.f32.mrf.mxu0
      %v1431 = vadd.f32 %v1205, %v1430
      %v1432 = vpop.f32.mrf.mxu0
      %v1433 = vadd.f32 %v1209, %v1432
      %1434 = vmatprep.mubr.bf16.mxu0 %v1111
      %1435 = vmatmul.mubr.bf16.gmra.mxu0 %v1110
      %v1436 = vpop.f32.mrf.mxu0
      %v1437 = vadd.f32 %v1205, %v1436
      %v1438 = vpop.f32.mrf.mxu0
      %v1439 = vadd.f32 %v1209, %v1438
      %v1440 = vpop.f32.mrf.mxu0
      %v1441 = vadd.f32 %v1205, %v1440
      %v1442 = vpop.f32.mrf.mxu0
      %v1443 = vadd.f32 %v1209, %v1442
      %1444 = vmatprep.mubr.bf16.mxu0 %v1113
      %1445 = vmatmul.mubr.bf16.gmra.mxu0 %v1112
      %v1446 = vpop.f32.mrf.mxu0
      %v1447 = vadd.f32 %v1205, %v1446
      %v1448 = vpop.f32.mrf.mxu0
      %v1449 = vadd.f32 %v1209, %v1448
      %v1450 = vpop.f32.mrf.mxu0
      %v1451 = vadd.f32 %v1205, %v1450
      %v1452 = vpop.f32.mrf.mxu0
      %v1453 = vadd.f32 %v1209, %v1452
      %1454 = vmatprep.mubr.bf16.mxu0 %v1115
      %1455 = vmatmul.mubr.bf16.gmra.mxu0 %v1114
      %v1456 = vpop.f32.mrf.mxu0
      %v1457 = vadd.f32 %v1205, %v1456
      %v1458 = vpop.f32.mrf.mxu0
      %v1459 = vadd.f32 %v1209, %v1458
      %v1460 = vpop.f32.mrf.mxu0
      %v1461 = vadd.f32 %v1205, %v1460
      %v1462 = vpop.f32.mrf.mxu0
      %v1463 = vadd.f32 %v1209, %v1462
      %1464 = vmatprep.mubr.bf16.mxu0 %v1117
      %1465 = vmatmul.mubr.bf16.gmra.mxu0 %v1116
      %v1466 = vpop.f32.mrf.mxu0
      %v1467 = vadd.f32 %v1205, %v1466
      %v1468 = vpop.f32.mrf.mxu0
      %v1469 = vadd.f32 %v1209, %v1468
      %v1470 = vpop.f32.mrf.mxu0
      %v1471 = vadd.f32 %v1205, %v1470
      %v1472 = vpop.f32.mrf.mxu0
      %v1473 = vadd.f32 %v1209, %v1472
      %1474 = vmatprep.mubr.bf16.mxu0 %v1119
      %1475 = vmatmul.mubr.bf16.gmra.mxu0 %v1118
      %v1476 = vpop.f32.mrf.mxu0
      %v1477 = vadd.f32 %v1205, %v1476
      %v1478 = vpop.f32.mrf.mxu0
      %v1479 = vadd.f32 %v1209, %v1478
      %v1480 = vpop.f32.mrf.mxu0
      %v1481 = vadd.f32 %v1205, %v1480
      %v1482 = vpop.f32.mrf.mxu0
      %v1483 = vadd.f32 %v1209, %v1482
      %1484 = vmatprep.mubr.bf16.mxu0 %v1121
      %1485 = vmatmul.mubr.bf16.gmra.mxu0 %v1120
      %v1486 = vpop.f32.mrf.mxu0
      %v1487 = vadd.f32 %v1205, %v1486
      %v1488 = vpop.f32.mrf.mxu0
      %v1489 = vadd.f32 %v1209, %v1488
      %v1490 = vpop.f32.mrf.mxu0
      %v1491 = vadd.f32 %v1205, %v1490
      %v1492 = vpop.f32.mrf.mxu0
      %v1493 = vadd.f32 %v1209, %v1492
      %1494 = vmatprep.mubr.bf16.mxu0 %v1123
      %1495 = vmatmul.mubr.bf16.gmra.mxu0 %v1122
      %v1496 = vpop.f32.mrf.mxu0
      %v1497 = vadd.f32 %v1205, %v1496
      %v1498 = vpop.f32.mrf.mxu0
      %v1499 = vadd.f32 %v1209, %v1498
      %v1500 = vpop.f32.mrf.mxu0
      %v1501 = vadd.f32 %v1205, %v1500
      %v1502 = vpop.f32.mrf.mxu0
      %v1503 = vadd.f32 %v1209, %v1502
      %1504 = vmatprep.mubr.bf16.mxu0 %v1125
      %1505 = vmatmul.mubr.bf16.gmra.mxu0 %v1124
      %v1506 = vpop.f32.mrf.mxu0
      %v1507 = vadd.f32 %v1205, %v1506
      %v1508 = vpop.f32.mrf.mxu0
      %v1509 = vadd.f32 %v1209, %v1508
      %v1510 = vpop.f32.mrf.mxu0
      %v1511 = vadd.f32 %v1205, %v1510
      %v1512 = vpop.f32.mrf.mxu0
      %v1513 = vadd.f32 %v1209, %v1512
      %1514 = vmatprep.mubr.bf16.mxu0 %v1127
      %1515 = vmatmul.mubr.bf16.gmra.mxu0 %v1126
      %v1516 = vpop.f32.mrf.mxu0
      %v1517 = vadd.f32 %v1205, %v1516
      %v1518 = vpop.f32.mrf.mxu0
      %v1519 = vadd.f32 %v1209, %v1518
      %v1520 = vpop.f32.mrf.mxu0
      %v1521 = vadd.f32 %v1205, %v1520
      %v1522 = vpop.f32.mrf.mxu0
      %v1523 = vadd.f32 %v1209, %v1522
      %1524 = vmatprep.mubr.bf16.mxu0 %v1129
      %1525 = vmatmul.mubr.bf16.gmra.mxu0 %v1128
      %v1526 = vpop.f32.mrf.mxu0
      %v1527 = vadd.f32 %v1205, %v1526
      %v1528 = vpop.f32.mrf.mxu0
      %v1529 = vadd.f32 %v1209, %v1528
      %v1530 = vpop.f32.mrf.mxu0
      %v1531 = vadd.f32 %v1205, %v1530
      %v1532 = vpop.f32.mrf.mxu0
      %v1533 = vadd.f32 %v1209, %v1532
      %1534 = vmatprep.mubr.bf16.mxu0 %v1131
      %1535 = vmatmul.mubr.bf16.gmra.mxu0 %v1130
      %v1536 = vpop.f32.mrf.mxu0
      %v1537 = vadd.f32 %v1205, %v1536
      %v1538 = vpop.f32.mrf.mxu0
      %v1539 = vadd.f32 %v1209, %v1538
      %v1540 = vpop.f32.mrf.mxu0
      %v1541 = vadd.f32 %v1205, %v1540
      %v1542 = vpop.f32.mrf.mxu0
      %v1543 = vadd.f32 %v1209, %v1542
      %1544 = vmatprep.mubr.bf16.mxu0 %v1133
      %1545 = vmatmul.mubr.bf16.gmra.mxu0 %v1132
      %v1546 = vpop.f32.mrf.mxu0
      %v1547 = vadd.f32 %v1205, %v1546
      %v1548 = vpop.f32.mrf.mxu0
      %v1549 = vadd.f32 %v1209, %v1548
      %v1550 = vpop.f32.mrf.mxu0
      %v1551 = vadd.f32 %v1205, %v1550
      %v1552 = vpop.f32.mrf.mxu0
      %v1553 = vadd.f32 %v1209, %v1552
      %1554 = vmatprep.mubr.bf16.mxu0 %v1135
      %1555 = vmatmul.mubr.bf16.gmra.mxu0 %v1134
      %v1556 = vpop.f32.mrf.mxu0
      %v1557 = vadd.f32 %v1205, %v1556
      %v1558 = vpop.f32.mrf.mxu0
      %v1559 = vadd.f32 %v1209, %v1558
      %v1560 = vpop.f32.mrf.mxu0
      %v1561 = vadd.f32 %v1205, %v1560
      %v1562 = vpop.f32.mrf.mxu0
      %v1563 = vadd.f32 %v1209, %v1562
      %1564 = vmatprep.mubr.bf16.mxu0 %v1137
      %1565 = vmatmul.mubr.bf16.gmra.mxu0 %v1136
      %v1566 = vpop.f32.mrf.mxu0
      %v1567 = vadd.f32 %v1205, %v1566
      %v1568 = vpop.f32.mrf.mxu0
      %v1569 = vadd.f32 %v1209, %v1568
      %v1570 = vpop.f32.mrf.mxu0
      %v1571 = vadd.f32 %v1205, %v1570
      %v1572 = vpop.f32.mrf.mxu0
      %v1573 = vadd.f32 %v1209, %v1572
      %1574 = vmatprep.mubr.bf16.mxu0 %v1139
      %1575 = vmatmul.mubr.bf16.gmra.mxu0 %v1138
      %v1576 = vpop.f32.mrf.mxu0
      %v1577 = vadd.f32 %v1205, %v1576
      %v1578 = vpop.f32.mrf.mxu0
      %v1579 = vadd.f32 %v1209, %v1578
      %v1580 = vpop.f32.mrf.mxu0
      %v1581 = vadd.f32 %v1205, %v1580
      %v1582 = vpop.f32.mrf.mxu0
      %v1583 = vadd.f32 %v1209, %v1582
      %1584 = vmatprep.mubr.bf16.mxu0 %v1141
      %1585 = vmatmul.mubr.bf16.gmra.mxu0 %v1140
      %v1586 = vpop.f32.mrf.mxu0
      %v1587 = vadd.f32 %v1205, %v1586
      %v1588 = vpop.f32.mrf.mxu0
      %v1589 = vadd.f32 %v1209, %v1588
      %v1590 = vpop.f32.mrf.mxu0
      %v1591 = vadd.f32 %v1205, %v1590
      %v1592 = vpop.f32.mrf.mxu0
      %v1593 = vadd.f32 %v1209, %v1592
      %1594 = vmatprep.mubr.bf16.mxu0 %v1143
      %1595 = vmatmul.mubr.bf16.gmra.mxu0 %v1142
      %v1596 = vpop.f32.mrf.mxu0
      %v1597 = vadd.f32 %v1205, %v1596
      %v1598 = vpop.f32.mrf.mxu0
      %v1599 = vadd.f32 %v1209, %v1598
      %v1600 = vpop.f32.mrf.mxu0
      %v1601 = vadd.f32 %v1205, %v1600
      %v1602 = vpop.f32.mrf.mxu0
      %v1603 = vadd.f32 %v1209, %v1602
      %1604 = vmatprep.mubr.bf16.mxu0 %v1145
      %1605 = vmatmul.mubr.bf16.gmra.mxu0 %v1144
      %v1606 = vpop.f32.mrf.mxu0
      %v1607 = vadd.f32 %v1205, %v1606
      %v1608 = vpop.f32.mrf.mxu0
      %v1609 = vadd.f32 %v1209, %v1608
      %v1610 = vpop.f32.mrf.mxu0
      %v1611 = vadd.f32 %v1205, %v1610
      %v1612 = vpop.f32.mrf.mxu0
      %v1613 = vadd.f32 %v1209, %v1612
      %1614 = vmatprep.mubr.bf16.mxu0 %v1147
      %1615 = vmatmul.mubr.bf16.gmra.mxu0 %v1146
      %v1616 = vpop.f32.mrf.mxu0
      %v1617 = vadd.f32 %v1205, %v1616
      %v1618 = vpop.f32.mrf.mxu0
      %v1619 = vadd.f32 %v1209, %v1618
      %v1620 = vpop.f32.mrf.mxu0
      %v1621 = vadd.f32 %v1205, %v1620
      %v1622 = vpop.f32.mrf.mxu0
      %v1623 = vadd.f32 %v1209, %v1622
      %1624 = vmatprep.mubr.bf16.mxu0 %v1149
      %1625 = vmatmul.mubr.bf16.gmra.mxu0 %v1148
      %v1626 = vpop.f32.mrf.mxu0
      %v1627 = vadd.f32 %v1205, %v1626
      %v1628 = vpop.f32.mrf.mxu0
      %v1629 = vadd.f32 %v1209, %v1628
      %v1630 = vpop.f32.mrf.mxu0
      %v1631 = vadd.f32 %v1205, %v1630
      %v1632 = vpop.f32.mrf.mxu0
      %v1633 = vadd.f32 %v1209, %v1632
      %1634 = vmatprep.mubr.bf16.mxu0 %v1151
      %1635 = vmatmul.mubr.bf16.gmra.mxu0 %v1150
      %v1636 = vpop.f32.mrf.mxu0
      %v1637 = vadd.f32 %v1205, %v1636
      %v1638 = vpop.f32.mrf.mxu0
      %v1639 = vadd.f32 %v1209, %v1638
      %v1640 = vpop.f32.mrf.mxu0
      %v1641 = vadd.f32 %v1205, %v1640
      %v1642 = vpop.f32.mrf.mxu0
      %v1643 = vadd.f32 %v1209, %v1642
      %1644 = vmatprep.mubr.bf16.mxu0 %v1153
      %1645 = vmatmul.mubr.bf16.gmra.mxu0 %v1152
      %v1646 = vpop.f32.mrf.mxu0
      %v1647 = vadd.f32 %v1205, %v1646
      %v1648 = vpop.f32.mrf.mxu0
      %v1649 = vadd.f32 %v1209, %v1648
      %v1650 = vpop.f32.mrf.mxu0
      %v1651 = vadd.f32 %v1205, %v1650
      %v1652 = vpop.f32.mrf.mxu0
      %v1653 = vadd.f32 %v1209, %v1652
      %1654 = vmatprep.mubr.bf16.mxu0 %v1155
      %1655 = vmatmul.mubr.bf16.gmra.mxu0 %v1154
      %v1656 = vpop.f32.mrf.mxu0
      %v1657 = vadd.f32 %v1205, %v1656
      %v1658 = vpop.f32.mrf.mxu0
      %v1659 = vadd.f32 %v1209, %v1658
      %v1660 = vpop.f32.mrf.mxu0
      %v1661 = vadd.f32 %v1205, %v1660
      %v1662 = vpop.f32.mrf.mxu0
      %v1663 = vadd.f32 %v1209, %v1662
      %1664 = vmatprep.mubr.bf16.mxu0 %v1157
      %1665 = vmatmul.mubr.bf16.gmra.mxu0 %v1156
      %v1666 = vpop.f32.mrf.mxu0
      %v1667 = vadd.f32 %v1205, %v1666
      %v1668 = vpop.f32.mrf.mxu0
      %v1669 = vadd.f32 %v1209, %v1668
      %v1670 = vpop.f32.mrf.mxu0
      %v1671 = vadd.f32 %v1205, %v1670
      %v1672 = vpop.f32.mrf.mxu0
      %v1673 = vadd.f32 %v1209, %v1672
      %1674 = vmatprep.mubr.bf16.mxu0 %v1159
      %1675 = vmatmul.mubr.bf16.gmra.mxu0 %v1158
      %v1676 = vpop.f32.mrf.mxu0
      %v1677 = vadd.f32 %v1205, %v1676
      %v1678 = vpop.f32.mrf.mxu0
      %v1679 = vadd.f32 %v1209, %v1678
      %v1680 = vpop.f32.mrf.mxu0
      %v1681 = vadd.f32 %v1205, %v1680
      %v1682 = vpop.f32.mrf.mxu0
      %v1683 = vadd.f32 %v1209, %v1682
      %1684 = vmatprep.mubr.bf16.mxu0 %v1161
      %1685 = vmatmul.mubr.bf16.gmra.mxu0 %v1160
      %v1686 = vpop.f32.mrf.mxu0
      %v1687 = vadd.f32 %v1205, %v1686
      %v1688 = vpop.f32.mrf.mxu0
      %v1689 = vadd.f32 %v1209, %v1688
      %v1690 = vpop.f32.mrf.mxu0
      %v1691 = vadd.f32 %v1205, %v1690
      %v1692 = vpop.f32.mrf.mxu0
      %v1693 = vadd.f32 %v1209, %v1692
      %1694 = vmatprep.mubr.bf16.mxu0 %v1163
      %1695 = vmatmul.mubr.bf16.gmra.mxu0 %v1162
      %v1696 = vpop.f32.mrf.mxu0
      %v1697 = vadd.f32 %v1205, %v1696
      %v1698 = vpop.f32.mrf.mxu0
      %v1699 = vadd.f32 %v1209, %v1698
      %v1700 = vpop.f32.mrf.mxu0
      %v1701 = vadd.f32 %v1205, %v1700
      %v1702 = vpop.f32.mrf.mxu0
      %v1703 = vadd.f32 %v1209, %v1702
      %1704 = vmatprep.mubr.bf16.mxu0 %v1165
      %1705 = vmatmul.mubr.bf16.gmra.mxu0 %v1164
      %v1706 = vpop.f32.mrf.mxu0
      %v1707 = vadd.f32 %v1205, %v1706
      %v1708 = vpop.f32.mrf.mxu0
      %v1709 = vadd.f32 %v1209, %v1708
      %v1710 = vpop.f32.mrf.mxu0
      %v1711 = vadd.f32 %v1205, %v1710
      %v1712 = vpop.f32.mrf.mxu0
      %v1713 = vadd.f32 %v1209, %v1712
      %1714 = vmatprep.mubr.bf16.mxu0 %v1167
      %1715 = vmatmul.mubr.bf16.gmra.mxu0 %v1166
      %v1716 = vpop.f32.mrf.mxu0
      %v1717 = vadd.f32 %v1205, %v1716
      %v1718 = vpop.f32.mrf.mxu0
      %v1719 = vadd.f32 %v1209, %v1718
      %v1720 = vpop.f32.mrf.mxu0
      %v1721 = vadd.f32 %v1205, %v1720
      %v1722 = vpop.f32.mrf.mxu0
      %v1723 = vadd.f32 %v1209, %v1722
      %1724 = vdwg.mxu0
      %v1725 = vmax.f32 %v1407, 0.0
      %v1726 = vmax.f32 %v1409, 0.0
      %v1727 = vmax.f32 %v1411, 0.0
      %v1728 = vmax.f32 %v1413, 0.0
      %v1729 = vmax.f32 %v1417, 0.0
      %v1730 = vmax.f32 %v1419, 0.0
      %v1731 = vmax.f32 %v1421, 0.0
      %v1732 = vmax.f32 %v1423, 0.0
      %v1733 = vmax.f32 %v1427, 0.0
      %v1734 = vmax.f32 %v1429, 0.0
      %v1735 = vmax.f32 %v1431, 0.0
      %v1736 = vmax.f32 %v1433, 0.0
      %v1737 = vmax.f32 %v1437, 0.0
      %v1738 = vmax.f32 %v1439, 0.0
      %v1739 = vmax.f32 %v1441, 0.0
      %v1740 = vmax.f32 %v1443, 0.0
      %v1741 = vmax.f32 %v1447, 0.0
      %v1742 = vmax.f32 %v1449, 0.0
      %v1743 = vmax.f32 %v1451, 0.0
      %v1744 = vmax.f32 %v1453, 0.0
      %v1745 = vmax.f32 %v1457, 0.0
      %v1746 = vmax.f32 %v1459, 0.0
      %v1747 = vmax.f32 %v1461, 0.0
      %v1748 = vmax.f32 %v1463, 0.0
      %v1749 = vmax.f32 %v1467, 0.0
      %v1750 = vmax.f32 %v1469, 0.0
      %v1751 = vmax.f32 %v1471, 0.0
      %v1752 = vmax.f32 %v1473, 0.0
      %v1753 = vmax.f32 %v1477, 0.0
      %v1754 = vmax.f32 %v1479, 0.0
      %v1755 = vmax.f32 %v1481, 0.0
      %v1756 = vmax.f32 %v1483, 0.0
      %v1757 = vmax.f32 %v1487, 0.0
      %v1758 = vmax.f32 %v1489, 0.0
      %v1759 = vmax.f32 %v1491, 0.0
      %v1760 = vmax.f32 %v1493, 0.0
      %v1761 = vmax.f32 %v1497, 0.0
      %v1762 = vmax.f32 %v1499, 0.0
      %v1763 = vmax.f32 %v1501, 0.0
      %v1764 = vmax.f32 %v1503, 0.0
      %v1765 = vmax.f32 %v1507, 0.0
      %v1766 = vmax.f32 %v1509, 0.0
      %v1767 = vmax.f32 %v1511, 0.0
      %v1768 = vmax.f32 %v1513, 0.0
      %v1769 = vmax.f32 %v1517, 0.0
      %v1770 = vmax.f32 %v1519, 0.0
      %v1771 = vmax.f32 %v1521, 0.0
      %v1772 = vmax.f32 %v1523, 0.0
      %v1773 = vmax.f32 %v1527, 0.0
      %v1774 = vmax.f32 %v1529, 0.0
      %v1775 = vmax.f32 %v1531, 0.0
      %v1776 = vmax.f32 %v1533, 0.0
      %v1777 = vmax.f32 %v1537, 0.0
      %v1778 = vmax.f32 %v1539, 0.0
      %v1779 = vmax.f32 %v1541, 0.0
      %v1780 = vmax.f32 %v1543, 0.0
      %v1781 = vmax.f32 %v1547, 0.0
      %v1782 = vmax.f32 %v1549, 0.0
      %v1783 = vmax.f32 %v1551, 0.0
      %v1784 = vmax.f32 %v1553, 0.0
      %v1785 = vmax.f32 %v1557, 0.0
      %v1786 = vmax.f32 %v1559, 0.0
      %v1787 = vmax.f32 %v1561, 0.0
      %v1788 = vmax.f32 %v1563, 0.0
      %v1789 = vmax.f32 %v1567, 0.0
      %v1790 = vmax.f32 %v1569, 0.0
      %v1791 = vmax.f32 %v1571, 0.0
      %v1792 = vmax.f32 %v1573, 0.0
      %v1793 = vmax.f32 %v1577, 0.0
      %v1794 = vmax.f32 %v1579, 0.0
      %v1795 = vmax.f32 %v1581, 0.0
      %v1796 = vmax.f32 %v1583, 0.0
      %v1797 = vmax.f32 %v1587, 0.0
      %v1798 = vmax.f32 %v1589, 0.0
      %v1799 = vmax.f32 %v1591, 0.0
      %v1800 = vmax.f32 %v1593, 0.0
      %v1801 = vmax.f32 %v1597, 0.0
      %v1802 = vmax.f32 %v1599, 0.0
      %v1803 = vmax.f32 %v1601, 0.0
      %v1804 = vmax.f32 %v1603, 0.0
      %v1805 = vmax.f32 %v1607, 0.0
      %v1806 = vmax.f32 %v1609, 0.0
      %v1807 = vmax.f32 %v1611, 0.0
      %v1808 = vmax.f32 %v1613, 0.0
      %v1809 = vmax.f32 %v1617, 0.0
      %v1810 = vmax.f32 %v1619, 0.0
      %v1811 = vmax.f32 %v1621, 0.0
      %v1812 = vmax.f32 %v1623, 0.0
      %v1813 = vmax.f32 %v1627, 0.0
      %v1814 = vmax.f32 %v1629, 0.0
      %v1815 = vmax.f32 %v1631, 0.0
      %v1816 = vmax.f32 %v1633, 0.0
      %v1817 = vmax.f32 %v1637, 0.0
      %v1818 = vmax.f32 %v1639, 0.0
      %v1819 = vmax.f32 %v1641, 0.0
      %v1820 = vmax.f32 %v1643, 0.0
      %v1821 = vmax.f32 %v1647, 0.0
      %v1822 = vmax.f32 %v1649, 0.0
      %v1823 = vmax.f32 %v1651, 0.0
      %v1824 = vmax.f32 %v1653, 0.0
      %v1825 = vmax.f32 %v1657, 0.0
      %v1826 = vmax.f32 %v1659, 0.0
      %v1827 = vmax.f32 %v1661, 0.0
      %v1828 = vmax.f32 %v1663, 0.0
      %v1829 = vmax.f32 %v1667, 0.0
      %v1830 = vmax.f32 %v1669, 0.0
      %v1831 = vmax.f32 %v1671, 0.0
      %v1832 = vmax.f32 %v1673, 0.0
      %v1833 = vmax.f32 %v1677, 0.0
      %v1834 = vmax.f32 %v1679, 0.0
      %v1835 = vmax.f32 %v1681, 0.0
      %v1836 = vmax.f32 %v1683, 0.0
      %v1837 = vmax.f32 %v1687, 0.0
      %v1838 = vmax.f32 %v1689, 0.0
      %v1839 = vmax.f32 %v1691, 0.0
      %v1840 = vmax.f32 %v1693, 0.0
      %v1841 = vmax.f32 %v1697, 0.0
      %v1842 = vmax.f32 %v1699, 0.0
      %v1843 = vmax.f32 %v1701, 0.0
      %v1844 = vmax.f32 %v1703, 0.0
      %v1845 = vmax.f32 %v1707, 0.0
      %v1846 = vmax.f32 %v1709, 0.0
      %v1847 = vmax.f32 %v1711, 0.0
      %v1848 = vmax.f32 %v1713, 0.0
      %v1849 = vmax.f32 %v1717, 0.0
      %v1850 = vmax.f32 %v1719, 0.0
      %v1851 = vmax.f32 %v1721, 0.0
      %v1852 = vmax.f32 %v1723, 0.0
      %v1853 = vpack.c.bf16 %v1727, %v1725
      %v1854 = vpack.c.bf16 %v1728, %v1726
      %v1855 = vpack.c.bf16 %v1731, %v1729
      %v1856 = vpack.c.bf16 %v1732, %v1730
      %v1857 = vpack.c.bf16 %v1735, %v1733
      %v1858 = vpack.c.bf16 %v1736, %v1734
      %v1859 = vpack.c.bf16 %v1739, %v1737
      %v1860 = vpack.c.bf16 %v1740, %v1738
      %v1861 = vpack.c.bf16 %v1743, %v1741
      %v1862 = vpack.c.bf16 %v1744, %v1742
      %v1863 = vpack.c.bf16 %v1747, %v1745
      %v1864 = vpack.c.bf16 %v1748, %v1746
      %v1865 = vpack.c.bf16 %v1751, %v1749
      %v1866 = vpack.c.bf16 %v1752, %v1750
      %v1867 = vpack.c.bf16 %v1755, %v1753
      %v1868 = vpack.c.bf16 %v1756, %v1754
      %v1869 = vpack.c.bf16 %v1759, %v1757
      %v1870 = vpack.c.bf16 %v1760, %v1758
      %v1871 = vpack.c.bf16 %v1763, %v1761
      %v1872 = vpack.c.bf16 %v1764, %v1762
      %v1873 = vpack.c.bf16 %v1767, %v1765
      %v1874 = vpack.c.bf16 %v1768, %v1766
      %v1875 = vpack.c.bf16 %v1771, %v1769
      %v1876 = vpack.c.bf16 %v1772, %v1770
      %v1877 = vpack.c.bf16 %v1775, %v1773
      %v1878 = vpack.c.bf16 %v1776, %v1774
      %v1879 = vpack.c.bf16 %v1779, %v1777
      %v1880 = vpack.c.bf16 %v1780, %v1778
      %v1881 = vpack.c.bf16 %v1783, %v1781
      %v1882 = vpack.c.bf16 %v1784, %v1782
      %v1883 = vpack.c.bf16 %v1787, %v1785
      %v1884 = vpack.c.bf16 %v1788, %v1786
      %v1885 = vpack.c.bf16 %v1791, %v1789
      %v1886 = vpack.c.bf16 %v1792, %v1790
      %v1887 = vpack.c.bf16 %v1795, %v1793
      %v1888 = vpack.c.bf16 %v1796, %v1794
      %v1889 = vpack.c.bf16 %v1799, %v1797
      %v1890 = vpack.c.bf16 %v1800, %v1798
      %v1891 = vpack.c.bf16 %v1803, %v1801
      %v1892 = vpack.c.bf16 %v1804, %v1802
      %v1893 = vpack.c.bf16 %v1807, %v1805
      %v1894 = vpack.c.bf16 %v1808, %v1806
      %v1895 = vpack.c.bf16 %v1811, %v1809
      %v1896 = vpack.c.bf16 %v1812, %v1810
      %v1897 = vpack.c.bf16 %v1815, %v1813
      %v1898 = vpack.c.bf16 %v1816, %v1814
      %v1899 = vpack.c.bf16 %v1819, %v1817
      %v1900 = vpack.c.bf16 %v1820, %v1818
      %v1901 = vpack.c.bf16 %v1823, %v1821
      %v1902 = vpack.c.bf16 %v1824, %v1822
      %v1903 = vpack.c.bf16 %v1827, %v1825
      %v1904 = vpack.c.bf16 %v1828, %v1826
      %v1905 = vpack.c.bf16 %v1831, %v1829
      %v1906 = vpack.c.bf16 %v1832, %v1830
      %v1907 = vpack.c.bf16 %v1835, %v1833
      %v1908 = vpack.c.bf16 %v1836, %v1834
      %v1909 = vpack.c.bf16 %v1839, %v1837
      %v1910 = vpack.c.bf16 %v1840, %v1838
      %v1911 = vpack.c.bf16 %v1843, %v1841
      %v1912 = vpack.c.bf16 %v1844, %v1842
      %v1913 = vpack.c.bf16 %v1847, %v1845
      %v1914 = vpack.c.bf16 %v1848, %v1846
      %v1915 = vpack.c.bf16 %v1851, %v1849
      %v1916 = vpack.c.bf16 %v1852, %v1850
      %v1917 = vld [vmem:[%s5] sm:$0xf]
      %v1918 = vld [vmem:[%s5 + $0x4] sm:$0xf]
      %v1919 = vld [vmem:[%s5 + $0x8] sm:$0xf]
      %v1920 = vld [vmem:[%s5 + $0xc] sm:$0xf]
      %v1921 = vld [vmem:[%s5 + $0x10] sm:$0xf]
      %v1922 = vld [vmem:[%s5 + $0x14] sm:$0xf]
      %v1923 = vld [vmem:[%s5 + $0x18] sm:$0xf]
      %v1924 = vld [vmem:[%s5 + $0x1c] sm:$0xf]
      %v1925 = vld [vmem:[%s5 + $0x20] sm:$0xf]
      %v1926 = vld [vmem:[%s5 + $0x24] sm:$0xf]
      %v1927 = vld [vmem:[%s5 + $0x28] sm:$0xf]
      %v1928 = vld [vmem:[%s5 + $0x2c] sm:$0xf]
      %v1929 = vld [vmem:[%s5 + $0x30] sm:$0xf]
      %v1930 = vld [vmem:[%s5 + $0x34] sm:$0xf]
      %v1931 = vld [vmem:[%s5 + $0x38] sm:$0xf]
      %v1932 = vld [vmem:[%s5 + $0x3c] sm:$0xf]
      %v1933 = vld [vmem:[%s5 + $0x40] sm:$0xf]
      %v1934 = vld [vmem:[%s5 + $0x44] sm:$0xf]
      %v1935 = vld [vmem:[%s5 + $0x48] sm:$0xf]
      %v1936 = vld [vmem:[%s5 + $0x4c] sm:$0xf]
      %v1937 = vld [vmem:[%s5 + $0x50] sm:$0xf]
      %v1938 = vld [vmem:[%s5 + $0x54] sm:$0xf]
      %v1939 = vld [vmem:[%s5 + $0x58] sm:$0xf]
      %v1940 = vld [vmem:[%s5 + $0x5c] sm:$0xf]
      %v1941 = vld [vmem:[%s5 + $0x60] sm:$0xf]
      %v1942 = vld [vmem:[%s5 + $0x64] sm:$0xf]
      %v1943 = vld [vmem:[%s5 + $0x68] sm:$0xf]
      %v1944 = vld [vmem:[%s5 + $0x6c] sm:$0xf]
      %v1945 = vld [vmem:[%s5 + $0x70] sm:$0xf]
      %v1946 = vld [vmem:[%s5 + $0x74] sm:$0xf]
      %v1947 = vld [vmem:[%s5 + $0x78] sm:$0xf]
      %v1948 = vld [vmem:[%s5 + $0x7c] sm:$0xf]
      %v1949 = vld [vmem:[%s6] sm:$0x1]
      %v1951 = vlaneseq
      %v1952 = vshrl.u32 %v1951, 7
      %v1953 = vsub.s32 0, %v1952
      %v1954 = vrot.slane %v1949, %v1953
      %v1988 = vunpack.c.l.b16 %v1917
      %v1989 = vunpack.c.l.b16 %v1918
      %v1990 = vunpack.c.l.b16 %v1919
      %v1991 = vunpack.c.l.b16 %v1920
      %v1992 = vunpack.c.l.b16 %v1921
      %v1993 = vunpack.c.l.b16 %v1922
      %v1994 = vunpack.c.l.b16 %v1923
      %v1995 = vunpack.c.l.b16 %v1924
      %v1996 = vunpack.c.l.b16 %v1925
      %v1997 = vunpack.c.l.b16 %v1926
      %v1998 = vunpack.c.l.b16 %v1927
      %v1999 = vunpack.c.l.b16 %v1928
      %v2000 = vunpack.c.l.b16 %v1929
      %v2001 = vunpack.c.l.b16 %v1930
      %v2002 = vunpack.c.l.b16 %v1931
      %v2003 = vunpack.c.l.b16 %v1932
      %v2004 = vunpack.c.l.b16 %v1933
      %v2005 = vunpack.c.l.b16 %v1934
      %v2006 = vunpack.c.l.b16 %v1935
      %v2007 = vunpack.c.l.b16 %v1936
      %v2008 = vunpack.c.l.b16 %v1937
      %v2009 = vunpack.c.l.b16 %v1938
      %v2010 = vunpack.c.l.b16 %v1939
      %v2011 = vunpack.c.l.b16 %v1940
      %v2012 = vunpack.c.l.b16 %v1941
      %v2013 = vunpack.c.l.b16 %v1942
      %v2014 = vunpack.c.l.b16 %v1943
      %v2015 = vunpack.c.l.b16 %v1944
      %v2016 = vunpack.c.l.b16 %v1945
      %v2017 = vunpack.c.l.b16 %v1946
      %v2018 = vunpack.c.l.b16 %v1947
      %v2019 = vunpack.c.l.b16 %v1948
      %v2020 = vpack.c.b16 %v1989, %v1988
      %v2021 = vpack.c.b16 %v1991, %v1990
      %v2022 = vpack.c.b16 %v1993, %v1992
      %v2023 = vpack.c.b16 %v1995, %v1994
      %v2024 = vpack.c.b16 %v1997, %v1996
      %v2025 = vpack.c.b16 %v1999, %v1998
      %v2026 = vpack.c.b16 %v2001, %v2000
      %v2027 = vpack.c.b16 %v2003, %v2002
      %v2028 = vpack.c.b16 %v2005, %v2004
      %v2029 = vpack.c.b16 %v2007, %v2006
      %v2030 = vpack.c.b16 %v2009, %v2008
      %v2031 = vpack.c.b16 %v2011, %v2010
      %v2032 = vpack.c.b16 %v2013, %v2012
      %v2033 = vpack.c.b16 %v2015, %v2014
      %v2034 = vpack.c.b16 %v2017, %v2016
      %v2035 = vpack.c.b16 %v2019, %v2018
      %2052 = vmatprep.subr.bf16.mxu0 0
      %2053 = vmatpush1.bf16.msra.mxu0 %v2027
      %2054 = vmatprep.subr.bf16.mxu0 0
      %2055 = vmatpush1.bf16.msra.mxu0 %v2026
      %2056 = vmatprep.subr.bf16.mxu0 0
      %2057 = vmatpush1.bf16.msra.mxu0 %v2025
      %2058 = vmatprep.subr.bf16.mxu0 0
      %2059 = vmatpush1.bf16.msra.mxu0 %v2024
      %2060 = vmatprep.subr.bf16.mxu0 0
      %2061 = vmatpush1.bf16.msra.mxu0 %v2023
      %2062 = vmatprep.subr.bf16.mxu0 0
      %2063 = vmatpush1.bf16.msra.mxu0 %v2022
      %2064 = vmatprep.subr.bf16.mxu0 0
      %2065 = vmatpush1.bf16.msra.mxu0 %v2021
      %2066 = vmatprep.subr.bf16.mxu0 0
      %2067 = vmatpush1.bf16.msra.mxu0 %v2020
      %2068 = vmatprep.subr.bf16.mxu0 0
      %2069 = vmatpush2.bf16.msra.mxu0 %v2035
      %2070 = vmatprep.subr.bf16.mxu0 0
      %2071 = vmatpush2.bf16.msra.mxu0 %v2034
      %2072 = vmatprep.subr.bf16.mxu0 0
      %2073 = vmatpush2.bf16.msra.mxu0 %v2033
      %2074 = vmatprep.subr.bf16.mxu0 0
      %2075 = vmatpush2.bf16.msra.mxu0 %v2032
      %2076 = vmatprep.subr.bf16.mxu0 0
      %2077 = vmatpush2.bf16.msra.mxu0 %v2031
      %2078 = vmatprep.subr.bf16.mxu0 0
      %2079 = vmatpush2.bf16.msra.mxu0 %v2030
      %2080 = vmatprep.subr.bf16.mxu0 0
      %2081 = vmatpush2.bf16.msra.mxu0 %v2029
      %2082 = vmatprep.subr.bf16.mxu0 0
      %2083 = vmatpush2.bf16.msra.mxu0 %v2028
      %2084 = vmatprep.mubr.bf16.mxu0 %v1854
      %2085 = vmatmul.mubr.bf16.gmra.mxu0 %v1853
      %v2086 = vpop.f32.mrf.mxu0
      %v2087 = vadd.f32 %v1954, %v2086
      %v2088 = vpop.f32.mrf.mxu0
      %v2089 = vpop.f32.mrf.mxu0
      %v2090 = vadd.f32 %v1954, %v2089
      %v2091 = vpop.f32.mrf.mxu0
      %2092 = vmatprep.mubr.bf16.mxu0 %v1856
      %2093 = vmatmul.mubr.bf16.gmra.mxu0 %v1855
      %v2094 = vpop.f32.mrf.mxu0
      %v2095 = vadd.f32 %v1954, %v2094
      %v2096 = vpop.f32.mrf.mxu0
      %v2097 = vpop.f32.mrf.mxu0
      %v2098 = vadd.f32 %v1954, %v2097
      %v2099 = vpop.f32.mrf.mxu0
      %2100 = vmatprep.mubr.bf16.mxu0 %v1858
      %2101 = vmatmul.mubr.bf16.gmra.mxu0 %v1857
      %v2102 = vpop.f32.mrf.mxu0
      %v2103 = vadd.f32 %v1954, %v2102
      %v2104 = vpop.f32.mrf.mxu0
      %v2105 = vpop.f32.mrf.mxu0
      %v2106 = vadd.f32 %v1954, %v2105
      %v2107 = vpop.f32.mrf.mxu0
      %2108 = vmatprep.mubr.bf16.mxu0 %v1860
      %2109 = vmatmul.mubr.bf16.gmra.mxu0 %v1859
      %v2110 = vpop.f32.mrf.mxu0
      %v2111 = vadd.f32 %v1954, %v2110
      %v2112 = vpop.f32.mrf.mxu0
      %v2113 = vpop.f32.mrf.mxu0
      %v2114 = vadd.f32 %v1954, %v2113
      %v2115 = vpop.f32.mrf.mxu0
      %2116 = vmatprep.mubr.bf16.mxu0 %v1862
      %2117 = vmatmul.mubr.bf16.gmra.mxu0 %v1861
      %v2118 = vpop.f32.mrf.mxu0
      %v2119 = vadd.f32 %v1954, %v2118
      %v2120 = vpop.f32.mrf.mxu0
      %v2121 = vpop.f32.mrf.mxu0
      %v2122 = vadd.f32 %v1954, %v2121
      %v2123 = vpop.f32.mrf.mxu0
      %2124 = vmatprep.mubr.bf16.mxu0 %v1864
      %2125 = vmatmul.mubr.bf16.gmra.mxu0 %v1863
      %v2126 = vpop.f32.mrf.mxu0
      %v2127 = vadd.f32 %v1954, %v2126
      %v2128 = vpop.f32.mrf.mxu0
      %v2129 = vpop.f32.mrf.mxu0
      %v2130 = vadd.f32 %v1954, %v2129
      %v2131 = vpop.f32.mrf.mxu0
      %2132 = vmatprep.mubr.bf16.mxu0 %v1866
      %2133 = vmatmul.mubr.bf16.gmra.mxu0 %v1865
      %v2134 = vpop.f32.mrf.mxu0
      %v2135 = vadd.f32 %v1954, %v2134
      %v2136 = vpop.f32.mrf.mxu0
      %v2137 = vpop.f32.mrf.mxu0
      %v2138 = vadd.f32 %v1954, %v2137
      %v2139 = vpop.f32.mrf.mxu0
      %2140 = vmatprep.mubr.bf16.mxu0 %v1868
      %2141 = vmatmul.mubr.bf16.gmra.mxu0 %v1867
      %v2142 = vpop.f32.mrf.mxu0
      %v2143 = vadd.f32 %v1954, %v2142
      %v2144 = vpop.f32.mrf.mxu0
      %v2145 = vpop.f32.mrf.mxu0
      %v2146 = vadd.f32 %v1954, %v2145
      %v2147 = vpop.f32.mrf.mxu0
      %2148 = vmatprep.mubr.bf16.mxu0 %v1870
      %2149 = vmatmul.mubr.bf16.gmra.mxu0 %v1869
      %v2150 = vpop.f32.mrf.mxu0
      %v2151 = vadd.f32 %v1954, %v2150
      %v2152 = vpop.f32.mrf.mxu0
      %v2153 = vpop.f32.mrf.mxu0
      %v2154 = vadd.f32 %v1954, %v2153
      %v2155 = vpop.f32.mrf.mxu0
      %2156 = vmatprep.mubr.bf16.mxu0 %v1872
      %2157 = vmatmul.mubr.bf16.gmra.mxu0 %v1871
      %v2158 = vpop.f32.mrf.mxu0
      %v2159 = vadd.f32 %v1954, %v2158
      %v2160 = vpop.f32.mrf.mxu0
      %v2161 = vpop.f32.mrf.mxu0
      %v2162 = vadd.f32 %v1954, %v2161
      %v2163 = vpop.f32.mrf.mxu0
      %2164 = vmatprep.mubr.bf16.mxu0 %v1874
      %2165 = vmatmul.mubr.bf16.gmra.mxu0 %v1873
      %v2166 = vpop.f32.mrf.mxu0
      %v2167 = vadd.f32 %v1954, %v2166
      %v2168 = vpop.f32.mrf.mxu0
      %v2169 = vpop.f32.mrf.mxu0
      %v2170 = vadd.f32 %v1954, %v2169
      %v2171 = vpop.f32.mrf.mxu0
      %2172 = vmatprep.mubr.bf16.mxu0 %v1876
      %2173 = vmatmul.mubr.bf16.gmra.mxu0 %v1875
      %v2174 = vpop.f32.mrf.mxu0
      %v2175 = vadd.f32 %v1954, %v2174
      %v2176 = vpop.f32.mrf.mxu0
      %v2177 = vpop.f32.mrf.mxu0
      %v2178 = vadd.f32 %v1954, %v2177
      %v2179 = vpop.f32.mrf.mxu0
      %2180 = vmatprep.mubr.bf16.mxu0 %v1878
      %2181 = vmatmul.mubr.bf16.gmra.mxu0 %v1877
      %v2182 = vpop.f32.mrf.mxu0
      %v2183 = vadd.f32 %v1954, %v2182
      %v2184 = vpop.f32.mrf.mxu0
      %v2185 = vpop.f32.mrf.mxu0
      %v2186 = vadd.f32 %v1954, %v2185
      %v2187 = vpop.f32.mrf.mxu0
      %2188 = vmatprep.mubr.bf16.mxu0 %v1880
      %2189 = vmatmul.mubr.bf16.gmra.mxu0 %v1879
      %v2190 = vpop.f32.mrf.mxu0
      %v2191 = vadd.f32 %v1954, %v2190
      %v2192 = vpop.f32.mrf.mxu0
      %v2193 = vpop.f32.mrf.mxu0
      %v2194 = vadd.f32 %v1954, %v2193
      %v2195 = vpop.f32.mrf.mxu0
      %2196 = vmatprep.mubr.bf16.mxu0 %v1882
      %2197 = vmatmul.mubr.bf16.gmra.mxu0 %v1881
      %v2198 = vpop.f32.mrf.mxu0
      %v2199 = vadd.f32 %v1954, %v2198
      %v2200 = vpop.f32.mrf.mxu0
      %v2201 = vpop.f32.mrf.mxu0
      %v2202 = vadd.f32 %v1954, %v2201
      %v2203 = vpop.f32.mrf.mxu0
      %2204 = vmatprep.mubr.bf16.mxu0 %v1884
      %2205 = vmatmul.mubr.bf16.gmra.mxu0 %v1883
      %v2206 = vpop.f32.mrf.mxu0
      %v2207 = vadd.f32 %v1954, %v2206
      %v2208 = vpop.f32.mrf.mxu0
      %v2209 = vpop.f32.mrf.mxu0
      %v2210 = vadd.f32 %v1954, %v2209
      %v2211 = vpop.f32.mrf.mxu0
      %2212 = vmatprep.mubr.bf16.mxu0 %v1886
      %2213 = vmatmul.mubr.bf16.gmra.mxu0 %v1885
      %v2214 = vpop.f32.mrf.mxu0
      %v2215 = vadd.f32 %v1954, %v2214
      %v2216 = vpop.f32.mrf.mxu0
      %v2217 = vpop.f32.mrf.mxu0
      %v2218 = vadd.f32 %v1954, %v2217
      %v2219 = vpop.f32.mrf.mxu0
      %2220 = vmatprep.mubr.bf16.mxu0 %v1888
      %2221 = vmatmul.mubr.bf16.gmra.mxu0 %v1887
      %v2222 = vpop.f32.mrf.mxu0
      %v2223 = vadd.f32 %v1954, %v2222
      %v2224 = vpop.f32.mrf.mxu0
      %v2225 = vpop.f32.mrf.mxu0
      %v2226 = vadd.f32 %v1954, %v2225
      %v2227 = vpop.f32.mrf.mxu0
      %2228 = vmatprep.mubr.bf16.mxu0 %v1890
      %2229 = vmatmul.mubr.bf16.gmra.mxu0 %v1889
      %v2230 = vpop.f32.mrf.mxu0
      %v2231 = vadd.f32 %v1954, %v2230
      %v2232 = vpop.f32.mrf.mxu0
      %v2233 = vpop.f32.mrf.mxu0
      %v2234 = vadd.f32 %v1954, %v2233
      %v2235 = vpop.f32.mrf.mxu0
      %2236 = vmatprep.mubr.bf16.mxu0 %v1892
      %2237 = vmatmul.mubr.bf16.gmra.mxu0 %v1891
      %v2238 = vpop.f32.mrf.mxu0
      %v2239 = vadd.f32 %v1954, %v2238
      %v2240 = vpop.f32.mrf.mxu0
      %v2241 = vpop.f32.mrf.mxu0
      %v2242 = vadd.f32 %v1954, %v2241
      %v2243 = vpop.f32.mrf.mxu0
      %2244 = vmatprep.mubr.bf16.mxu0 %v1894
      %2245 = vmatmul.mubr.bf16.gmra.mxu0 %v1893
      %v2246 = vpop.f32.mrf.mxu0
      %v2247 = vadd.f32 %v1954, %v2246
      %v2248 = vpop.f32.mrf.mxu0
      %v2249 = vpop.f32.mrf.mxu0
      %v2250 = vadd.f32 %v1954, %v2249
      %v2251 = vpop.f32.mrf.mxu0
      %2252 = vmatprep.mubr.bf16.mxu0 %v1896
      %2253 = vmatmul.mubr.bf16.gmra.mxu0 %v1895
      %v2254 = vpop.f32.mrf.mxu0
      %v2255 = vadd.f32 %v1954, %v2254
      %v2256 = vpop.f32.mrf.mxu0
      %v2257 = vpop.f32.mrf.mxu0
      %v2258 = vadd.f32 %v1954, %v2257
      %v2259 = vpop.f32.mrf.mxu0
      %2260 = vmatprep.mubr.bf16.mxu0 %v1898
      %2261 = vmatmul.mubr.bf16.gmra.mxu0 %v1897
      %v2262 = vpop.f32.mrf.mxu0
      %v2263 = vadd.f32 %v1954, %v2262
      %v2264 = vpop.f32.mrf.mxu0
      %v2265 = vpop.f32.mrf.mxu0
      %v2266 = vadd.f32 %v1954, %v2265
      %v2267 = vpop.f32.mrf.mxu0
      %2268 = vmatprep.mubr.bf16.mxu0 %v1900
      %2269 = vmatmul.mubr.bf16.gmra.mxu0 %v1899
      %v2270 = vpop.f32.mrf.mxu0
      %v2271 = vadd.f32 %v1954, %v2270
      %v2272 = vpop.f32.mrf.mxu0
      %v2273 = vpop.f32.mrf.mxu0
      %v2274 = vadd.f32 %v1954, %v2273
      %v2275 = vpop.f32.mrf.mxu0
      %2276 = vmatprep.mubr.bf16.mxu0 %v1902
      %2277 = vmatmul.mubr.bf16.gmra.mxu0 %v1901
      %v2278 = vpop.f32.mrf.mxu0
      %v2279 = vadd.f32 %v1954, %v2278
      %v2280 = vpop.f32.mrf.mxu0
      %v2281 = vpop.f32.mrf.mxu0
      %v2282 = vadd.f32 %v1954, %v2281
      %v2283 = vpop.f32.mrf.mxu0
      %2284 = vmatprep.mubr.bf16.mxu0 %v1904
      %2285 = vmatmul.mubr.bf16.gmra.mxu0 %v1903
      %v2286 = vpop.f32.mrf.mxu0
      %v2287 = vadd.f32 %v1954, %v2286
      %v2288 = vpop.f32.mrf.mxu0
      %v2289 = vpop.f32.mrf.mxu0
      %v2290 = vadd.f32 %v1954, %v2289
      %v2291 = vpop.f32.mrf.mxu0
      %2292 = vmatprep.mubr.bf16.mxu0 %v1906
      %2293 = vmatmul.mubr.bf16.gmra.mxu0 %v1905
      %v2294 = vpop.f32.mrf.mxu0
      %v2295 = vadd.f32 %v1954, %v2294
      %v2296 = vpop.f32.mrf.mxu0
      %v2297 = vpop.f32.mrf.mxu0
      %v2298 = vadd.f32 %v1954, %v2297
      %v2299 = vpop.f32.mrf.mxu0
      %2300 = vmatprep.mubr.bf16.mxu0 %v1908
      %2301 = vmatmul.mubr.bf16.gmra.mxu0 %v1907
      %v2302 = vpop.f32.mrf.mxu0
      %v2303 = vadd.f32 %v1954, %v2302
      %v2304 = vpop.f32.mrf.mxu0
      %v2305 = vpop.f32.mrf.mxu0
      %v2306 = vadd.f32 %v1954, %v2305
      %v2307 = vpop.f32.mrf.mxu0
      %2308 = vmatprep.mubr.bf16.mxu0 %v1910
      %2309 = vmatmul.mubr.bf16.gmra.mxu0 %v1909
      %v2310 = vpop.f32.mrf.mxu0
      %v2311 = vadd.f32 %v1954, %v2310
      %v2312 = vpop.f32.mrf.mxu0
      %v2313 = vpop.f32.mrf.mxu0
      %v2314 = vadd.f32 %v1954, %v2313
      %v2315 = vpop.f32.mrf.mxu0
      %2316 = vmatprep.mubr.bf16.mxu0 %v1912
      %2317 = vmatmul.mubr.bf16.gmra.mxu0 %v1911
      %v2318 = vpop.f32.mrf.mxu0
      %v2319 = vadd.f32 %v1954, %v2318
      %v2320 = vpop.f32.mrf.mxu0
      %v2321 = vpop.f32.mrf.mxu0
      %v2322 = vadd.f32 %v1954, %v2321
      %v2323 = vpop.f32.mrf.mxu0
      %2324 = vmatprep.mubr.bf16.mxu0 %v1914
      %2325 = vmatmul.mubr.bf16.gmra.mxu0 %v1913
      %v2326 = vpop.f32.mrf.mxu0
      %v2327 = vadd.f32 %v1954, %v2326
      %v2328 = vpop.f32.mrf.mxu0
      %v2329 = vpop.f32.mrf.mxu0
      %v2330 = vadd.f32 %v1954, %v2329
      %v2331 = vpop.f32.mrf.mxu0
      %2332 = vmatprep.mubr.bf16.mxu0 %v1916
      %2333 = vmatmul.mubr.bf16.gmra.mxu0 %v1915
      %v2334 = vpop.f32.mrf.mxu0
      %v2335 = vadd.f32 %v1954, %v2334
      %v2336 = vpop.f32.mrf.mxu0
      %v2337 = vpop.f32.mrf.mxu0
      %v2338 = vadd.f32 %v1954, %v2337
      %v2339 = vpop.f32.mrf.mxu0
      %2340 = vdwg.mxu0
      %v2341 = vmax.f32 %v2087, 0.0
      %v2342 = vmax.f32 %v2090, 0.0
      %v2343 = vmax.f32 %v2095, 0.0
      %v2344 = vmax.f32 %v2098, 0.0
      %v2345 = vmax.f32 %v2103, 0.0
      %v2346 = vmax.f32 %v2106, 0.0
      %v2347 = vmax.f32 %v2111, 0.0
      %v2348 = vmax.f32 %v2114, 0.0
      %v2349 = vmax.f32 %v2119, 0.0
      %v2350 = vmax.f32 %v2122, 0.0
      %v2351 = vmax.f32 %v2127, 0.0
      %v2352 = vmax.f32 %v2130, 0.0
      %v2353 = vmax.f32 %v2135, 0.0
      %v2354 = vmax.f32 %v2138, 0.0
      %v2355 = vmax.f32 %v2143, 0.0
      %v2356 = vmax.f32 %v2146, 0.0
      %v2357 = vmax.f32 %v2151, 0.0
      %v2358 = vmax.f32 %v2154, 0.0
      %v2359 = vmax.f32 %v2159, 0.0
      %v2360 = vmax.f32 %v2162, 0.0
      %v2361 = vmax.f32 %v2167, 0.0
      %v2362 = vmax.f32 %v2170, 0.0
      %v2363 = vmax.f32 %v2175, 0.0
      %v2364 = vmax.f32 %v2178, 0.0
      %v2365 = vmax.f32 %v2183, 0.0
      %v2366 = vmax.f32 %v2186, 0.0
      %v2367 = vmax.f32 %v2191, 0.0
      %v2368 = vmax.f32 %v2194, 0.0
      %v2369 = vmax.f32 %v2199, 0.0
      %v2370 = vmax.f32 %v2202, 0.0
      %v2371 = vmax.f32 %v2207, 0.0
      %v2372 = vmax.f32 %v2210, 0.0
      %v2373 = vmax.f32 %v2215, 0.0
      %v2374 = vmax.f32 %v2218, 0.0
      %v2375 = vmax.f32 %v2223, 0.0
      %v2376 = vmax.f32 %v2226, 0.0
      %v2377 = vmax.f32 %v2231, 0.0
      %v2378 = vmax.f32 %v2234, 0.0
      %v2379 = vmax.f32 %v2239, 0.0
      %v2380 = vmax.f32 %v2242, 0.0
      %v2381 = vmax.f32 %v2247, 0.0
      %v2382 = vmax.f32 %v2250, 0.0
      %v2383 = vmax.f32 %v2255, 0.0
      %v2384 = vmax.f32 %v2258, 0.0
      %v2385 = vmax.f32 %v2263, 0.0
      %v2386 = vmax.f32 %v2266, 0.0
      %v2387 = vmax.f32 %v2271, 0.0
      %v2388 = vmax.f32 %v2274, 0.0
      %v2389 = vmax.f32 %v2279, 0.0
      %v2390 = vmax.f32 %v2282, 0.0
      %v2391 = vmax.f32 %v2287, 0.0
      %v2392 = vmax.f32 %v2290, 0.0
      %v2393 = vmax.f32 %v2295, 0.0
      %v2394 = vmax.f32 %v2298, 0.0
      %v2395 = vmax.f32 %v2303, 0.0
      %v2396 = vmax.f32 %v2306, 0.0
      %v2397 = vmax.f32 %v2311, 0.0
      %v2398 = vmax.f32 %v2314, 0.0
      %v2399 = vmax.f32 %v2319, 0.0
      %v2400 = vmax.f32 %v2322, 0.0
      %v2401 = vmax.f32 %v2327, 0.0
      %v2402 = vmax.f32 %v2330, 0.0
      %v2403 = vmax.f32 %v2335, 0.0
      %v2404 = vmax.f32 %v2338, 0.0
      %v2405 = vpack.c.bf16 %v2342, %v2341
      %v2406 = vpack.c.bf16 %v2344, %v2343
      %v2407 = vpack.c.bf16 %v2346, %v2345
      %v2408 = vpack.c.bf16 %v2348, %v2347
      %v2409 = vpack.c.bf16 %v2350, %v2349
      %v2410 = vpack.c.bf16 %v2352, %v2351
      %v2411 = vpack.c.bf16 %v2354, %v2353
      %v2412 = vpack.c.bf16 %v2356, %v2355
      %v2413 = vpack.c.bf16 %v2358, %v2357
      %v2414 = vpack.c.bf16 %v2360, %v2359
      %v2415 = vpack.c.bf16 %v2362, %v2361
      %v2416 = vpack.c.bf16 %v2364, %v2363
      %v2417 = vpack.c.bf16 %v2366, %v2365
      %v2418 = vpack.c.bf16 %v2368, %v2367
      %v2419 = vpack.c.bf16 %v2370, %v2369
      %v2420 = vpack.c.bf16 %v2372, %v2371
      %v2421 = vpack.c.bf16 %v2374, %v2373
      %v2422 = vpack.c.bf16 %v2376, %v2375
      %v2423 = vpack.c.bf16 %v2378, %v2377
      %v2424 = vpack.c.bf16 %v2380, %v2379
      %v2425 = vpack.c.bf16 %v2382, %v2381
      %v2426 = vpack.c.bf16 %v2384, %v2383
      %v2427 = vpack.c.bf16 %v2386, %v2385
      %v2428 = vpack.c.bf16 %v2388, %v2387
      %v2429 = vpack.c.bf16 %v2390, %v2389
      %v2430 = vpack.c.bf16 %v2392, %v2391
      %v2431 = vpack.c.bf16 %v2394, %v2393
      %v2432 = vpack.c.bf16 %v2396, %v2395
      %v2433 = vpack.c.bf16 %v2398, %v2397
      %v2434 = vpack.c.bf16 %v2400, %v2399
      %v2435 = vpack.c.bf16 %v2402, %v2401
      %v2436 = vpack.c.bf16 %v2404, %v2403
      %v2437 = vld [vmem:[%s7] sm:$0xf]
      %v2438 = vld [vmem:[%s7 + $0x4] sm:$0xf]
      %v2439 = vld [vmem:[%s7 + $0x8] sm:$0xf]
      %v2440 = vld [vmem:[%s7 + $0xc] sm:$0xf]
      %v2441 = vld [vmem:[%s7 + $0x10] sm:$0xf]
      %v2442 = vld [vmem:[%s7 + $0x14] sm:$0xf]
      %v2443 = vld [vmem:[%s7 + $0x18] sm:$0xf]
      %v2444 = vld [vmem:[%s7 + $0x1c] sm:$0xf]
      %v2445 = vld [vmem:[%s7 + $0x20] sm:$0xf]
      %v2446 = vld [vmem:[%s7 + $0x24] sm:$0xf]
      %v2447 = vld [vmem:[%s7 + $0x28] sm:$0xf]
      %v2448 = vld [vmem:[%s7 + $0x2c] sm:$0xf]
      %v2449 = vld [vmem:[%s7 + $0x30] sm:$0xf]
      %v2450 = vld [vmem:[%s7 + $0x34] sm:$0xf]
      %v2451 = vld [vmem:[%s7 + $0x38] sm:$0xf]
      %v2452 = vld [vmem:[%s7 + $0x3c] sm:$0xf]
      %v2453 = vld [vmem:[%s8] sm:$0x1]
      %v2455 = vlaneseq
      %v2456 = vshrl.u32 %v2455, 7
      %v2457 = vsub.s32 0, %v2456
      %v2458 = vrot.slane %v2453, %v2457
      %v2476 = vunpack.c.l.b16 %v2437
      %v2477 = vunpack.c.l.b16 %v2438
      %v2478 = vunpack.c.l.b16 %v2439
      %v2479 = vunpack.c.l.b16 %v2440
      %v2480 = vunpack.c.l.b16 %v2441
      %v2481 = vunpack.c.l.b16 %v2442
      %v2482 = vunpack.c.l.b16 %v2443
      %v2483 = vunpack.c.l.b16 %v2444
      %v2484 = vunpack.c.l.b16 %v2445
      %v2485 = vunpack.c.l.b16 %v2446
      %v2486 = vunpack.c.l.b16 %v2447
      %v2487 = vunpack.c.l.b16 %v2448
      %v2488 = vunpack.c.l.b16 %v2449
      %v2489 = vunpack.c.l.b16 %v2450
      %v2490 = vunpack.c.l.b16 %v2451
      %v2491 = vunpack.c.l.b16 %v2452
      %v2492 = vpack.c.b16 %v2477, %v2476
      %v2493 = vpack.c.b16 %v2479, %v2478
      %v2494 = vpack.c.b16 %v2481, %v2480
      %v2495 = vpack.c.b16 %v2483, %v2482
      %v2496 = vpack.c.b16 %v2485, %v2484
      %v2497 = vpack.c.b16 %v2487, %v2486
      %v2498 = vpack.c.b16 %v2489, %v2488
      %v2499 = vpack.c.b16 %v2491, %v2490
      %2508 = vmatprep.subr.bf16.mxu0 0
      %2509 = vmatpush1.bf16.msra.mxu0 %v2499
      %2510 = vmatprep.subr.bf16.mxu0 0
      %2511 = vmatpush1.bf16.msra.mxu0 %v2498
      %2512 = vmatprep.subr.bf16.mxu0 0
      %2513 = vmatpush1.bf16.msra.mxu0 %v2497
      %2514 = vmatprep.subr.bf16.mxu0 0
      %2515 = vmatpush1.bf16.msra.mxu0 %v2496
      %2516 = vmatprep.subr.bf16.mxu0 0
      %2517 = vmatpush1.bf16.msra.mxu0 %v2495
      %2518 = vmatprep.subr.bf16.mxu0 0
      %2519 = vmatpush1.bf16.msra.mxu0 %v2494
      %2520 = vmatprep.subr.bf16.mxu0 0
      %2521 = vmatpush1.bf16.msra.mxu0 %v2493
      %2522 = vmatprep.subr.bf16.mxu0 0
      %2523 = vmatpush1.bf16.msra.mxu0 %v2492
      %2524 = vmatprep.subr.bf16.mxu0 0
      %2525 = vmatpush2.bf16.msra.mxu0 0
      %2526 = vmatprep.subr.bf16.mxu0 0
      %2527 = vmatpush2.bf16.msra.mxu0 0
      %2528 = vmatprep.subr.bf16.mxu0 0
      %2529 = vmatpush2.bf16.msra.mxu0 0
      %2530 = vmatprep.subr.bf16.mxu0 0
      %2531 = vmatpush2.bf16.msra.mxu0 0
      %2532 = vmatprep.subr.bf16.mxu0 0
      %2533 = vmatpush2.bf16.msra.mxu0 0
      %2534 = vmatprep.subr.bf16.mxu0 0
      %2535 = vmatpush2.bf16.msra.mxu0 0
      %2536 = vmatprep.subr.bf16.mxu0 0
      %2537 = vmatpush2.bf16.msra.mxu0 0
      %2538 = vmatprep.subr.bf16.mxu0 0
      %2539 = vmatpush2.bf16.msra.mxu0 0
      %2540 = vmatprep.mubr.bf16.mxu0 0
      %2541 = vmatmul.mubr.bf16.gmra.mxu0 %v2405
      %v2542 = vpop.f32.mrf.mxu0
      %v2543 = vadd.f32 %v2458, %v2542
      %v2544 = vpop.f32.mrf.mxu0
      %v2545 = vpop.f32.mrf.mxu0
      %v2546 = vadd.f32 %v2458, %v2545
      %v2547 = vpop.f32.mrf.mxu0
      %2548 = vmatprep.mubr.bf16.mxu0 0
      %2549 = vmatmul.mubr.bf16.gmra.mxu0 %v2406
      %v2550 = vpop.f32.mrf.mxu0
      %v2551 = vadd.f32 %v2458, %v2550
      %v2552 = vpop.f32.mrf.mxu0
      %v2553 = vpop.f32.mrf.mxu0
      %v2554 = vadd.f32 %v2458, %v2553
      %v2555 = vpop.f32.mrf.mxu0
      %2556 = vmatprep.mubr.bf16.mxu0 0
      %2557 = vmatmul.mubr.bf16.gmra.mxu0 %v2407
      %v2558 = vpop.f32.mrf.mxu0
      %v2559 = vadd.f32 %v2458, %v2558
      %v2560 = vpop.f32.mrf.mxu0
      %v2561 = vpop.f32.mrf.mxu0
      %v2562 = vadd.f32 %v2458, %v2561
      %v2563 = vpop.f32.mrf.mxu0
      %2564 = vmatprep.mubr.bf16.mxu0 0
      %2565 = vmatmul.mubr.bf16.gmra.mxu0 %v2408
      %v2566 = vpop.f32.mrf.mxu0
      %v2567 = vadd.f32 %v2458, %v2566
      %v2568 = vpop.f32.mrf.mxu0
      %v2569 = vpop.f32.mrf.mxu0
      %v2570 = vadd.f32 %v2458, %v2569
      %v2571 = vpop.f32.mrf.mxu0
      %2572 = vmatprep.mubr.bf16.mxu0 0
      %2573 = vmatmul.mubr.bf16.gmra.mxu0 %v2409
      %v2574 = vpop.f32.mrf.mxu0
      %v2575 = vadd.f32 %v2458, %v2574
      %v2576 = vpop.f32.mrf.mxu0
      %v2577 = vpop.f32.mrf.mxu0
      %v2578 = vadd.f32 %v2458, %v2577
      %v2579 = vpop.f32.mrf.mxu0
      %2580 = vmatprep.mubr.bf16.mxu0 0
      %2581 = vmatmul.mubr.bf16.gmra.mxu0 %v2410
      %v2582 = vpop.f32.mrf.mxu0
      %v2583 = vadd.f32 %v2458, %v2582
      %v2584 = vpop.f32.mrf.mxu0
      %v2585 = vpop.f32.mrf.mxu0
      %v2586 = vadd.f32 %v2458, %v2585
      %v2587 = vpop.f32.mrf.mxu0
      %2588 = vmatprep.mubr.bf16.mxu0 0
      %2589 = vmatmul.mubr.bf16.gmra.mxu0 %v2411
      %v2590 = vpop.f32.mrf.mxu0
      %v2591 = vadd.f32 %v2458, %v2590
      %v2592 = vpop.f32.mrf.mxu0
      %v2593 = vpop.f32.mrf.mxu0
      %v2594 = vadd.f32 %v2458, %v2593
      %v2595 = vpop.f32.mrf.mxu0
      %2596 = vmatprep.mubr.bf16.mxu0 0
      %2597 = vmatmul.mubr.bf16.gmra.mxu0 %v2412
      %v2598 = vpop.f32.mrf.mxu0
      %v2599 = vadd.f32 %v2458, %v2598
      %v2600 = vpop.f32.mrf.mxu0
      %v2601 = vpop.f32.mrf.mxu0
      %v2602 = vadd.f32 %v2458, %v2601
      %v2603 = vpop.f32.mrf.mxu0
      %2604 = vmatprep.mubr.bf16.mxu0 0
      %2605 = vmatmul.mubr.bf16.gmra.mxu0 %v2413
      %v2606 = vpop.f32.mrf.mxu0
      %v2607 = vadd.f32 %v2458, %v2606
      %v2608 = vpop.f32.mrf.mxu0
      %v2609 = vpop.f32.mrf.mxu0
      %v2610 = vadd.f32 %v2458, %v2609
      %v2611 = vpop.f32.mrf.mxu0
      %2612 = vmatprep.mubr.bf16.mxu0 0
      %2613 = vmatmul.mubr.bf16.gmra.mxu0 %v2414
      %v2614 = vpop.f32.mrf.mxu0
      %v2615 = vadd.f32 %v2458, %v2614
      %v2616 = vpop.f32.mrf.mxu0
      %v2617 = vpop.f32.mrf.mxu0
      %v2618 = vadd.f32 %v2458, %v2617
      %v2619 = vpop.f32.mrf.mxu0
      %2620 = vmatprep.mubr.bf16.mxu0 0
      %2621 = vmatmul.mubr.bf16.gmra.mxu0 %v2415
      %v2622 = vpop.f32.mrf.mxu0
      %v2623 = vadd.f32 %v2458, %v2622
      %v2624 = vpop.f32.mrf.mxu0
      %v2625 = vpop.f32.mrf.mxu0
      %v2626 = vadd.f32 %v2458, %v2625
      %v2627 = vpop.f32.mrf.mxu0
      %2628 = vmatprep.mubr.bf16.mxu0 0
      %2629 = vmatmul.mubr.bf16.gmra.mxu0 %v2416
      %v2630 = vpop.f32.mrf.mxu0
      %v2631 = vadd.f32 %v2458, %v2630
      %v2632 = vpop.f32.mrf.mxu0
      %v2633 = vpop.f32.mrf.mxu0
      %v2634 = vadd.f32 %v2458, %v2633
      %v2635 = vpop.f32.mrf.mxu0
      %2636 = vmatprep.mubr.bf16.mxu0 0
      %2637 = vmatmul.mubr.bf16.gmra.mxu0 %v2417
      %v2638 = vpop.f32.mrf.mxu0
      %v2639 = vadd.f32 %v2458, %v2638
      %v2640 = vpop.f32.mrf.mxu0
      %v2641 = vpop.f32.mrf.mxu0
      %v2642 = vadd.f32 %v2458, %v2641
      %v2643 = vpop.f32.mrf.mxu0
      %2644 = vmatprep.mubr.bf16.mxu0 0
      %2645 = vmatmul.mubr.bf16.gmra.mxu0 %v2418
      %v2646 = vpop.f32.mrf.mxu0
      %v2647 = vadd.f32 %v2458, %v2646
      %v2648 = vpop.f32.mrf.mxu0
      %v2649 = vpop.f32.mrf.mxu0
      %v2650 = vadd.f32 %v2458, %v2649
      %v2651 = vpop.f32.mrf.mxu0
      %2652 = vmatprep.mubr.bf16.mxu0 0
      %2653 = vmatmul.mubr.bf16.gmra.mxu0 %v2419
      %v2654 = vpop.f32.mrf.mxu0
      %v2655 = vadd.f32 %v2458, %v2654
      %v2656 = vpop.f32.mrf.mxu0
      %v2657 = vpop.f32.mrf.mxu0
      %v2658 = vadd.f32 %v2458, %v2657
      %v2659 = vpop.f32.mrf.mxu0
      %2660 = vmatprep.mubr.bf16.mxu0 0
      %2661 = vmatmul.mubr.bf16.gmra.mxu0 %v2420
      %v2662 = vpop.f32.mrf.mxu0
      %v2663 = vadd.f32 %v2458, %v2662
      %v2664 = vpop.f32.mrf.mxu0
      %v2665 = vpop.f32.mrf.mxu0
      %v2666 = vadd.f32 %v2458, %v2665
      %v2667 = vpop.f32.mrf.mxu0
      %2668 = vmatprep.mubr.bf16.mxu0 0
      %2669 = vmatmul.mubr.bf16.gmra.mxu0 %v2421
      %v2670 = vpop.f32.mrf.mxu0
      %v2671 = vadd.f32 %v2458, %v2670
      %v2672 = vpop.f32.mrf.mxu0
      %v2673 = vpop.f32.mrf.mxu0
      %v2674 = vadd.f32 %v2458, %v2673
      %v2675 = vpop.f32.mrf.mxu0
      %2676 = vmatprep.mubr.bf16.mxu0 0
      %2677 = vmatmul.mubr.bf16.gmra.mxu0 %v2422
      %v2678 = vpop.f32.mrf.mxu0
      %v2679 = vadd.f32 %v2458, %v2678
      %v2680 = vpop.f32.mrf.mxu0
      %v2681 = vpop.f32.mrf.mxu0
      %v2682 = vadd.f32 %v2458, %v2681
      %v2683 = vpop.f32.mrf.mxu0
      %2684 = vmatprep.mubr.bf16.mxu0 0
      %2685 = vmatmul.mubr.bf16.gmra.mxu0 %v2423
      %v2686 = vpop.f32.mrf.mxu0
      %v2687 = vadd.f32 %v2458, %v2686
      %v2688 = vpop.f32.mrf.mxu0
      %v2689 = vpop.f32.mrf.mxu0
      %v2690 = vadd.f32 %v2458, %v2689
      %v2691 = vpop.f32.mrf.mxu0
      %2692 = vmatprep.mubr.bf16.mxu0 0
      %2693 = vmatmul.mubr.bf16.gmra.mxu0 %v2424
      %v2694 = vpop.f32.mrf.mxu0
      %v2695 = vadd.f32 %v2458, %v2694
      %v2696 = vpop.f32.mrf.mxu0
      %v2697 = vpop.f32.mrf.mxu0
      %v2698 = vadd.f32 %v2458, %v2697
      %v2699 = vpop.f32.mrf.mxu0
      %2700 = vmatprep.mubr.bf16.mxu0 0
      %2701 = vmatmul.mubr.bf16.gmra.mxu0 %v2425
      %v2702 = vpop.f32.mrf.mxu0
      %v2703 = vadd.f32 %v2458, %v2702
      %v2704 = vpop.f32.mrf.mxu0
      %v2705 = vpop.f32.mrf.mxu0
      %v2706 = vadd.f32 %v2458, %v2705
      %v2707 = vpop.f32.mrf.mxu0
      %2708 = vmatprep.mubr.bf16.mxu0 0
      %2709 = vmatmul.mubr.bf16.gmra.mxu0 %v2426
      %v2710 = vpop.f32.mrf.mxu0
      %v2711 = vadd.f32 %v2458, %v2710
      %v2712 = vpop.f32.mrf.mxu0
      %v2713 = vpop.f32.mrf.mxu0
      %v2714 = vadd.f32 %v2458, %v2713
      %v2715 = vpop.f32.mrf.mxu0
      %2716 = vmatprep.mubr.bf16.mxu0 0
      %2717 = vmatmul.mubr.bf16.gmra.mxu0 %v2427
      %v2718 = vpop.f32.mrf.mxu0
      %v2719 = vadd.f32 %v2458, %v2718
      %v2720 = vpop.f32.mrf.mxu0
      %v2721 = vpop.f32.mrf.mxu0
      %v2722 = vadd.f32 %v2458, %v2721
      %v2723 = vpop.f32.mrf.mxu0
      %2724 = vmatprep.mubr.bf16.mxu0 0
      %2725 = vmatmul.mubr.bf16.gmra.mxu0 %v2428
      %v2726 = vpop.f32.mrf.mxu0
      %v2727 = vadd.f32 %v2458, %v2726
      %v2728 = vpop.f32.mrf.mxu0
      %v2729 = vpop.f32.mrf.mxu0
      %v2730 = vadd.f32 %v2458, %v2729
      %v2731 = vpop.f32.mrf.mxu0
      %2732 = vmatprep.mubr.bf16.mxu0 0
      %2733 = vmatmul.mubr.bf16.gmra.mxu0 %v2429
      %v2734 = vpop.f32.mrf.mxu0
      %v2735 = vadd.f32 %v2458, %v2734
      %v2736 = vpop.f32.mrf.mxu0
      %v2737 = vpop.f32.mrf.mxu0
      %v2738 = vadd.f32 %v2458, %v2737
      %v2739 = vpop.f32.mrf.mxu0
      %2740 = vmatprep.mubr.bf16.mxu0 0
      %2741 = vmatmul.mubr.bf16.gmra.mxu0 %v2430
      %v2742 = vpop.f32.mrf.mxu0
      %v2743 = vadd.f32 %v2458, %v2742
      %v2744 = vpop.f32.mrf.mxu0
      %v2745 = vpop.f32.mrf.mxu0
      %v2746 = vadd.f32 %v2458, %v2745
      %v2747 = vpop.f32.mrf.mxu0
      %2748 = vmatprep.mubr.bf16.mxu0 0
      %2749 = vmatmul.mubr.bf16.gmra.mxu0 %v2431
      %v2750 = vpop.f32.mrf.mxu0
      %v2751 = vadd.f32 %v2458, %v2750
      %v2752 = vpop.f32.mrf.mxu0
      %v2753 = vpop.f32.mrf.mxu0
      %v2754 = vadd.f32 %v2458, %v2753
      %v2755 = vpop.f32.mrf.mxu0
      %2756 = vmatprep.mubr.bf16.mxu0 0
      %2757 = vmatmul.mubr.bf16.gmra.mxu0 %v2432
      %v2758 = vpop.f32.mrf.mxu0
      %v2759 = vadd.f32 %v2458, %v2758
      %v2760 = vpop.f32.mrf.mxu0
      %v2761 = vpop.f32.mrf.mxu0
      %v2762 = vadd.f32 %v2458, %v2761
      %v2763 = vpop.f32.mrf.mxu0
      %2764 = vmatprep.mubr.bf16.mxu0 0
      %2765 = vmatmul.mubr.bf16.gmra.mxu0 %v2433
      %v2766 = vpop.f32.mrf.mxu0
      %v2767 = vadd.f32 %v2458, %v2766
      %v2768 = vpop.f32.mrf.mxu0
      %v2769 = vpop.f32.mrf.mxu0
      %v2770 = vadd.f32 %v2458, %v2769
      %v2771 = vpop.f32.mrf.mxu0
      %2772 = vmatprep.mubr.bf16.mxu0 0
      %2773 = vmatmul.mubr.bf16.gmra.mxu0 %v2434
      %v2774 = vpop.f32.mrf.mxu0
      %v2775 = vadd.f32 %v2458, %v2774
      %v2776 = vpop.f32.mrf.mxu0
      %v2777 = vpop.f32.mrf.mxu0
      %v2778 = vadd.f32 %v2458, %v2777
      %v2779 = vpop.f32.mrf.mxu0
      %2780 = vmatprep.mubr.bf16.mxu0 0
      %2781 = vmatmul.mubr.bf16.gmra.mxu0 %v2435
      %v2782 = vpop.f32.mrf.mxu0
      %v2783 = vadd.f32 %v2458, %v2782
      %v2784 = vpop.f32.mrf.mxu0
      %v2785 = vpop.f32.mrf.mxu0
      %v2786 = vadd.f32 %v2458, %v2785
      %v2787 = vpop.f32.mrf.mxu0
      %2788 = vmatprep.mubr.bf16.mxu0 0
      %2789 = vmatmul.mubr.bf16.gmra.mxu0 %v2436
      %v2790 = vpop.f32.mrf.mxu0
      %v2791 = vadd.f32 %v2458, %v2790
      %v2792 = vpop.f32.mrf.mxu0
      %v2793 = vpop.f32.mrf.mxu0
      %v2794 = vadd.f32 %v2458, %v2793
      %v2795 = vpop.f32.mrf.mxu0
      %2796 = vdwg.mxu0
      %v2797 = vmax.f32 %v2543, 0.0
      %v2798 = vmax.f32 %v2546, 0.0
      %v2799 = vmax.f32 %v2551, 0.0
      %v2800 = vmax.f32 %v2554, 0.0
      %v2801 = vmax.f32 %v2559, 0.0
      %v2802 = vmax.f32 %v2562, 0.0
      %v2803 = vmax.f32 %v2567, 0.0
      %v2804 = vmax.f32 %v2570, 0.0
      %v2805 = vmax.f32 %v2575, 0.0
      %v2806 = vmax.f32 %v2578, 0.0
      %v2807 = vmax.f32 %v2583, 0.0
      %v2808 = vmax.f32 %v2586, 0.0
      %v2809 = vmax.f32 %v2591, 0.0
      %v2810 = vmax.f32 %v2594, 0.0
      %v2811 = vmax.f32 %v2599, 0.0
      %v2812 = vmax.f32 %v2602, 0.0
      %v2813 = vmax.f32 %v2607, 0.0
      %v2814 = vmax.f32 %v2610, 0.0
      %v2815 = vmax.f32 %v2615, 0.0
      %v2816 = vmax.f32 %v2618, 0.0
      %v2817 = vmax.f32 %v2623, 0.0
      %v2818 = vmax.f32 %v2626, 0.0
      %v2819 = vmax.f32 %v2631, 0.0
      %v2820 = vmax.f32 %v2634, 0.0
      %v2821 = vmax.f32 %v2639, 0.0
      %v2822 = vmax.f32 %v2642, 0.0
      %v2823 = vmax.f32 %v2647, 0.0
      %v2824 = vmax.f32 %v2650, 0.0
      %v2825 = vmax.f32 %v2655, 0.0
      %v2826 = vmax.f32 %v2658, 0.0
      %v2827 = vmax.f32 %v2663, 0.0
      %v2828 = vmax.f32 %v2666, 0.0
      %v2829 = vmax.f32 %v2671, 0.0
      %v2830 = vmax.f32 %v2674, 0.0
      %v2831 = vmax.f32 %v2679, 0.0
      %v2832 = vmax.f32 %v2682, 0.0
      %v2833 = vmax.f32 %v2687, 0.0
      %v2834 = vmax.f32 %v2690, 0.0
      %v2835 = vmax.f32 %v2695, 0.0
      %v2836 = vmax.f32 %v2698, 0.0
      %v2837 = vmax.f32 %v2703, 0.0
      %v2838 = vmax.f32 %v2706, 0.0
      %v2839 = vmax.f32 %v2711, 0.0
      %v2840 = vmax.f32 %v2714, 0.0
      %v2841 = vmax.f32 %v2719, 0.0
      %v2842 = vmax.f32 %v2722, 0.0
      %v2843 = vmax.f32 %v2727, 0.0
      %v2844 = vmax.f32 %v2730, 0.0
      %v2845 = vmax.f32 %v2735, 0.0
      %v2846 = vmax.f32 %v2738, 0.0
      %v2847 = vmax.f32 %v2743, 0.0
      %v2848 = vmax.f32 %v2746, 0.0
      %v2849 = vmax.f32 %v2751, 0.0
      %v2850 = vmax.f32 %v2754, 0.0
      %v2851 = vmax.f32 %v2759, 0.0
      %v2852 = vmax.f32 %v2762, 0.0
      %v2853 = vmax.f32 %v2767, 0.0
      %v2854 = vmax.f32 %v2770, 0.0
      %v2855 = vmax.f32 %v2775, 0.0
      %v2856 = vmax.f32 %v2778, 0.0
      %v2857 = vmax.f32 %v2783, 0.0
      %v2858 = vmax.f32 %v2786, 0.0
      %v2859 = vmax.f32 %v2791, 0.0
      %v2860 = vmax.f32 %v2794, 0.0
      %v2861 = vpack.c.bf16 %v2798, %v2797
      %v2862 = vpack.c.bf16 %v2800, %v2799
      %v2863 = vpack.c.bf16 %v2802, %v2801
      %v2864 = vpack.c.bf16 %v2804, %v2803
      %v2865 = vpack.c.bf16 %v2806, %v2805
      %v2866 = vpack.c.bf16 %v2808, %v2807
      %v2867 = vpack.c.bf16 %v2810, %v2809
      %v2868 = vpack.c.bf16 %v2812, %v2811
      %v2869 = vpack.c.bf16 %v2814, %v2813
      %v2870 = vpack.c.bf16 %v2816, %v2815
      %v2871 = vpack.c.bf16 %v2818, %v2817
      %v2872 = vpack.c.bf16 %v2820, %v2819
      %v2873 = vpack.c.bf16 %v2822, %v2821
      %v2874 = vpack.c.bf16 %v2824, %v2823
      %v2875 = vpack.c.bf16 %v2826, %v2825
      %v2876 = vpack.c.bf16 %v2828, %v2827
      %v2877 = vpack.c.bf16 %v2830, %v2829
      %v2878 = vpack.c.bf16 %v2832, %v2831
      %v2879 = vpack.c.bf16 %v2834, %v2833
      %v2880 = vpack.c.bf16 %v2836, %v2835
      %v2881 = vpack.c.bf16 %v2838, %v2837
      %v2882 = vpack.c.bf16 %v2840, %v2839
      %v2883 = vpack.c.bf16 %v2842, %v2841
      %v2884 = vpack.c.bf16 %v2844, %v2843
      %v2885 = vpack.c.bf16 %v2846, %v2845
      %v2886 = vpack.c.bf16 %v2848, %v2847
      %v2887 = vpack.c.bf16 %v2850, %v2849
      %v2888 = vpack.c.bf16 %v2852, %v2851
      %v2889 = vpack.c.bf16 %v2854, %v2853
      %v2890 = vpack.c.bf16 %v2856, %v2855
      %v2891 = vpack.c.bf16 %v2858, %v2857
      %v2892 = vpack.c.bf16 %v2860, %v2859
      %v2893 = vld [vmem:[%s9] sm:$0xf]
      %v2894 = vld [vmem:[%s9 + $0x4] sm:$0xf]
      %v2895 = vld [vmem:[%s9 + $0x8] sm:$0xf]
      %v2896 = vld [vmem:[%s9 + $0xc] sm:$0xf]
      %v2897 = vld [vmem:[%s9 + $0x10] sm:$0xf]
      %v2898 = vld [vmem:[%s9 + $0x14] sm:$0xf]
      %v2899 = vld [vmem:[%s9 + $0x18] sm:$0xf]
      %v2900 = vld [vmem:[%s9 + $0x1c] sm:$0xf]
      %v2901 = vld [vmem:[%s9 + $0x20] sm:$0xf]
      %v2902 = vld [vmem:[%s9 + $0x24] sm:$0xf]
      %v2903 = vld [vmem:[%s9 + $0x28] sm:$0xf]
      %v2904 = vld [vmem:[%s9 + $0x2c] sm:$0xf]
      %v2905 = vld [vmem:[%s9 + $0x30] sm:$0xf]
      %v2906 = vld [vmem:[%s9 + $0x34] sm:$0xf]
      %v2907 = vld [vmem:[%s9 + $0x38] sm:$0xf]
      %v2908 = vld [vmem:[%s9 + $0x3c] sm:$0xf]
      %v2909 = vld [vmem:[#allocation2] sm:$0x1]
      %v2911 = vlaneseq
      %v2912 = vshrl.u32 %v2911, 7
      %v2913 = vsub.s32 0, %v2912
      %v2914 = vrot.slane %v2909, %v2913
      %v2932 = vunpack.c.l.b16 %v2893
      %v2933 = vunpack.c.l.b16 %v2894
      %v2934 = vunpack.c.l.b16 %v2895
      %v2935 = vunpack.c.l.b16 %v2896
      %v2936 = vunpack.c.l.b16 %v2897
      %v2937 = vunpack.c.l.b16 %v2898
      %v2938 = vunpack.c.l.b16 %v2899
      %v2939 = vunpack.c.l.b16 %v2900
      %v2940 = vunpack.c.l.b16 %v2901
      %v2941 = vunpack.c.l.b16 %v2902
      %v2942 = vunpack.c.l.b16 %v2903
      %v2943 = vunpack.c.l.b16 %v2904
      %v2944 = vunpack.c.l.b16 %v2905
      %v2945 = vunpack.c.l.b16 %v2906
      %v2946 = vunpack.c.l.b16 %v2907
      %v2947 = vunpack.c.l.b16 %v2908
      %v2948 = vpack.c.b16 %v2933, %v2932
      %v2949 = vpack.c.b16 %v2935, %v2934
      %v2950 = vpack.c.b16 %v2937, %v2936
      %v2951 = vpack.c.b16 %v2939, %v2938
      %v2952 = vpack.c.b16 %v2941, %v2940
      %v2953 = vpack.c.b16 %v2943, %v2942
      %v2954 = vpack.c.b16 %v2945, %v2944
      %v2955 = vpack.c.b16 %v2947, %v2946
      %2964 = vmatprep.subr.bf16.mxu0 0
      %2965 = vmatpush1.bf16.msra.mxu0 %v2955
      %2966 = vmatprep.subr.bf16.mxu0 0
      %2967 = vmatpush1.bf16.msra.mxu0 %v2954
      %2968 = vmatprep.subr.bf16.mxu0 0
      %2969 = vmatpush1.bf16.msra.mxu0 %v2953
      %2970 = vmatprep.subr.bf16.mxu0 0
      %2971 = vmatpush1.bf16.msra.mxu0 %v2952
      %2972 = vmatprep.subr.bf16.mxu0 0
      %2973 = vmatpush1.bf16.msra.mxu0 %v2951
      %2974 = vmatprep.subr.bf16.mxu0 0
      %2975 = vmatpush1.bf16.msra.mxu0 %v2950
      %2976 = vmatprep.subr.bf16.mxu0 0
      %2977 = vmatpush1.bf16.msra.mxu0 %v2949
      %2978 = vmatprep.subr.bf16.mxu0 0
      %2979 = vmatpush1.bf16.msra.mxu0 %v2948
      %2980 = vmatprep.subr.bf16.mxu0 0
      %2981 = vmatpush2.bf16.msra.mxu0 0
      %2982 = vmatprep.subr.bf16.mxu0 0
      %2983 = vmatpush2.bf16.msra.mxu0 0
      %2984 = vmatprep.subr.bf16.mxu0 0
      %2985 = vmatpush2.bf16.msra.mxu0 0
      %2986 = vmatprep.subr.bf16.mxu0 0
      %2987 = vmatpush2.bf16.msra.mxu0 0
      %2988 = vmatprep.subr.bf16.mxu0 0
      %2989 = vmatpush2.bf16.msra.mxu0 0
      %2990 = vmatprep.subr.bf16.mxu0 0
      %2991 = vmatpush2.bf16.msra.mxu0 0
      %2992 = vmatprep.subr.bf16.mxu0 0
      %2993 = vmatpush2.bf16.msra.mxu0 0
      %2994 = vmatprep.subr.bf16.mxu0 0
      %2995 = vmatpush2.bf16.msra.mxu0 0
      %2996 = vmatprep.mubr.bf16.mxu0 0
      %2997 = vmatmul.mubr.bf16.gmra.mxu0 %v2861
      %v2998 = vpop.f32.mrf.mxu0
      %v2999 = vadd.f32 %v2914, %v2998
      %v3000 = vpop.f32.mrf.mxu0
      %v3001 = vpop.f32.mrf.mxu0
      %v3002 = vadd.f32 %v2914, %v3001
      %v3003 = vpop.f32.mrf.mxu0
      %3004 = vmatprep.mubr.bf16.mxu0 0
      %3005 = vmatmul.mubr.bf16.gmra.mxu0 %v2862
      %v3006 = vpop.f32.mrf.mxu0
      %v3007 = vadd.f32 %v2914, %v3006
      %v3008 = vpop.f32.mrf.mxu0
      %v3009 = vpop.f32.mrf.mxu0
      %v3010 = vadd.f32 %v2914, %v3009
      %v3011 = vpop.f32.mrf.mxu0
      %3012 = vmatprep.mubr.bf16.mxu0 0
      %3013 = vmatmul.mubr.bf16.gmra.mxu0 %v2863
      %v3014 = vpop.f32.mrf.mxu0
      %v3015 = vadd.f32 %v2914, %v3014
      %v3016 = vpop.f32.mrf.mxu0
      %v3017 = vpop.f32.mrf.mxu0
      %v3018 = vadd.f32 %v2914, %v3017
      %v3019 = vpop.f32.mrf.mxu0
      %3020 = vmatprep.mubr.bf16.mxu0 0
      %3021 = vmatmul.mubr.bf16.gmra.mxu0 %v2864
      %v3022 = vpop.f32.mrf.mxu0
      %v3023 = vadd.f32 %v2914, %v3022
      %v3024 = vpop.f32.mrf.mxu0
      %v3025 = vpop.f32.mrf.mxu0
      %v3026 = vadd.f32 %v2914, %v3025
      %v3027 = vpop.f32.mrf.mxu0
      %3028 = vmatprep.mubr.bf16.mxu0 0
      %3029 = vmatmul.mubr.bf16.gmra.mxu0 %v2865
      %v3030 = vpop.f32.mrf.mxu0
      %v3031 = vadd.f32 %v2914, %v3030
      %v3032 = vpop.f32.mrf.mxu0
      %v3033 = vpop.f32.mrf.mxu0
      %v3034 = vadd.f32 %v2914, %v3033
      %v3035 = vpop.f32.mrf.mxu0
      %3036 = vmatprep.mubr.bf16.mxu0 0
      %3037 = vmatmul.mubr.bf16.gmra.mxu0 %v2866
      %v3038 = vpop.f32.mrf.mxu0
      %v3039 = vadd.f32 %v2914, %v3038
      %v3040 = vpop.f32.mrf.mxu0
      %v3041 = vpop.f32.mrf.mxu0
      %v3042 = vadd.f32 %v2914, %v3041
      %v3043 = vpop.f32.mrf.mxu0
      %3044 = vmatprep.mubr.bf16.mxu0 0
      %3045 = vmatmul.mubr.bf16.gmra.mxu0 %v2867
      %v3046 = vpop.f32.mrf.mxu0
      %v3047 = vadd.f32 %v2914, %v3046
      %v3048 = vpop.f32.mrf.mxu0
      %v3049 = vpop.f32.mrf.mxu0
      %v3050 = vadd.f32 %v2914, %v3049
      %v3051 = vpop.f32.mrf.mxu0
      %3052 = vmatprep.mubr.bf16.mxu0 0
      %3053 = vmatmul.mubr.bf16.gmra.mxu0 %v2868
      %v3054 = vpop.f32.mrf.mxu0
      %v3055 = vadd.f32 %v2914, %v3054
      %v3056 = vpop.f32.mrf.mxu0
      %v3057 = vpop.f32.mrf.mxu0
      %v3058 = vadd.f32 %v2914, %v3057
      %v3059 = vpop.f32.mrf.mxu0
      %3060 = vmatprep.mubr.bf16.mxu0 0
      %3061 = vmatmul.mubr.bf16.gmra.mxu0 %v2869
      %v3062 = vpop.f32.mrf.mxu0
      %v3063 = vadd.f32 %v2914, %v3062
      %v3064 = vpop.f32.mrf.mxu0
      %v3065 = vpop.f32.mrf.mxu0
      %v3066 = vadd.f32 %v2914, %v3065
      %v3067 = vpop.f32.mrf.mxu0
      %3068 = vmatprep.mubr.bf16.mxu0 0
      %3069 = vmatmul.mubr.bf16.gmra.mxu0 %v2870
      %v3070 = vpop.f32.mrf.mxu0
      %v3071 = vadd.f32 %v2914, %v3070
      %v3072 = vpop.f32.mrf.mxu0
      %v3073 = vpop.f32.mrf.mxu0
      %v3074 = vadd.f32 %v2914, %v3073
      %v3075 = vpop.f32.mrf.mxu0
      %3076 = vmatprep.mubr.bf16.mxu0 0
      %3077 = vmatmul.mubr.bf16.gmra.mxu0 %v2871
      %v3078 = vpop.f32.mrf.mxu0
      %v3079 = vadd.f32 %v2914, %v3078
      %v3080 = vpop.f32.mrf.mxu0
      %v3081 = vpop.f32.mrf.mxu0
      %v3082 = vadd.f32 %v2914, %v3081
      %v3083 = vpop.f32.mrf.mxu0
      %3084 = vmatprep.mubr.bf16.mxu0 0
      %3085 = vmatmul.mubr.bf16.gmra.mxu0 %v2872
      %v3086 = vpop.f32.mrf.mxu0
      %v3087 = vadd.f32 %v2914, %v3086
      %v3088 = vpop.f32.mrf.mxu0
      %v3089 = vpop.f32.mrf.mxu0
      %v3090 = vadd.f32 %v2914, %v3089
      %v3091 = vpop.f32.mrf.mxu0
      %3092 = vmatprep.mubr.bf16.mxu0 0
      %3093 = vmatmul.mubr.bf16.gmra.mxu0 %v2873
      %v3094 = vpop.f32.mrf.mxu0
      %v3095 = vadd.f32 %v2914, %v3094
      %v3096 = vpop.f32.mrf.mxu0
      %v3097 = vpop.f32.mrf.mxu0
      %v3098 = vadd.f32 %v2914, %v3097
      %v3099 = vpop.f32.mrf.mxu0
      %3100 = vmatprep.mubr.bf16.mxu0 0
      %3101 = vmatmul.mubr.bf16.gmra.mxu0 %v2874
      %v3102 = vpop.f32.mrf.mxu0
      %v3103 = vadd.f32 %v2914, %v3102
      %v3104 = vpop.f32.mrf.mxu0
      %v3105 = vpop.f32.mrf.mxu0
      %v3106 = vadd.f32 %v2914, %v3105
      %v3107 = vpop.f32.mrf.mxu0
      %3108 = vmatprep.mubr.bf16.mxu0 0
      %3109 = vmatmul.mubr.bf16.gmra.mxu0 %v2875
      %v3110 = vpop.f32.mrf.mxu0
      %v3111 = vadd.f32 %v2914, %v3110
      %v3112 = vpop.f32.mrf.mxu0
      %v3113 = vpop.f32.mrf.mxu0
      %v3114 = vadd.f32 %v2914, %v3113
      %v3115 = vpop.f32.mrf.mxu0
      %3116 = vmatprep.mubr.bf16.mxu0 0
      %3117 = vmatmul.mubr.bf16.gmra.mxu0 %v2876
      %v3118 = vpop.f32.mrf.mxu0
      %v3119 = vadd.f32 %v2914, %v3118
      %v3120 = vpop.f32.mrf.mxu0
      %v3121 = vpop.f32.mrf.mxu0
      %v3122 = vadd.f32 %v2914, %v3121
      %v3123 = vpop.f32.mrf.mxu0
      %3124 = vmatprep.mubr.bf16.mxu0 0
      %3125 = vmatmul.mubr.bf16.gmra.mxu0 %v2877
      %v3126 = vpop.f32.mrf.mxu0
      %v3127 = vadd.f32 %v2914, %v3126
      %v3128 = vpop.f32.mrf.mxu0
      %v3129 = vpop.f32.mrf.mxu0
      %v3130 = vadd.f32 %v2914, %v3129
      %v3131 = vpop.f32.mrf.mxu0
      %3132 = vmatprep.mubr.bf16.mxu0 0
      %3133 = vmatmul.mubr.bf16.gmra.mxu0 %v2878
      %v3134 = vpop.f32.mrf.mxu0
      %v3135 = vadd.f32 %v2914, %v3134
      %v3136 = vpop.f32.mrf.mxu0
      %v3137 = vpop.f32.mrf.mxu0
      %v3138 = vadd.f32 %v2914, %v3137
      %v3139 = vpop.f32.mrf.mxu0
      %3140 = vmatprep.mubr.bf16.mxu0 0
      %3141 = vmatmul.mubr.bf16.gmra.mxu0 %v2879
      %v3142 = vpop.f32.mrf.mxu0
      %v3143 = vadd.f32 %v2914, %v3142
      %v3144 = vpop.f32.mrf.mxu0
      %v3145 = vpop.f32.mrf.mxu0
      %v3146 = vadd.f32 %v2914, %v3145
      %v3147 = vpop.f32.mrf.mxu0
      %3148 = vmatprep.mubr.bf16.mxu0 0
      %3149 = vmatmul.mubr.bf16.gmra.mxu0 %v2880
      %v3150 = vpop.f32.mrf.mxu0
      %v3151 = vadd.f32 %v2914, %v3150
      %v3152 = vpop.f32.mrf.mxu0
      %v3153 = vpop.f32.mrf.mxu0
      %v3154 = vadd.f32 %v2914, %v3153
      %v3155 = vpop.f32.mrf.mxu0
      %3156 = vmatprep.mubr.bf16.mxu0 0
      %3157 = vmatmul.mubr.bf16.gmra.mxu0 %v2881
      %v3158 = vpop.f32.mrf.mxu0
      %v3159 = vadd.f32 %v2914, %v3158
      %v3160 = vpop.f32.mrf.mxu0
      %v3161 = vpop.f32.mrf.mxu0
      %v3162 = vadd.f32 %v2914, %v3161
      %v3163 = vpop.f32.mrf.mxu0
      %3164 = vmatprep.mubr.bf16.mxu0 0
      %3165 = vmatmul.mubr.bf16.gmra.mxu0 %v2882
      %v3166 = vpop.f32.mrf.mxu0
      %v3167 = vadd.f32 %v2914, %v3166
      %v3168 = vpop.f32.mrf.mxu0
      %v3169 = vpop.f32.mrf.mxu0
      %v3170 = vadd.f32 %v2914, %v3169
      %v3171 = vpop.f32.mrf.mxu0
      %3172 = vmatprep.mubr.bf16.mxu0 0
      %3173 = vmatmul.mubr.bf16.gmra.mxu0 %v2883
      %v3174 = vpop.f32.mrf.mxu0
      %v3175 = vadd.f32 %v2914, %v3174
      %v3176 = vpop.f32.mrf.mxu0
      %v3177 = vpop.f32.mrf.mxu0
      %v3178 = vadd.f32 %v2914, %v3177
      %v3179 = vpop.f32.mrf.mxu0
      %3180 = vmatprep.mubr.bf16.mxu0 0
      %3181 = vmatmul.mubr.bf16.gmra.mxu0 %v2884
      %v3182 = vpop.f32.mrf.mxu0
      %v3183 = vadd.f32 %v2914, %v3182
      %v3184 = vpop.f32.mrf.mxu0
      %v3185 = vpop.f32.mrf.mxu0
      %v3186 = vadd.f32 %v2914, %v3185
      %v3187 = vpop.f32.mrf.mxu0
      %3188 = vmatprep.mubr.bf16.mxu0 0
      %3189 = vmatmul.mubr.bf16.gmra.mxu0 %v2885
      %v3190 = vpop.f32.mrf.mxu0
      %v3191 = vadd.f32 %v2914, %v3190
      %v3192 = vpop.f32.mrf.mxu0
      %v3193 = vpop.f32.mrf.mxu0
      %v3194 = vadd.f32 %v2914, %v3193
      %v3195 = vpop.f32.mrf.mxu0
      %3196 = vmatprep.mubr.bf16.mxu0 0
      %3197 = vmatmul.mubr.bf16.gmra.mxu0 %v2886
      %v3198 = vpop.f32.mrf.mxu0
      %v3199 = vadd.f32 %v2914, %v3198
      %v3200 = vpop.f32.mrf.mxu0
      %v3201 = vpop.f32.mrf.mxu0
      %v3202 = vadd.f32 %v2914, %v3201
      %v3203 = vpop.f32.mrf.mxu0
      %3204 = vmatprep.mubr.bf16.mxu0 0
      %3205 = vmatmul.mubr.bf16.gmra.mxu0 %v2887
      %v3206 = vpop.f32.mrf.mxu0
      %v3207 = vadd.f32 %v2914, %v3206
      %v3208 = vpop.f32.mrf.mxu0
      %v3209 = vpop.f32.mrf.mxu0
      %v3210 = vadd.f32 %v2914, %v3209
      %v3211 = vpop.f32.mrf.mxu0
      %3212 = vmatprep.mubr.bf16.mxu0 0
      %3213 = vmatmul.mubr.bf16.gmra.mxu0 %v2888
      %v3214 = vpop.f32.mrf.mxu0
      %v3215 = vadd.f32 %v2914, %v3214
      %v3216 = vpop.f32.mrf.mxu0
      %v3217 = vpop.f32.mrf.mxu0
      %v3218 = vadd.f32 %v2914, %v3217
      %v3219 = vpop.f32.mrf.mxu0
      %3220 = vmatprep.mubr.bf16.mxu0 0
      %3221 = vmatmul.mubr.bf16.gmra.mxu0 %v2889
      %v3222 = vpop.f32.mrf.mxu0
      %v3223 = vadd.f32 %v2914, %v3222
      %v3224 = vpop.f32.mrf.mxu0
      %v3225 = vpop.f32.mrf.mxu0
      %v3226 = vadd.f32 %v2914, %v3225
      %v3227 = vpop.f32.mrf.mxu0
      %3228 = vmatprep.mubr.bf16.mxu0 0
      %3229 = vmatmul.mubr.bf16.gmra.mxu0 %v2890
      %v3230 = vpop.f32.mrf.mxu0
      %v3231 = vadd.f32 %v2914, %v3230
      %v3232 = vpop.f32.mrf.mxu0
      %v3233 = vpop.f32.mrf.mxu0
      %v3234 = vadd.f32 %v2914, %v3233
      %v3235 = vpop.f32.mrf.mxu0
      %3236 = vmatprep.mubr.bf16.mxu0 0
      %3237 = vmatmul.mubr.bf16.gmra.mxu0 %v2891
      %v3238 = vpop.f32.mrf.mxu0
      %v3239 = vadd.f32 %v2914, %v3238
      %v3240 = vpop.f32.mrf.mxu0
      %v3241 = vpop.f32.mrf.mxu0
      %v3242 = vadd.f32 %v2914, %v3241
      %v3243 = vpop.f32.mrf.mxu0
      %3244 = vmatprep.mubr.bf16.mxu0 0
      %3245 = vmatmul.mubr.bf16.gmra.mxu0 %v2892
      %v3246 = vpop.f32.mrf.mxu0
      %v3247 = vadd.f32 %v2914, %v3246
      %v3248 = vpop.f32.mrf.mxu0
      %v3249 = vpop.f32.mrf.mxu0
      %v3250 = vadd.f32 %v2914, %v3249
      %v3251 = vpop.f32.mrf.mxu0
      %3252 = vdwg.mxu0
      %v3253 = vmul.f32 %v2999, 1.442695
      %v3254 = vpow.pop %v3253
      %v3255 = vmul.f32 %v3002, 1.442695
      %v3256 = vpow.pop %v3255
      %v3257 = vmul.f32 %v3007, 1.442695
      %v3258 = vpow.pop %v3257
      %v3259 = vmul.f32 %v3010, 1.442695
      %v3260 = vpow.pop %v3259
      %v3261 = vmul.f32 %v3015, 1.442695
      %v3262 = vpow.pop %v3261
      %v3263 = vmul.f32 %v3018, 1.442695
      %v3264 = vpow.pop %v3263
      %v3265 = vmul.f32 %v3023, 1.442695
      %v3266 = vpow.pop %v3265
      %v3267 = vmul.f32 %v3026, 1.442695
      %v3268 = vpow.pop %v3267
      %v3269 = vmul.f32 %v3031, 1.442695
      %v3270 = vpow.pop %v3269
      %v3271 = vmul.f32 %v3034, 1.442695
      %v3272 = vpow.pop %v3271
      %v3273 = vmul.f32 %v3039, 1.442695
      %v3274 = vpow.pop %v3273
      %v3275 = vmul.f32 %v3042, 1.442695
      %v3276 = vpow.pop %v3275
      %v3277 = vmul.f32 %v3047, 1.442695
      %v3278 = vpow.pop %v3277
      %v3279 = vmul.f32 %v3050, 1.442695
      %v3280 = vpow.pop %v3279
      %v3281 = vmul.f32 %v3055, 1.442695
      %v3282 = vpow.pop %v3281
      %v3283 = vmul.f32 %v3058, 1.442695
      %v3284 = vpow.pop %v3283
      %v3285 = vmul.f32 %v3063, 1.442695
      %v3286 = vpow.pop %v3285
      %v3287 = vmul.f32 %v3066, 1.442695
      %v3288 = vpow.pop %v3287
      %v3289 = vmul.f32 %v3071, 1.442695
      %v3290 = vpow.pop %v3289
      %v3291 = vmul.f32 %v3074, 1.442695
      %v3292 = vpow.pop %v3291
      %v3293 = vmul.f32 %v3079, 1.442695
      %v3294 = vpow.pop %v3293
      %v3295 = vmul.f32 %v3082, 1.442695
      %v3296 = vpow.pop %v3295
      %v3297 = vmul.f32 %v3087, 1.442695
      %v3298 = vpow.pop %v3297
      %v3299 = vmul.f32 %v3090, 1.442695
      %v3300 = vpow.pop %v3299
      %v3301 = vmul.f32 %v3095, 1.442695
      %v3302 = vpow.pop %v3301
      %v3303 = vmul.f32 %v3098, 1.442695
      %v3304 = vpow.pop %v3303
      %v3305 = vmul.f32 %v3103, 1.442695
      %v3306 = vpow.pop %v3305
      %v3307 = vmul.f32 %v3106, 1.442695
      %v3308 = vpow.pop %v3307
      %v3309 = vmul.f32 %v3111, 1.442695
      %v3310 = vpow.pop %v3309
      %v3311 = vmul.f32 %v3114, 1.442695
      %v3312 = vpow.pop %v3311
      %v3313 = vmul.f32 %v3119, 1.442695
      %v3314 = vpow.pop %v3313
      %v3315 = vmul.f32 %v3122, 1.442695
      %v3316 = vpow.pop %v3315
      %v3317 = vmul.f32 %v3127, 1.442695
      %v3318 = vpow.pop %v3317
      %v3319 = vmul.f32 %v3130, 1.442695
      %v3320 = vpow.pop %v3319
      %v3321 = vmul.f32 %v3135, 1.442695
      %v3322 = vpow.pop %v3321
      %v3323 = vmul.f32 %v3138, 1.442695
      %v3324 = vpow.pop %v3323
      %v3325 = vmul.f32 %v3143, 1.442695
      %v3326 = vpow.pop %v3325
      %v3327 = vmul.f32 %v3146, 1.442695
      %v3328 = vpow.pop %v3327
      %v3329 = vmul.f32 %v3151, 1.442695
      %v3330 = vpow.pop %v3329
      %v3331 = vmul.f32 %v3154, 1.442695
      %v3332 = vpow.pop %v3331
      %v3333 = vmul.f32 %v3159, 1.442695
      %v3334 = vpow.pop %v3333
      %v3335 = vmul.f32 %v3162, 1.442695
      %v3336 = vpow.pop %v3335
      %v3337 = vmul.f32 %v3167, 1.442695
      %v3338 = vpow.pop %v3337
      %v3339 = vmul.f32 %v3170, 1.442695
      %v3340 = vpow.pop %v3339
      %v3341 = vmul.f32 %v3175, 1.442695
      %v3342 = vpow.pop %v3341
      %v3343 = vmul.f32 %v3178, 1.442695
      %v3344 = vpow.pop %v3343
      %v3345 = vmul.f32 %v3183, 1.442695
      %v3346 = vpow.pop %v3345
      %v3347 = vmul.f32 %v3186, 1.442695
      %v3348 = vpow.pop %v3347
      %v3349 = vmul.f32 %v3191, 1.442695
      %v3350 = vpow.pop %v3349
      %v3351 = vmul.f32 %v3194, 1.442695
      %v3352 = vpow.pop %v3351
      %v3353 = vmul.f32 %v3199, 1.442695
      %v3354 = vpow.pop %v3353
      %v3355 = vmul.f32 %v3202, 1.442695
      %v3356 = vpow.pop %v3355
      %v3357 = vmul.f32 %v3207, 1.442695
      %v3358 = vpow.pop %v3357
      %v3359 = vmul.f32 %v3210, 1.442695
      %v3360 = vpow.pop %v3359
      %v3361 = vmul.f32 %v3215, 1.442695
      %v3362 = vpow.pop %v3361
      %v3363 = vmul.f32 %v3218, 1.442695
      %v3364 = vpow.pop %v3363
      %v3365 = vmul.f32 %v3223, 1.442695
      %v3366 = vpow.pop %v3365
      %v3367 = vmul.f32 %v3226, 1.442695
      %v3368 = vpow.pop %v3367
      %v3369 = vmul.f32 %v3231, 1.442695
      %v3370 = vpow.pop %v3369
      %v3371 = vmul.f32 %v3234, 1.442695
      %v3372 = vpow.pop %v3371
      %v3373 = vmul.f32 %v3239, 1.442695
      %v3374 = vpow.pop %v3373
      %v3375 = vmul.f32 %v3242, 1.442695
      %v3376 = vpow.pop %v3375
      %v3377 = vmul.f32 %v3247, 1.442695
      %v3378 = vpow.pop %v3377
      %v3379 = vmul.f32 %v3250, 1.442695
      %v3380 = vpow.pop %v3379
      %v3381 = vadd.f32 %v3254, 1.0
      %v3382 = vadd.f32 %v3256, 1.0
      %v3383 = vadd.f32 %v3258, 1.0
      %v3384 = vadd.f32 %v3260, 1.0
      %v3385 = vadd.f32 %v3262, 1.0
      %v3386 = vadd.f32 %v3264, 1.0
      %v3387 = vadd.f32 %v3266, 1.0
      %v3388 = vadd.f32 %v3268, 1.0
      %v3389 = vadd.f32 %v3270, 1.0
      %v3390 = vadd.f32 %v3272, 1.0
      %v3391 = vadd.f32 %v3274, 1.0
      %v3392 = vadd.f32 %v3276, 1.0
      %v3393 = vadd.f32 %v3278, 1.0
      %v3394 = vadd.f32 %v3280, 1.0
      %v3395 = vadd.f32 %v3282, 1.0
      %v3396 = vadd.f32 %v3284, 1.0
      %v3397 = vadd.f32 %v3286, 1.0
      %v3398 = vadd.f32 %v3288, 1.0
      %v3399 = vadd.f32 %v3290, 1.0
      %v3400 = vadd.f32 %v3292, 1.0
      %v3401 = vadd.f32 %v3294, 1.0
      %v3402 = vadd.f32 %v3296, 1.0
      %v3403 = vadd.f32 %v3298, 1.0
      %v3404 = vadd.f32 %v3300, 1.0
      %v3405 = vadd.f32 %v3302, 1.0
      %v3406 = vadd.f32 %v3304, 1.0
      %v3407 = vadd.f32 %v3306, 1.0
      %v3408 = vadd.f32 %v3308, 1.0
      %v3409 = vadd.f32 %v3310, 1.0
      %v3410 = vadd.f32 %v3312, 1.0
      %v3411 = vadd.f32 %v3314, 1.0
      %v3412 = vadd.f32 %v3316, 1.0
      %v3413 = vadd.f32 %v3318, 1.0
      %v3414 = vadd.f32 %v3320, 1.0
      %v3415 = vadd.f32 %v3322, 1.0
      %v3416 = vadd.f32 %v3324, 1.0
      %v3417 = vadd.f32 %v3326, 1.0
      %v3418 = vadd.f32 %v3328, 1.0
      %v3419 = vadd.f32 %v3330, 1.0
      %v3420 = vadd.f32 %v3332, 1.0
      %v3421 = vadd.f32 %v3334, 1.0
      %v3422 = vadd.f32 %v3336, 1.0
      %v3423 = vadd.f32 %v3338, 1.0
      %v3424 = vadd.f32 %v3340, 1.0
      %v3425 = vadd.f32 %v3342, 1.0
      %v3426 = vadd.f32 %v3344, 1.0
      %v3427 = vadd.f32 %v3346, 1.0
      %v3428 = vadd.f32 %v3348, 1.0
      %v3429 = vadd.f32 %v3350, 1.0
      %v3430 = vadd.f32 %v3352, 1.0
      %v3431 = vadd.f32 %v3354, 1.0
      %v3432 = vadd.f32 %v3356, 1.0
      %v3433 = vadd.f32 %v3358, 1.0
      %v3434 = vadd.f32 %v3360, 1.0
      %v3435 = vadd.f32 %v3362, 1.0
      %v3436 = vadd.f32 %v3364, 1.0
      %v3437 = vadd.f32 %v3366, 1.0
      %v3438 = vadd.f32 %v3368, 1.0
      %v3439 = vadd.f32 %v3370, 1.0
      %v3440 = vadd.f32 %v3372, 1.0
      %v3441 = vadd.f32 %v3374, 1.0
      %v3442 = vadd.f32 %v3376, 1.0
      %v3443 = vadd.f32 %v3378, 1.0
      %v3444 = vadd.f32 %v3380, 1.0
      %v3445 = vrcp.pop %v3381
      %v3446 = vrcp.pop %v3382
      %v3447 = vrcp.pop %v3383
      %v3448 = vrcp.pop %v3384
      %v3449 = vrcp.pop %v3385
      %v3450 = vrcp.pop %v3386
      %v3451 = vrcp.pop %v3387
      %v3452 = vrcp.pop %v3388
      %v3453 = vrcp.pop %v3389
      %v3454 = vrcp.pop %v3390
      %v3455 = vrcp.pop %v3391
      %v3456 = vrcp.pop %v3392
      %v3457 = vrcp.pop %v3393
      %v3458 = vrcp.pop %v3394
      %v3459 = vrcp.pop %v3395
      %v3460 = vrcp.pop %v3396
      %v3461 = vrcp.pop %v3397
      %v3462 = vrcp.pop %v3398
      %v3463 = vrcp.pop %v3399
      %v3464 = vrcp.pop %v3400
      %v3465 = vrcp.pop %v3401
      %v3466 = vrcp.pop %v3402
      %v3467 = vrcp.pop %v3403
      %v3468 = vrcp.pop %v3404
      %v3469 = vrcp.pop %v3405
      %v3470 = vrcp.pop %v3406
      %v3471 = vrcp.pop %v3407
      %v3472 = vrcp.pop %v3408
      %v3473 = vrcp.pop %v3409
      %v3474 = vrcp.pop %v3410
      %v3475 = vrcp.pop %v3411
      %v3476 = vrcp.pop %v3412
      %v3477 = vrcp.pop %v3413
      %v3478 = vrcp.pop %v3414
      %v3479 = vrcp.pop %v3415
      %v3480 = vrcp.pop %v3416
      %v3481 = vrcp.pop %v3417
      %v3482 = vrcp.pop %v3418
      %v3483 = vrcp.pop %v3419
      %v3484 = vrcp.pop %v3420
      %v3485 = vrcp.pop %v3421
      %v3486 = vrcp.pop %v3422
      %v3487 = vrcp.pop %v3423
      %v3488 = vrcp.pop %v3424
      %v3489 = vrcp.pop %v3425
      %v3490 = vrcp.pop %v3426
      %v3491 = vrcp.pop %v3427
      %v3492 = vrcp.pop %v3428
      %v3493 = vrcp.pop %v3429
      %v3494 = vrcp.pop %v3430
      %v3495 = vrcp.pop %v3431
      %v3496 = vrcp.pop %v3432
      %v3497 = vrcp.pop %v3433
      %v3498 = vrcp.pop %v3434
      %v3499 = vrcp.pop %v3435
      %v3500 = vrcp.pop %v3436
      %v3501 = vrcp.pop %v3437
      %v3502 = vrcp.pop %v3438
      %v3503 = vrcp.pop %v3439
      %v3504 = vrcp.pop %v3440
      %v3505 = vrcp.pop %v3441
      %v3506 = vrcp.pop %v3442
      %v3507 = vrcp.pop %v3443
      %v3508 = vrcp.pop %v3444
      %v3509 = vsub.f32 1.0, %v3445
      %v3510 = vsub.f32 1.0, %v3446
      %v3511 = vsub.f32 1.0, %v3447
      %v3512 = vsub.f32 1.0, %v3448
      %v3513 = vsub.f32 1.0, %v3449
      %v3514 = vsub.f32 1.0, %v3450
      %v3515 = vsub.f32 1.0, %v3451
      %v3516 = vsub.f32 1.0, %v3452
      %v3517 = vsub.f32 1.0, %v3453
      %v3518 = vsub.f32 1.0, %v3454
      %v3519 = vsub.f32 1.0, %v3455
      %v3520 = vsub.f32 1.0, %v3456
      %v3521 = vsub.f32 1.0, %v3457
      %v3522 = vsub.f32 1.0, %v3458
      %v3523 = vsub.f32 1.0, %v3459
      %v3524 = vsub.f32 1.0, %v3460
      %v3525 = vsub.f32 1.0, %v3461
      %v3526 = vsub.f32 1.0, %v3462
      %v3527 = vsub.f32 1.0, %v3463
      %v3528 = vsub.f32 1.0, %v3464
      %v3529 = vsub.f32 1.0, %v3465
      %v3530 = vsub.f32 1.0, %v3466
      %v3531 = vsub.f32 1.0, %v3467
      %v3532 = vsub.f32 1.0, %v3468
      %v3533 = vsub.f32 1.0, %v3469
      %v3534 = vsub.f32 1.0, %v3470
      %v3535 = vsub.f32 1.0, %v3471
      %v3536 = vsub.f32 1.0, %v3472
      %v3537 = vsub.f32 1.0, %v3473
      %v3538 = vsub.f32 1.0, %v3474
      %v3539 = vsub.f32 1.0, %v3475
      %v3540 = vsub.f32 1.0, %v3476
      %v3541 = vsub.f32 1.0, %v3477
      %v3542 = vsub.f32 1.0, %v3478
      %v3543 = vsub.f32 1.0, %v3479
      %v3544 = vsub.f32 1.0, %v3480
      %v3545 = vsub.f32 1.0, %v3481
      %v3546 = vsub.f32 1.0, %v3482
      %v3547 = vsub.f32 1.0, %v3483
      %v3548 = vsub.f32 1.0, %v3484
      %v3549 = vsub.f32 1.0, %v3485
      %v3550 = vsub.f32 1.0, %v3486
      %v3551 = vsub.f32 1.0, %v3487
      %v3552 = vsub.f32 1.0, %v3488
      %v3553 = vsub.f32 1.0, %v3489
      %v3554 = vsub.f32 1.0, %v3490
      %v3555 = vsub.f32 1.0, %v3491
      %v3556 = vsub.f32 1.0, %v3492
      %v3557 = vsub.f32 1.0, %v3493
      %v3558 = vsub.f32 1.0, %v3494
      %v3559 = vsub.f32 1.0, %v3495
      %v3560 = vsub.f32 1.0, %v3496
      %v3561 = vsub.f32 1.0, %v3497
      %v3562 = vsub.f32 1.0, %v3498
      %v3563 = vsub.f32 1.0, %v3499
      %v3564 = vsub.f32 1.0, %v3500
      %v3565 = vsub.f32 1.0, %v3501
      %v3566 = vsub.f32 1.0, %v3502
      %v3567 = vsub.f32 1.0, %v3503
      %v3568 = vsub.f32 1.0, %v3504
      %v3569 = vsub.f32 1.0, %v3505
      %v3570 = vsub.f32 1.0, %v3506
      %v3571 = vsub.f32 1.0, %v3507
      %v3572 = vsub.f32 1.0, %v3508
      %vm3573 = vcmask 7168
      %3574 = vst.msk [vmem:[%s390] sm:$0xff] %vm3573, %v3509
      %3575 = vst.msk [vmem:[%s390 + $0x8] sm:$0xff] %vm3573, %v3510
      %3576 = vst.msk [vmem:[%s390 + $0x10] sm:$0xff] %vm3573, %v3511
      %3577 = vst.msk [vmem:[%s390 + $0x18] sm:$0xff] %vm3573, %v3512
      %3578 = vst.msk [vmem:[%s390 + $0x20] sm:$0xff] %vm3573, %v3513
      %3579 = vst.msk [vmem:[%s390 + $0x28] sm:$0xff] %vm3573, %v3514
      %3580 = vst.msk [vmem:[%s390 + $0x30] sm:$0xff] %vm3573, %v3515
      %3581 = vst.msk [vmem:[%s390 + $0x38] sm:$0xff] %vm3573, %v3516
      %3582 = vst.msk [vmem:[%s390 + $0x40] sm:$0xff] %vm3573, %v3517
      %3583 = vst.msk [vmem:[%s390 + $0x48] sm:$0xff] %vm3573, %v3518
      %3584 = vst.msk [vmem:[%s390 + $0x50] sm:$0xff] %vm3573, %v3519
      %3585 = vst.msk [vmem:[%s390 + $0x58] sm:$0xff] %vm3573, %v3520
      %3586 = vst.msk [vmem:[%s390 + $0x60] sm:$0xff] %vm3573, %v3521
      %3587 = vst.msk [vmem:[%s390 + $0x68] sm:$0xff] %vm3573, %v3522
      %3588 = vst.msk [vmem:[%s390 + $0x70] sm:$0xff] %vm3573, %v3523
      %3589 = vst.msk [vmem:[%s390 + $0x78] sm:$0xff] %vm3573, %v3524
      %3590 = vst.msk [vmem:[%s390 + $0x80] sm:$0xff] %vm3573, %v3525
      %3591 = vst.msk [vmem:[%s390 + $0x88] sm:$0xff] %vm3573, %v3526
      %3592 = vst.msk [vmem:[%s390 + $0x90] sm:$0xff] %vm3573, %v3527
      %3593 = vst.msk [vmem:[%s390 + $0x98] sm:$0xff] %vm3573, %v3528
      %3594 = vst.msk [vmem:[%s390 + $0xa0] sm:$0xff] %vm3573, %v3529
      %3595 = vst.msk [vmem:[%s390 + $0xa8] sm:$0xff] %vm3573, %v3530
      %3596 = vst.msk [vmem:[%s390 + $0xb0] sm:$0xff] %vm3573, %v3531
      %3597 = vst.msk [vmem:[%s390 + $0xb8] sm:$0xff] %vm3573, %v3532
      %3598 = vst.msk [vmem:[%s390 + $0xc0] sm:$0xff] %vm3573, %v3533
      %3599 = vst.msk [vmem:[%s390 + $0xc8] sm:$0xff] %vm3573, %v3534
      %3600 = vst.msk [vmem:[%s390 + $0xd0] sm:$0xff] %vm3573, %v3535
      %3601 = vst.msk [vmem:[%s390 + $0xd8] sm:$0xff] %vm3573, %v3536
      %3602 = vst.msk [vmem:[%s390 + $0xe0] sm:$0xff] %vm3573, %v3537
      %3603 = vst.msk [vmem:[%s390 + $0xe8] sm:$0xff] %vm3573, %v3538
      %3604 = vst.msk [vmem:[%s390 + $0xf0] sm:$0xff] %vm3573, %v3539
      %3605 = vst.msk [vmem:[%s390 + $0xf8] sm:$0xff] %vm3573, %v3540
      %3606 = vst.msk [vmem:[%s390 + $0x100] sm:$0xff] %vm3573, %v3541
      %3607 = vst.msk [vmem:[%s390 + $0x108] sm:$0xff] %vm3573, %v3542
      %3608 = vst.msk [vmem:[%s390 + $0x110] sm:$0xff] %vm3573, %v3543
      %3609 = vst.msk [vmem:[%s390 + $0x118] sm:$0xff] %vm3573, %v3544
      %3610 = vst.msk [vmem:[%s390 + $0x120] sm:$0xff] %vm3573, %v3545
      %3611 = vst.msk [vmem:[%s390 + $0x128] sm:$0xff] %vm3573, %v3546
      %3612 = vst.msk [vmem:[%s390 + $0x130] sm:$0xff] %vm3573, %v3547
      %3613 = vst.msk [vmem:[%s390 + $0x138] sm:$0xff] %vm3573, %v3548
      %3614 = vst.msk [vmem:[%s390 + $0x140] sm:$0xff] %vm3573, %v3549
      %3615 = vst.msk [vmem:[%s390 + $0x148] sm:$0xff] %vm3573, %v3550
      %3616 = vst.msk [vmem:[%s390 + $0x150] sm:$0xff] %vm3573, %v3551
      %3617 = vst.msk [vmem:[%s390 + $0x158] sm:$0xff] %vm3573, %v3552
      %3618 = vst.msk [vmem:[%s390 + $0x160] sm:$0xff] %vm3573, %v3553
      %3619 = vst.msk [vmem:[%s390 + $0x168] sm:$0xff] %vm3573, %v3554
      %3620 = vst.msk [vmem:[%s390 + $0x170] sm:$0xff] %vm3573, %v3555
      %3621 = vst.msk [vmem:[%s390 + $0x178] sm:$0xff] %vm3573, %v3556
      %3622 = vst.msk [vmem:[%s390 + $0x180] sm:$0xff] %vm3573, %v3557
      %3623 = vst.msk [vmem:[%s390 + $0x188] sm:$0xff] %vm3573, %v3558
      %3624 = vst.msk [vmem:[%s390 + $0x190] sm:$0xff] %vm3573, %v3559
      %3625 = vst.msk [vmem:[%s390 + $0x198] sm:$0xff] %vm3573, %v3560
      %3626 = vst.msk [vmem:[%s390 + $0x1a0] sm:$0xff] %vm3573, %v3561
      %3627 = vst.msk [vmem:[%s390 + $0x1a8] sm:$0xff] %vm3573, %v3562
      %3628 = vst.msk [vmem:[%s390 + $0x1b0] sm:$0xff] %vm3573, %v3563
      %3629 = vst.msk [vmem:[%s390 + $0x1b8] sm:$0xff] %vm3573, %v3564
      %3630 = vst.msk [vmem:[%s390 + $0x1c0] sm:$0xff] %vm3573, %v3565
      %3631 = vst.msk [vmem:[%s390 + $0x1c8] sm:$0xff] %vm3573, %v3566
      %3632 = vst.msk [vmem:[%s390 + $0x1d0] sm:$0xff] %vm3573, %v3567
      %3633 = vst.msk [vmem:[%s390 + $0x1d8] sm:$0xff] %vm3573, %v3568
      %3634 = vst.msk [vmem:[%s390 + $0x1e0] sm:$0xff] %vm3573, %v3569
      %3635 = vst.msk [vmem:[%s390 + $0x1e8] sm:$0xff] %vm3573, %v3570
      %3636 = vst.msk [vmem:[%s390 + $0x1f0] sm:$0xff] %vm3573, %v3571
      %3637 = vst.msk [vmem:[%s390 + $0x1f8] sm:$0xff] %vm3573, %v3572
      %3702 = vrot.lane.b32.xlu0 %v3445, 1
      %v3703 = vpop.permute.xlu0 %3702
      %3704 = vrot.lane.b32.xlu0 %v3446, 1
      %v3705 = vpop.permute.xlu0 %3704
      %3706 = vrot.lane.b32.xlu0 %v3447, 1
      %v3707 = vpop.permute.xlu0 %3706
      %3708 = vrot.lane.b32.xlu0 %v3448, 1
      %v3709 = vpop.permute.xlu0 %3708
      %3710 = vrot.lane.b32.xlu0 %v3449, 1
      %v3711 = vpop.permute.xlu0 %3710
      %3712 = vrot.lane.b32.xlu0 %v3450, 1
      %v3713 = vpop.permute.xlu0 %3712
      %3714 = vrot.lane.b32.xlu0 %v3451, 1
      %v3715 = vpop.permute.xlu0 %3714
      %3716 = vrot.lane.b32.xlu0 %v3452, 1
      %v3717 = vpop.permute.xlu0 %3716
      %3718 = vrot.lane.b32.xlu0 %v3453, 1
      %v3719 = vpop.permute.xlu0 %3718
      %3720 = vrot.lane.b32.xlu0 %v3454, 1
      %v3721 = vpop.permute.xlu0 %3720
      %3722 = vrot.lane.b32.xlu0 %v3455, 1
      %v3723 = vpop.permute.xlu0 %3722
      %3724 = vrot.lane.b32.xlu0 %v3456, 1
      %v3725 = vpop.permute.xlu0 %3724
      %3726 = vrot.lane.b32.xlu0 %v3457, 1
      %v3727 = vpop.permute.xlu0 %3726
      %3728 = vrot.lane.b32.xlu0 %v3458, 1
      %v3729 = vpop.permute.xlu0 %3728
      %3730 = vrot.lane.b32.xlu0 %v3459, 1
      %v3731 = vpop.permute.xlu0 %3730
      %3732 = vrot.lane.b32.xlu0 %v3460, 1
      %v3733 = vpop.permute.xlu0 %3732
      %3734 = vrot.lane.b32.xlu0 %v3461, 1
      %v3735 = vpop.permute.xlu0 %3734
      %3736 = vrot.lane.b32.xlu0 %v3462, 1
      %v3737 = vpop.permute.xlu0 %3736
      %3738 = vrot.lane.b32.xlu0 %v3463, 1
      %v3739 = vpop.permute.xlu0 %3738
      %3740 = vrot.lane.b32.xlu0 %v3464, 1
      %v3741 = vpop.permute.xlu0 %3740
      %3742 = vrot.lane.b32.xlu0 %v3465, 1
      %v3743 = vpop.permute.xlu0 %3742
      %3744 = vrot.lane.b32.xlu0 %v3466, 1
      %v3745 = vpop.permute.xlu0 %3744
      %3746 = vrot.lane.b32.xlu0 %v3467, 1
      %v3747 = vpop.permute.xlu0 %3746
      %3748 = vrot.lane.b32.xlu0 %v3468, 1
      %v3749 = vpop.permute.xlu0 %3748
      %3750 = vrot.lane.b32.xlu0 %v3469, 1
      %v3751 = vpop.permute.xlu0 %3750
      %3752 = vrot.lane.b32.xlu0 %v3470, 1
      %v3753 = vpop.permute.xlu0 %3752
      %3754 = vrot.lane.b32.xlu0 %v3471, 1
      %v3755 = vpop.permute.xlu0 %3754
      %3756 = vrot.lane.b32.xlu0 %v3472, 1
      %v3757 = vpop.permute.xlu0 %3756
      %3758 = vrot.lane.b32.xlu0 %v3473, 1
      %v3759 = vpop.permute.xlu0 %3758
      %3760 = vrot.lane.b32.xlu0 %v3474, 1
      %v3761 = vpop.permute.xlu0 %3760
      %3762 = vrot.lane.b32.xlu0 %v3475, 1
      %v3763 = vpop.permute.xlu0 %3762
      %3764 = vrot.lane.b32.xlu0 %v3476, 1
      %v3765 = vpop.permute.xlu0 %3764
      %3766 = vrot.lane.b32.xlu0 %v3477, 1
      %v3767 = vpop.permute.xlu0 %3766
      %3768 = vrot.lane.b32.xlu0 %v3478, 1
      %v3769 = vpop.permute.xlu0 %3768
      %3770 = vrot.lane.b32.xlu0 %v3479, 1
      %v3771 = vpop.permute.xlu0 %3770
      %3772 = vrot.lane.b32.xlu0 %v3480, 1
      %v3773 = vpop.permute.xlu0 %3772
      %3774 = vrot.lane.b32.xlu0 %v3481, 1
      %v3775 = vpop.permute.xlu0 %3774
      %3776 = vrot.lane.b32.xlu0 %v3482, 1
      %v3777 = vpop.permute.xlu0 %3776
      %3778 = vrot.lane.b32.xlu0 %v3483, 1
      %v3779 = vpop.permute.xlu0 %3778
      %3780 = vrot.lane.b32.xlu0 %v3484, 1
      %v3781 = vpop.permute.xlu0 %3780
      %3782 = vrot.lane.b32.xlu0 %v3485, 1
      %v3783 = vpop.permute.xlu0 %3782
      %3784 = vrot.lane.b32.xlu0 %v3486, 1
      %v3785 = vpop.permute.xlu0 %3784
      %3786 = vrot.lane.b32.xlu0 %v3487, 1
      %v3787 = vpop.permute.xlu0 %3786
      %3788 = vrot.lane.b32.xlu0 %v3488, 1
      %v3789 = vpop.permute.xlu0 %3788
      %3790 = vrot.lane.b32.xlu0 %v3489, 1
      %v3791 = vpop.permute.xlu0 %3790
      %3792 = vrot.lane.b32.xlu0 %v3490, 1
      %v3793 = vpop.permute.xlu0 %3792
      %3794 = vrot.lane.b32.xlu0 %v3491, 1
      %v3795 = vpop.permute.xlu0 %3794
      %3796 = vrot.lane.b32.xlu0 %v3492, 1
      %v3797 = vpop.permute.xlu0 %3796
      %3798 = vrot.lane.b32.xlu0 %v3493, 1
      %v3799 = vpop.permute.xlu0 %3798
      %3800 = vrot.lane.b32.xlu0 %v3494, 1
      %v3801 = vpop.permute.xlu0 %3800
      %3802 = vrot.lane.b32.xlu0 %v3495, 1
      %v3803 = vpop.permute.xlu0 %3802
      %3804 = vrot.lane.b32.xlu0 %v3496, 1
      %v3805 = vpop.permute.xlu0 %3804
      %3806 = vrot.lane.b32.xlu0 %v3497, 1
      %v3807 = vpop.permute.xlu0 %3806
      %3808 = vrot.lane.b32.xlu0 %v3498, 1
      %v3809 = vpop.permute.xlu0 %3808
      %3810 = vrot.lane.b32.xlu0 %v3499, 1
      %v3811 = vpop.permute.xlu0 %3810
      %3812 = vrot.lane.b32.xlu0 %v3500, 1
      %v3813 = vpop.permute.xlu0 %3812
      %3814 = vrot.lane.b32.xlu0 %v3501, 1
      %v3815 = vpop.permute.xlu0 %3814
      %3816 = vrot.lane.b32.xlu0 %v3502, 1
      %v3817 = vpop.permute.xlu0 %3816
      %3818 = vrot.lane.b32.xlu0 %v3503, 1
      %v3819 = vpop.permute.xlu0 %3818
      %3820 = vrot.lane.b32.xlu0 %v3504, 1
      %v3821 = vpop.permute.xlu0 %3820
      %3822 = vrot.lane.b32.xlu0 %v3505, 1
      %v3823 = vpop.permute.xlu0 %3822
      %3824 = vrot.lane.b32.xlu0 %v3506, 1
      %v3825 = vpop.permute.xlu0 %3824
      %3826 = vrot.lane.b32.xlu0 %v3507, 1
      %v3827 = vpop.permute.xlu0 %3826
      %3828 = vrot.lane.b32.xlu0 %v3508, 1
      %v3829 = vpop.permute.xlu0 %3828
      %vm3894 = vcmask 15368
      %3895 = vst.msk [vmem:[%s390] sm:$0xff] %vm3894, %v3703
      %3896 = vst.msk [vmem:[%s390 + $0x8] sm:$0xff] %vm3894, %v3705
      %3897 = vst.msk [vmem:[%s390 + $0x10] sm:$0xff] %vm3894, %v3707
      %3898 = vst.msk [vmem:[%s390 + $0x18] sm:$0xff] %vm3894, %v3709
      %3899 = vst.msk [vmem:[%s390 + $0x20] sm:$0xff] %vm3894, %v3711
      %3900 = vst.msk [vmem:[%s390 + $0x28] sm:$0xff] %vm3894, %v3713
      %3901 = vst.msk [vmem:[%s390 + $0x30] sm:$0xff] %vm3894, %v3715
      %3902 = vst.msk [vmem:[%s390 + $0x38] sm:$0xff] %vm3894, %v3717
      %3903 = vst.msk [vmem:[%s390 + $0x40] sm:$0xff] %vm3894, %v3719
      %3904 = vst.msk [vmem:[%s390 + $0x48] sm:$0xff] %vm3894, %v3721
      %3905 = vst.msk [vmem:[%s390 + $0x50] sm:$0xff] %vm3894, %v3723
      %3906 = vst.msk [vmem:[%s390 + $0x58] sm:$0xff] %vm3894, %v3725
      %3907 = vst.msk [vmem:[%s390 + $0x60] sm:$0xff] %vm3894, %v3727
      %3908 = vst.msk [vmem:[%s390 + $0x68] sm:$0xff] %vm3894, %v3729
      %3909 = vst.msk [vmem:[%s390 + $0x70] sm:$0xff] %vm3894, %v3731
      %3910 = vst.msk [vmem:[%s390 + $0x78] sm:$0xff] %vm3894, %v3733
      %3911 = vst.msk [vmem:[%s390 + $0x80] sm:$0xff] %vm3894, %v3735
      %3912 = vst.msk [vmem:[%s390 + $0x88] sm:$0xff] %vm3894, %v3737
      %3913 = vst.msk [vmem:[%s390 + $0x90] sm:$0xff] %vm3894, %v3739
      %3914 = vst.msk [vmem:[%s390 + $0x98] sm:$0xff] %vm3894, %v3741
      %3915 = vst.msk [vmem:[%s390 + $0xa0] sm:$0xff] %vm3894, %v3743
      %3916 = vst.msk [vmem:[%s390 + $0xa8] sm:$0xff] %vm3894, %v3745
      %3917 = vst.msk [vmem:[%s390 + $0xb0] sm:$0xff] %vm3894, %v3747
      %3918 = vst.msk [vmem:[%s390 + $0xb8] sm:$0xff] %vm3894, %v3749
      %3919 = vst.msk [vmem:[%s390 + $0xc0] sm:$0xff] %vm3894, %v3751
      %3920 = vst.msk [vmem:[%s390 + $0xc8] sm:$0xff] %vm3894, %v3753
      %3921 = vst.msk [vmem:[%s390 + $0xd0] sm:$0xff] %vm3894, %v3755
      %3922 = vst.msk [vmem:[%s390 + $0xd8] sm:$0xff] %vm3894, %v3757
      %3923 = vst.msk [vmem:[%s390 + $0xe0] sm:$0xff] %vm3894, %v3759
      %3924 = vst.msk [vmem:[%s390 + $0xe8] sm:$0xff] %vm3894, %v3761
      %3925 = vst.msk [vmem:[%s390 + $0xf0] sm:$0xff] %vm3894, %v3763
      %3926 = vst.msk [vmem:[%s390 + $0xf8] sm:$0xff] %vm3894, %v3765
      %3927 = vst.msk [vmem:[%s390 + $0x100] sm:$0xff] %vm3894, %v3767
      %3928 = vst.msk [vmem:[%s390 + $0x108] sm:$0xff] %vm3894, %v3769
      %3929 = vst.msk [vmem:[%s390 + $0x110] sm:$0xff] %vm3894, %v3771
      %3930 = vst.msk [vmem:[%s390 + $0x118] sm:$0xff] %vm3894, %v3773
      %3931 = vst.msk [vmem:[%s390 + $0x120] sm:$0xff] %vm3894, %v3775
      %3932 = vst.msk [vmem:[%s390 + $0x128] sm:$0xff] %vm3894, %v3777
      %3933 = vst.msk [vmem:[%s390 + $0x130] sm:$0xff] %vm3894, %v3779
      %3934 = vst.msk [vmem:[%s390 + $0x138] sm:$0xff] %vm3894, %v3781
      %3935 = vst.msk [vmem:[%s390 + $0x140] sm:$0xff] %vm3894, %v3783
      %3936 = vst.msk [vmem:[%s390 + $0x148] sm:$0xff] %vm3894, %v3785
      %3937 = vst.msk [vmem:[%s390 + $0x150] sm:$0xff] %vm3894, %v3787
      %3938 = vst.msk [vmem:[%s390 + $0x158] sm:$0xff] %vm3894, %v3789
      %3939 = vst.msk [vmem:[%s390 + $0x160] sm:$0xff] %vm3894, %v3791
      %3940 = vst.msk [vmem:[%s390 + $0x168] sm:$0xff] %vm3894, %v3793
      %3941 = vst.msk [vmem:[%s390 + $0x170] sm:$0xff] %vm3894, %v3795
      %3942 = vst.msk [vmem:[%s390 + $0x178] sm:$0xff] %vm3894, %v3797
      %3943 = vst.msk [vmem:[%s390 + $0x180] sm:$0xff] %vm3894, %v3799
      %3944 = vst.msk [vmem:[%s390 + $0x188] sm:$0xff] %vm3894, %v3801
      %3945 = vst.msk [vmem:[%s390 + $0x190] sm:$0xff] %vm3894, %v3803
      %3946 = vst.msk [vmem:[%s390 + $0x198] sm:$0xff] %vm3894, %v3805
      %3947 = vst.msk [vmem:[%s390 + $0x1a0] sm:$0xff] %vm3894, %v3807
      %3948 = vst.msk [vmem:[%s390 + $0x1a8] sm:$0xff] %vm3894, %v3809
      %3949 = vst.msk [vmem:[%s390 + $0x1b0] sm:$0xff] %vm3894, %v3811
      %3950 = vst.msk [vmem:[%s390 + $0x1b8] sm:$0xff] %vm3894, %v3813
      %3951 = vst.msk [vmem:[%s390 + $0x1c0] sm:$0xff] %vm3894, %v3815
      %3952 = vst.msk [vmem:[%s390 + $0x1c8] sm:$0xff] %vm3894, %v3817
      %3953 = vst.msk [vmem:[%s390 + $0x1d0] sm:$0xff] %vm3894, %v3819
      %3954 = vst.msk [vmem:[%s390 + $0x1d8] sm:$0xff] %vm3894, %v3821
      %3955 = vst.msk [vmem:[%s390 + $0x1e0] sm:$0xff] %vm3894, %v3823
      %3956 = vst.msk [vmem:[%s390 + $0x1e8] sm:$0xff] %vm3894, %v3825
      %3957 = vst.msk [vmem:[%s390 + $0x1f0] sm:$0xff] %vm3894, %v3827
      %3958 = vst.msk [vmem:[%s390 + $0x1f8] sm:$0xff] %vm3894, %v3829
      %s3959 = smul.u32 64, %s24
      %p3960 = scmp.lt.s32.totalorder %s3959, 127
      %s3961 = scalar_select %p3960, %s3959, 127
      %s3962 = smul.addr %s3961, 8
      %s3963 = scalar_lea.vmem %s11, %s3962
      // Predicated region
      $region65: #{net_forward.1} parent=63 // pred_check
        %p3964 = pneg %p278
      $region66: #{net_forward.1} parent=63 // pred_check_branch
        %3966 = sbr.rel (%p3964) target = $region68
      $region67: #{net_forward.1} parent=63 // pred_region
        %s3967 = smul.u32 64, %s24
      $region68: #{net_forward.1} parent=63 // pred_fallthru
        _
    $region64: #{net_forward.1} parent=5 // pred_fallthru
      _
    %p3968 = scmp.le.s32.totalorder 2, %s19
    // Predicated region
    $region69: #{net_forward.1} parent=5 // pred_check
      %p3969 = pneg %p3968
    $region70: #{net_forward.1} parent=5 // pred_check_branch
      %3971 = sbr.rel (%p3969) target = $region72
    $region71: #{net_forward.1} parent=5 // pred_region
      %s3972 = ssub.s32 %s19, 2
      // Predicated region
      $region73: #{net_forward.1} parent=71 // pred_check
        %p3973 = pneg %p284
      $region74: #{net_forward.1} parent=71 // pred_check_branch
        %3975 = sbr.rel (%p3973) target = $region76
      $region75: #{net_forward.1} parent=71 // pred_region
        %s3976 = smul.u32 64, %s25
        %p3977 = scmp.lt.s32.totalorder %s3976, 127
        %s3978 = scalar_select %p3977, %s3976, 127
        %s3979 = smul.addr %s3978, 8
        %s3980 = scalar_lea.vmem %s11, %s3979
      $region76: #{net_forward.1} parent=71 // pred_fallthru
        _
    $region72: #{net_forward.1} parent=5 // pred_fallthru
      _
  $region6: #{net_forward.1} parent=0 // loop_footer
    %s23 = sadd.s32 1, %s19
  $region7: #{net_forward.1} parent=0 // loop_footer_branch
    %18 = sbr.rel target = $region3
  $region8: #{net_forward.1} parent=0 // loop_exit
    _

</llo_original>
